<compile_context>
chip_gen: v7x
topology: tpu7x:2x2x1
jax: 0.10.0
libtpu: 0.0.40
codegen_flags: <defaults>
</compile_context>

<pallas_src>
import jax
import jax.numpy as jnp
from jax import lax
from jax.experimental import pallas as pl
from jax.experimental.pallas import tpu as pltpu

# ----------------------------------------------------------------------------
# Config (the `args` namespace of RnnDocReader, small sizes)
# ----------------------------------------------------------------------------
VOCAB_SIZE = 50
EMB_DIM = 32
CHAR_SIZE = 20            # unused in forward()
CHAR_EMB_DIM = 8          # unused in forward()
NUM_FEATURES = 4
HIDDEN = 32               # args.hidden_size
DOC_LAYERS = 2            # args.doc_layers
CONCAT_RNN_LAYERS = True
FIRST_GRAINED = 16
SECOND_GRAINED = 8
CLASS_SIZE = 5
BATCH = 2
LEN_D = 8

IN0 = EMB_DIM + NUM_FEATURES                                         # 36
IN2 = 2 * IN0                                                        # 72 (scheduled [x_t | x_{T-1-t}] rows)
IN2_PAD = ((IN2 + 127) // 128) * 128                                 # 128: lane-dense layer-0 input
DOC_HIDDEN = 2 * HIDDEN * (DOC_LAYERS if CONCAT_RNN_LAYERS else 1)   # 128


# ----------------------------------------------------------------------------
# Kernel
# ----------------------------------------------------------------------------
def rnn_doc_reader_kernel(
    xs_ref,                                    # (T, Bt, IN2_PAD) f32, scheduled layer-0 input
    mask_ref,                                  # (T, Bt, 1) f32, 1.0 at padded positions
    w0_ref, b0_ref, whh0_ref,                  # (IN2_PAD, 8H) bf16, (1, 8H) f32, (2H, 8H) bf16
    w1_ref, b1_ref, whh1_ref,                  # (4H, 8H) bf16, (1, 8H) f32, (2H, 8H) bf16
    wa1_ref, ba1_ref, wa2_ref, ba2_ref,        # attention
    wm1_ref, bm1_ref, wm2_ref, bm2_ref,        # match-net MLP
    wm3_ref, bm3_ref, wm4_ref, bm4_ref,
    out_ref,                                   # (Bt, CLASS_SIZE) f32
    g_ref,                                     # scratch (T*Bt, 8H) f32: scheduled gates
    s1_ref,                                    # scratch (T*Bt, 4H) f32: layer-1 scheduled input
    d_ref,                                     # scratch (T, Bt, DOC_HIDDEN) f32: doc hidden
):
    T, Bt, _ = xs_ref.shape
    H = whh0_ref.shape[0] // 2
    H2, H4 = 2 * H, 4 * H

    def bilstm_layer(x_flat_bf16, w_big_ref, b_big_ref, whh_big_ref, col_off):
        # --- hoisted input projection: one matmul for all timesteps & both dirs ---
        g_ref[...] = (jnp.dot(x_flat_bf16, w_big_ref[...],
                              preferred_element_type=jnp.float32)
                      + b_big_ref[...])
        whh = whh_big_ref[...]                                    # (2H, 8H) bf16, loaded once

        def step(i, carry):
            h, c = carry                                          # (Bt, 2H) f32 each
            gin = g_ref[pl.ds(i * Bt, Bt), :]                     # (Bt, 8H)
            gates = gin + jnp.dot(h.astype(jnp.bfloat16), whh,
                                  preferred_element_type=jnp.float32)
            i_g = jax.nn.sigmoid(gates[:, 0 * H2:1 * H2])         # [i_f | i_b]
            f_g = jax.nn.sigmoid(gates[:, 1 * H2:2 * H2])         # [f_f | f_b]
            g_g = jnp.tanh(gates[:, 2 * H2:3 * H2])               # [g_f | g_b]
            o_g = jax.nn.sigmoid(gates[:, 3 * H2:4 * H2])         # [o_f | o_b]
            c_n = f_g * c + i_g * g_g
            h_n = o_g * jnp.tanh(c_n)
            # forward half belongs to time i, backward half to time T-1-i
            d_ref[i, :, col_off:col_off + H] = h_n[:, :H]
            d_ref[T - 1 - i, :, col_off + H:col_off + H2] = h_n[:, H:]
            return (h_n, c_n)

        init = (jnp.zeros((Bt, H2), jnp.float32),
                jnp.zeros((Bt, H2), jnp.float32))
        lax.fori_loop(0, T, step, init, unroll=True)

    # ---- StackedBRNN layer 0 (fused bi-LSTM) ----
    xs = xs_ref[...].reshape(T * Bt, xs_ref.shape[-1]).astype(jnp.bfloat16)
    bilstm_layer(xs, w0_ref, b0_ref, whh0_ref, col_off=0)

    # ---- build layer-1 scheduled input: row (t, b) = [h0(t, b) | h0(T-1-t, b)] ----
    # Static copies of 64-lane chunks, off the recurrent critical path.
    for t in range(T):
        lo = t * Bt
        s1_ref[lo:lo + Bt, 0:H2] = d_ref[t, :, 0:H2]
        s1_ref[lo:lo + Bt, H2:H4] = d_ref[T - 1 - t, :, 0:H2]

    # ---- StackedBRNN layer 1 ----
    bilstm_layer(s1_ref[...].astype(jnp.bfloat16), w1_ref, b1_ref, whh1_ref,
                 col_off=H2)

    # ---- LinearSeqAttn with padding mask ----
    doc = d_ref[...]                                              # (T, Bt, DH) f32
    DH = doc.shape[-1]
    doc2 = doc.reshape(T * Bt, DH).astype(jnp.bfloat16)
    proj = jnp.tanh(jnp.dot(doc2, wa1_ref[...],
                            preferred_element_type=jnp.float32) + ba1_ref[...])
    scores = (jnp.dot(proj.astype(jnp.bfloat16), wa2_ref[...],
                      preferred_element_type=jnp.float32)
              + ba2_ref[...]).reshape(T, Bt, 1)
    scores = scores + mask_ref[...] * (-1e30)                     # mask pads before softmax
    alpha = jax.nn.softmax(scores, axis=0)                        # softmax over time (f32)
    doc_out = jnp.sum(alpha * doc, axis=0)                        # (Bt, DH)

    # ---- MatchNetwork: MLP head, normalize=True -> log_softmax ----
    # TODO(synk): original MatchNetwork source unavailable; x_mask usage there not modeled.
    def dense(x, w_ref, b_ref):
        return (jnp.dot(x.astype(jnp.bfloat16), w_ref[...],
                        preferred_element_type=jnp.float32) + b_ref[...])

    h1 = jax.nn.relu(dense(doc_out, wm1_ref, bm1_ref))
    h2 = jax.nn.relu(dense(h1, wm2_ref, bm2_ref))
    h3 = jax.nn.relu(dense(h2, wm3_ref, bm3_ref))
    logits = dense(h3, wm4_ref, bm4_ref)
    out_ref[...] = jax.nn.log_softmax(logits, axis=-1)


# ----------------------------------------------------------------------------
# Parameter construction (deterministic, synthetic — no checkpoint loading).
# Stored in the "PyTorch-like" per-direction layout, gate order (i, f, g, o).
# ----------------------------------------------------------------------------
def make_params(key):
    ks = iter(jax.random.split(key, 32))
    s = 0.1

    def w(shape):
        return (s * jax.random.normal(next(ks), shape)).astype(jnp.float32)

    emb = w((VOCAB_SIZE, EMB_DIM)).at[0].set(0.0)       # padding_idx=0

    return dict(
        embedding=emb,
        wih0=w((2, IN0, 4 * HIDDEN)),
        whh0=w((2, HIDDEN, 4 * HIDDEN)),
        b0=w((2, 4 * HIDDEN)),                          # b_ih + b_hh folded
        wih1=w((2, 2 * HIDDEN, 4 * HIDDEN)),
        whh1=w((2, HIDDEN, 4 * HIDDEN)),
        b1=w((2, 4 * HIDDEN)),
        wa1=w((DOC_HIDDEN, HIDDEN)),
        ba1=w((HIDDEN,)),
        wa2=w((HIDDEN, 1)),
        ba2=w((1, 1)),
        wm1=w((DOC_HIDDEN, HIDDEN)),
        bm1=w((HIDDEN,)),
        wm2=w((HIDDEN, FIRST_GRAINED)),
        bm2=w((FIRST_GRAINED,)),
        wm3=w((FIRST_GRAINED, SECOND_GRAINED)),
        bm3=w((SECOND_GRAINED,)),
        wm4=w((SECOND_GRAINED, CLASS_SIZE)),
        bm4=w((CLASS_SIZE,)),
    )


# ----------------------------------------------------------------------------
# One-time weight packing into the fused/interleaved kernel layout.
# ----------------------------------------------------------------------------
def _interleave_gate_cols(wf, wb):
    """Two (D, 4H) [i,f,g,o] matrices -> (D, 8H) gate-major interleaved columns."""
    d = wf.shape[0]
    stacked = jnp.stack([wf.reshape(d, 4, HIDDEN), wb.reshape(d, 4, HIDDEN)], axis=2)
    return stacked.reshape(d, 8 * HIDDEN)


def _block_big(wf, wb):
    """(D,4H) x 2 -> (2D, 8H): fwd rows feed fwd gate columns, bwd rows feed bwd."""
    top = _interleave_gate_cols(wf, jnp.zeros_like(wb))
    bot = _interleave_gate_cols(jnp.zeros_like(wf), wb)
    return jnp.concatenate([top, bot], axis=0)


def pack_params(p):
    bf16 = jnp.bfloat16
    w0 = _block_big(p["wih0"][0], p["wih0"][1])                   # (2*IN0, 8H)
    w0 = jnp.pad(w0, ((0, IN2_PAD - IN2), (0, 0)))                # lane-dense contraction dim
    return dict(
        embedding=p["embedding"],
        w0=w0.astype(bf16),
        b0=_interleave_gate_cols(p["b0"][0][None, :], p["b0"][1][None, :]),
        whh0=_block_big(p["whh0"][0], p["whh0"][1]).astype(bf16),
        w1=_block_big(p["wih1"][0], p["wih1"][1]).astype(bf16),
        b1=_interleave_gate_cols(p["b1"][0][None, :], p["b1"][1][None, :]),
        whh1=_block_big(p["whh1"][0], p["whh1"][1]).astype(bf16),
        wa1=p["wa1"].astype(bf16), ba1=p["ba1"][None, :],
        wa2=p["wa2"].astype(bf16), ba2=p["ba2"],
        wm1=p["wm1"].astype(bf16), bm1=p["bm1"][None, :],
        wm2=p["wm2"].astype(bf16), bm2=p["bm2"][None, :],
        wm3=p["wm3"].astype(bf16), bm3=p["bm3"][None, :],
        wm4=p["wm4"].astype(bf16), bm4=p["bm4"][None, :],
    )


# ----------------------------------------------------------------------------
# Wrapper: glue (embedding gather, feature concat, time scheduling) + pallas_call.
# ----------------------------------------------------------------------------
def rnn_doc_reader_forward(kp, x, x_c, x_f, x_mask):
    del x_c                     # char embedding is unused in the reference forward()
    B, T = x.shape

    # Embedding lookup + feature concat (plain JAX glue)
    x_emb = jnp.take(kp["embedding"], x, axis=0)                        # (B, T, E)
    x_in = jnp.concatenate([x_emb, x_f.astype(jnp.float32)], axis=-1)   # (B, T, IN0)
    x_tm = jnp.transpose(x_in, (1, 0, 2))                               # (T, B, IN0)
    # Schedule-aligned input: row t carries [x_t | x_{T-1-t}] so that a single
    # matmul against a block weight yields fwd and bwd input gates for the
    # correct timestep of the fused bidirectional loop.
    xs = jnp.concatenate([x_tm, jnp.flip(x_tm, axis=0)], axis=-1)       # (T, B, 2*IN0)
    xs = jnp.pad(xs, ((0, 0), (0, 0), (0, IN2_PAD - IN2)))              # (T, B, 128)
    mask = jnp.transpose(x_mask.astype(jnp.float32))[:, :, None]        # (T, B, 1)

    # TODO(synk): for realistic batch sizes use a multiple-of-8 batch tile sized
    # to ~half of v7x's 64 MiB VMEM; at B=2 the tile is the whole batch.
    b_tile = B
    grid = (pl.cdiv(B, b_tile),)

    weights = [kp["w0"], kp["b0"], kp["whh0"],
               kp["w1"], kp["b1"], kp["whh1"],
               kp["wa1"], kp["ba1"], kp["wa2"], kp["ba2"],
               kp["wm1"], kp["bm1"], kp["wm2"], kp["bm2"],
               kp["wm3"], kp["bm3"], kp["wm4"], kp["bm4"]]

    def full_spec(a):
        zeros = (0,) * a.ndim
        return pl.BlockSpec(a.shape, lambda b, _z=zeros: _z)

    in_specs = ([pl.BlockSpec((T, b_tile, IN2_PAD), lambda b: (0, b, 0)),
                 pl.BlockSpec((T, b_tile, 1), lambda b: (0, b, 0))]
                + [full_spec(w) for w in weights])

    # Advisory cost estimate (dominated by the two bi-LSTM layers).
    h8 = 8 * HIDDEN
    flops = 2 * T * B * (IN2_PAD * h8 + 4 * HIDDEN * h8 + 2 * 2 * HIDDEN * h8
                         + DOC_HIDDEN * HIDDEN + HIDDEN)
    flops += 2 * B * (DOC_HIDDEN * HIDDEN + HIDDEN * FIRST_GRAINED
                      + FIRST_GRAINED * SECOND_GRAINED + SECOND_GRAINED * CLASS_SIZE)
    transcendentals = 2 * T * B * (h8 + 2 * HIDDEN) + T * B + B * CLASS_SIZE
    bytes_accessed = int(sum(a.size * a.dtype.itemsize for a in [xs, mask] + weights)
                         + B * CLASS_SIZE * 4)

    score = pl.pallas_call(
        rnn_doc_reader_kernel,
        out_shape=jax.ShapeDtypeStruct((B, CLASS_SIZE), jnp.float32),
        grid=grid,
        in_specs=in_specs,
        out_specs=pl.BlockSpec((b_tile, CLASS_SIZE), lambda b: (b, 0)),
        scratch_shapes=[
            pltpu.VMEM((T * b_tile, 8 * HIDDEN), jnp.float32),   # scheduled gates
            pltpu.VMEM((T * b_tile, 4 * HIDDEN), jnp.float32),   # layer-1 scheduled input
            pltpu.VMEM((T, b_tile, DOC_HIDDEN), jnp.float32),    # lane-dense doc hidden
        ],
        compiler_params=pltpu.CompilerParams(
            dimension_semantics=("parallel",),
            vmem_limit_bytes=32 * 1024 * 1024),
        cost_estimate=pl.CostEstimate(
            flops=int(flops),
            transcendentals=int(transcendentals),
            bytes_accessed=bytes_accessed),
    )(xs, mask, *weights)
    return score


# ----------------------------------------------------------------------------
# Main
# ----------------------------------------------------------------------------
if __name__ == "__main__":
    key = jax.random.PRNGKey(0)
    k_par, k_x, k_f, k_c = jax.random.split(key, 4)

    params = make_params(k_par)
    kparams = pack_params(params)

    # Deterministic example inputs
    x = jax.random.randint(k_x, (BATCH, LEN_D), 1, VOCAB_SIZE, dtype=jnp.int32)
    x = x.at[:, -1].set(0)                                    # a padding token
    x_c = jax.random.randint(k_c, (BATCH, LEN_D, 4), 1, CHAR_SIZE, dtype=jnp.int32)
    x_f = jax.random.normal(k_f, (BATCH, LEN_D, NUM_FEATURES), dtype=jnp.float32)
    x_mask = (x == 0)

    score = rnn_doc_reader_forward(kparams, x, x_c, x_f, x_mask)
    score = jax.block_until_ready(score)

    assert score.shape == (BATCH, CLASS_SIZE)
    assert bool(jnp.all(jnp.isfinite(score)))
    # normalize=True => rows are log-probabilities (each row sums to 1 after exp)
    assert bool(jnp.allclose(jnp.sum(jnp.exp(score), axis=-1), 1.0, atol=1e-4))

    print("KERNEL_OK")
</pallas_src>

<mosaic_0001>
module attributes {stable_mosaic.version = 11 : i64} {
  func.func @rnn_doc_reader_kernel(%arg0: i32, %arg1: memref<8x2x128xf32, #tpu.memory_space<vmem>>, %arg2: memref<8x2x1xf32, #tpu.memory_space<vmem>>, %arg3: memref<128x256xbf16, #tpu.memory_space<vmem>>, %arg4: memref<1x256xf32, #tpu.memory_space<vmem>>, %arg5: memref<64x256xbf16, #tpu.memory_space<vmem>>, %arg6: memref<128x256xbf16, #tpu.memory_space<vmem>>, %arg7: memref<1x256xf32, #tpu.memory_space<vmem>>, %arg8: memref<64x256xbf16, #tpu.memory_space<vmem>>, %arg9: memref<128x32xbf16, #tpu.memory_space<vmem>>, %arg10: memref<1x32xf32, #tpu.memory_space<vmem>>, %arg11: memref<32x1xbf16, #tpu.memory_space<vmem>>, %arg12: memref<1x1xf32, #tpu.memory_space<vmem>>, %arg13: memref<128x32xbf16, #tpu.memory_space<vmem>>, %arg14: memref<1x32xf32, #tpu.memory_space<vmem>>, %arg15: memref<32x16xbf16, #tpu.memory_space<vmem>>, %arg16: memref<1x16xf32, #tpu.memory_space<vmem>>, %arg17: memref<16x8xbf16, #tpu.memory_space<vmem>>, %arg18: memref<1x8xf32, #tpu.memory_space<vmem>>, %arg19: memref<8x5xbf16, #tpu.memory_space<vmem>>, %arg20: memref<1x5xf32, #tpu.memory_space<vmem>>, %arg21: memref<2x5xf32, #tpu.memory_space<vmem>>, %arg22: memref<16x256xf32, #tpu.memory_space<vmem>>, %arg23: memref<16x128xf32, #tpu.memory_space<vmem>>, %arg24: memref<8x2x128xf32, #tpu.memory_space<vmem>>) attributes {dimension_semantics = [#tpu.dimension_semantics<parallel>], iteration_bounds = array<i64: 1>, scalar_prefetch = 0 : i64, scratch_operands = 3 : i64, tpu.core_type = #tpu.core_type<tc>, window_params = [{transform_indices = @transform_0, window_bounds = array<i64: 8, 2, 128>}, {transform_indices = @transform_1, window_bounds = array<i64: 8, 2, 1>}, {pipeline_mode = #tpu.pipeline_mode<synchronous>, transform_indices = @transform_2, window_bounds = array<i64: 128, 256>}, {pipeline_mode = #tpu.pipeline_mode<synchronous>, transform_indices = @transform_3, window_bounds = array<i64: 1, 256>}, {pipeline_mode = #tpu.pipeline_mode<synchronous>, transform_indices = @transform_4, window_bounds = array<i64: 64, 256>}, {pipeline_mode = #tpu.pipeline_mode<synchronous>, transform_indices = @transform_5, window_bounds = array<i64: 128, 256>}, {pipeline_mode = #tpu.pipeline_mode<synchronous>, transform_indices = @transform_6, window_bounds = array<i64: 1, 256>}, {pipeline_mode = #tpu.pipeline_mode<synchronous>, transform_indices = @transform_7, window_bounds = array<i64: 64, 256>}, {pipeline_mode = #tpu.pipeline_mode<synchronous>, transform_indices = @transform_8, window_bounds = array<i64: 128, 32>}, {pipeline_mode = #tpu.pipeline_mode<synchronous>, transform_indices = @transform_9, window_bounds = array<i64: 1, 32>}, {pipeline_mode = #tpu.pipeline_mode<synchronous>, transform_indices = @transform_10, window_bounds = array<i64: 32, 1>}, {pipeline_mode = #tpu.pipeline_mode<synchronous>, transform_indices = @transform_11, window_bounds = array<i64: 1, 1>}, {pipeline_mode = #tpu.pipeline_mode<synchronous>, transform_indices = @transform_12, window_bounds = array<i64: 128, 32>}, {pipeline_mode = #tpu.pipeline_mode<synchronous>, transform_indices = @transform_13, window_bounds = array<i64: 1, 32>}, {pipeline_mode = #tpu.pipeline_mode<synchronous>, transform_indices = @transform_14, window_bounds = array<i64: 32, 16>}, {pipeline_mode = #tpu.pipeline_mode<synchronous>, transform_indices = @transform_15, window_bounds = array<i64: 1, 16>}, {pipeline_mode = #tpu.pipeline_mode<synchronous>, transform_indices = @transform_16, window_bounds = array<i64: 16, 8>}, {pipeline_mode = #tpu.pipeline_mode<synchronous>, transform_indices = @transform_17, window_bounds = array<i64: 1, 8>}, {pipeline_mode = #tpu.pipeline_mode<synchronous>, transform_indices = @transform_18, window_bounds = array<i64: 8, 5>}, {pipeline_mode = #tpu.pipeline_mode<synchronous>, transform_indices = @transform_19, window_bounds = array<i64: 1, 5>}, {transform_indices = @transform_20, window_bounds = array<i64: 2, 5>}]} {
    %c0 = arith.constant 0 : index
    %c0_0 = arith.constant 0 : index
    %c0_1 = arith.constant 0 : index
    %0 = vector.load %arg1[%c0, %c0_0, %c0_1] : memref<8x2x128xf32, #tpu.memory_space<vmem>>, vector<8x2x128xf32>
    %1 = vector.shape_cast %0 : vector<8x2x128xf32> to vector<16x128xf32>
    %2 = arith.truncf %1 : vector<16x128xf32> to vector<16x128xbf16>
    %c0_2 = arith.constant 0 : index
    %c0_3 = arith.constant 0 : index
    %3 = vector.load %arg3[%c0_2, %c0_3] : memref<128x256xbf16, #tpu.memory_space<vmem>>, vector<128x256xbf16>
    %cst = arith.constant dense<0.000000e+00> : vector<16x256xf32>
    %4 = tpu.matmul %2, %3, %cst {dimension_numbers = #tpu.dot_dimension_numbers<[1], [0], [0], [1], [0, 0, 1, 1], [], []>} : vector<16x128xbf16>, vector<128x256xbf16>, vector<16x256xf32> -> vector<16x256xf32>
    %c0_4 = arith.constant 0 : index
    %c0_5 = arith.constant 0 : index
    %5 = vector.load %arg4[%c0_4, %c0_5] : memref<1x256xf32, #tpu.memory_space<vmem>>, vector<1x256xf32>
    %6 = vector.broadcast %5 : vector<1x256xf32> to vector<16x256xf32>
    %7 = arith.addf %4, %6 : vector<16x256xf32>
    %c0_6 = arith.constant 0 : index
    %c0_7 = arith.constant 0 : index
    %8 = vector.load %arg22[%c0_6, %c0_7] : memref<16x256xf32, #tpu.memory_space<vmem>>, vector<16x256xf32>
    tpu.vector_store %arg22[%c0_6, %c0_7], %7 {strides = array<i32>} : memref<16x256xf32, #tpu.memory_space<vmem>>, vector<16x256xf32>,
    %c0_8 = arith.constant 0 : index
    %c0_9 = arith.constant 0 : index
    %9 = vector.load %arg5[%c0_8, %c0_9] : memref<64x256xbf16, #tpu.memory_space<vmem>>, vector<64x256xbf16>
    %cst_10 = arith.constant 0.000000e+00 : f32
    %10 = vector.broadcast %cst_10 : f32 to vector<2x64xf32>
    %cst_11 = arith.constant 0.000000e+00 : f32
    %11 = vector.broadcast %cst_11 : f32 to vector<2x64xf32>
    %c0_i32 = arith.constant 0 : i32
    %c2_i32 = arith.constant 2 : i32
    %12 = arith.muli %c0_i32, %c2_i32 : i32
    %13 = arith.index_cast %12 : i32 to index
    %c0_12 = arith.constant 0 : index
    %14 = vector.load %arg22[%13, %c0_12] : memref<16x256xf32, #tpu.memory_space<vmem>>, vector<2x256xf32>
    %15 = arith.truncf %10 : vector<2x64xf32> to vector<2x64xbf16>
    %cst_13 = arith.constant dense<0.000000e+00> : vector<2x256xf32>
    %16 = tpu.matmul %15, %9, %cst_13 {dimension_numbers = #tpu.dot_dimension_numbers<[1], [0], [0], [1], [0, 0, 1, 1], [], []>} : vector<2x64xbf16>, vector<64x256xbf16>, vector<2x256xf32> -> vector<2x256xf32>
    %17 = arith.addf %14, %16 : vector<2x256xf32>
    %18 = vector.extract_strided_slice %17 {offsets = [0, 0], sizes = [2, 64], strides = [1, 1]} : vector<2x256xf32> to vector<2x64xf32>
    %19 = arith.negf %18 : vector<2x64xf32>
    %20 = math.exp %19 : vector<2x64xf32>
    %cst_14 = arith.constant 1.000000e+00 : f32
    %21 = vector.broadcast %cst_14 : f32 to vector<2x64xf32>
    %22 = arith.addf %21, %20 : vector<2x64xf32>
    %23 = arith.divf %21, %22 : vector<2x64xf32>
    %24 = vector.extract_strided_slice %17 {offsets = [0, 64], sizes = [2, 64], strides = [1, 1]} : vector<2x256xf32> to vector<2x64xf32>
    %25 = arith.negf %24 : vector<2x64xf32>
    %26 = math.exp %25 : vector<2x64xf32>
    %cst_15 = arith.constant 1.000000e+00 : f32
    %27 = vector.broadcast %cst_15 : f32 to vector<2x64xf32>
    %28 = arith.addf %27, %26 : vector<2x64xf32>
    %29 = arith.divf %27, %28 : vector<2x64xf32>
    %30 = vector.extract_strided_slice %17 {offsets = [0, 128], sizes = [2, 64], strides = [1, 1]} : vector<2x256xf32> to vector<2x64xf32>
    %31 = math.tanh %30 : vector<2x64xf32>
    %32 = vector.extract_strided_slice %17 {offsets = [0, 192], sizes = [2, 64], strides = [1, 1]} : vector<2x256xf32> to vector<2x64xf32>
    %33 = arith.negf %32 : vector<2x64xf32>
    %34 = math.exp %33 : vector<2x64xf32>
    %cst_16 = arith.constant 1.000000e+00 : f32
    %35 = vector.broadcast %cst_16 : f32 to vector<2x64xf32>
    %36 = arith.addf %35, %34 : vector<2x64xf32>
    %37 = arith.divf %35, %36 : vector<2x64xf32>
    %38 = arith.mulf %29, %11 : vector<2x64xf32>
    %39 = arith.mulf %23, %31 : vector<2x64xf32>
    %40 = arith.addf %38, %39 : vector<2x64xf32>
    %41 = math.tanh %40 : vector<2x64xf32>
    %42 = arith.mulf %37, %41 : vector<2x64xf32>
    %43 = vector.extract_strided_slice %42 {offsets = [0, 0], sizes = [2, 32], strides = [1, 1]} : vector<2x64xf32> to vector<2x32xf32>
    %44 = arith.index_cast %c0_i32 : i32 to index
    %c0_17 = arith.constant 0 : index
    %c0_18 = arith.constant 0 : index
    %45 = vector.load %arg24[%44, %c0_17, %c0_18] : memref<8x2x128xf32, #tpu.memory_space<vmem>>, vector<1x2x32xf32>
    %46 = vector.shape_cast %45 : vector<1x2x32xf32> to vector<2x32xf32>
    %47 = vector.shape_cast %43 : vector<2x32xf32> to vector<1x2x32xf32>
    tpu.vector_store %arg24[%44, %c0_17, %c0_18], %47 {strides = array<i32>} : memref<8x2x128xf32, #tpu.memory_space<vmem>>, vector<1x2x32xf32>,
    %48 = vector.extract_strided_slice %42 {offsets = [0, 32], sizes = [2, 32], strides = [1, 1]} : vector<2x64xf32> to vector<2x32xf32>
    %c7_i32 = arith.constant 7 : i32
    %49 = arith.subi %c7_i32, %c0_i32 : i32
    %50 = arith.index_cast %49 : i32 to index
    %c0_19 = arith.constant 0 : index
    %c32 = arith.constant 32 : index
    %51 = vector.load %arg24[%50, %c0_19, %c32] : memref<8x2x128xf32, #tpu.memory_space<vmem>>, vector<1x2x32xf32>
    %52 = vector.shape_cast %51 : vector<1x2x32xf32> to vector<2x32xf32>
    %53 = vector.shape_cast %48 : vector<2x32xf32> to vector<1x2x32xf32>
    tpu.vector_store %arg24[%50, %c0_19, %c32], %53 {strides = array<i32>} : memref<8x2x128xf32, #tpu.memory_space<vmem>>, vector<1x2x32xf32>,
    %c1_i32 = arith.constant 1 : i32
    %c2_i32_20 = arith.constant 2 : i32
    %54 = arith.muli %c1_i32, %c2_i32_20 : i32
    %55 = arith.index_cast %54 : i32 to index
    %c0_21 = arith.constant 0 : index
    %56 = vector.load %arg22[%55, %c0_21] : memref<16x256xf32, #tpu.memory_space<vmem>>, vector<2x256xf32>
    %57 = arith.truncf %42 : vector<2x64xf32> to vector<2x64xbf16>
    %cst_22 = arith.constant dense<0.000000e+00> : vector<2x256xf32>
    %58 = tpu.matmul %57, %9, %cst_22 {dimension_numbers = #tpu.dot_dimension_numbers<[1], [0], [0], [1], [0, 0, 1, 1], [], []>} : vector<2x64xbf16>, vector<64x256xbf16>, vector<2x256xf32> -> vector<2x256xf32>
    %59 = arith.addf %56, %58 : vector<2x256xf32>
    %60 = vector.extract_strided_slice %59 {offsets = [0, 0], sizes = [2, 64], strides = [1, 1]} : vector<2x256xf32> to vector<2x64xf32>
    %61 = arith.negf %60 : vector<2x64xf32>
    %62 = math.exp %61 : vector<2x64xf32>
    %cst_23 = arith.constant 1.000000e+00 : f32
    %63 = vector.broadcast %cst_23 : f32 to vector<2x64xf32>
    %64 = arith.addf %63, %62 : vector<2x64xf32>
    %65 = arith.divf %63, %64 : vector<2x64xf32>
    %66 = vector.extract_strided_slice %59 {offsets = [0, 64], sizes = [2, 64], strides = [1, 1]} : vector<2x256xf32> to vector<2x64xf32>
    %67 = arith.negf %66 : vector<2x64xf32>
    %68 = math.exp %67 : vector<2x64xf32>
    %cst_24 = arith.constant 1.000000e+00 : f32
    %69 = vector.broadcast %cst_24 : f32 to vector<2x64xf32>
    %70 = arith.addf %69, %68 : vector<2x64xf32>
    %71 = arith.divf %69, %70 : vector<2x64xf32>
    %72 = vector.extract_strided_slice %59 {offsets = [0, 128], sizes = [2, 64], strides = [1, 1]} : vector<2x256xf32> to vector<2x64xf32>
    %73 = math.tanh %72 : vector<2x64xf32>
    %74 = vector.extract_strided_slice %59 {offsets = [0, 192], sizes = [2, 64], strides = [1, 1]} : vector<2x256xf32> to vector<2x64xf32>
    %75 = arith.negf %74 : vector<2x64xf32>
    %76 = math.exp %75 : vector<2x64xf32>
    %cst_25 = arith.constant 1.000000e+00 : f32
    %77 = vector.broadcast %cst_25 : f32 to vector<2x64xf32>
    %78 = arith.addf %77, %76 : vector<2x64xf32>
    %79 = arith.divf %77, %78 : vector<2x64xf32>
    %80 = arith.mulf %71, %40 : vector<2x64xf32>
    %81 = arith.mulf %65, %73 : vector<2x64xf32>
    %82 = arith.addf %80, %81 : vector<2x64xf32>
    %83 = math.tanh %82 : vector<2x64xf32>
    %84 = arith.mulf %79, %83 : vector<2x64xf32>
    %85 = vector.extract_strided_slice %84 {offsets = [0, 0], sizes = [2, 32], strides = [1, 1]} : vector<2x64xf32> to vector<2x32xf32>
    %86 = arith.index_cast %c1_i32 : i32 to index
    %c0_26 = arith.constant 0 : index
    %c0_27 = arith.constant 0 : index
    %87 = vector.load %arg24[%86, %c0_26, %c0_27] : memref<8x2x128xf32, #tpu.memory_space<vmem>>, vector<1x2x32xf32>
    %88 = vector.shape_cast %87 : vector<1x2x32xf32> to vector<2x32xf32>
    %89 = vector.shape_cast %85 : vector<2x32xf32> to vector<1x2x32xf32>
    tpu.vector_store %arg24[%86, %c0_26, %c0_27], %89 {strides = array<i32>} : memref<8x2x128xf32, #tpu.memory_space<vmem>>, vector<1x2x32xf32>,
    %90 = vector.extract_strided_slice %84 {offsets = [0, 32], sizes = [2, 32], strides = [1, 1]} : vector<2x64xf32> to vector<2x32xf32>
    %c7_i32_28 = arith.constant 7 : i32
    %91 = arith.subi %c7_i32_28, %c1_i32 : i32
    %92 = arith.index_cast %91 : i32 to index
    %c0_29 = arith.constant 0 : index
    %c32_30 = arith.constant 32 : index
    %93 = vector.load %arg24[%92, %c0_29, %c32_30] : memref<8x2x128xf32, #tpu.memory_space<vmem>>, vector<1x2x32xf32>
    %94 = vector.shape_cast %93 : vector<1x2x32xf32> to vector<2x32xf32>
    %95 = vector.shape_cast %90 : vector<2x32xf32> to vector<1x2x32xf32>
    tpu.vector_store %arg24[%92, %c0_29, %c32_30], %95 {strides = array<i32>} : memref<8x2x128xf32, #tpu.memory_space<vmem>>, vector<1x2x32xf32>,
    %c2_i32_31 = arith.constant 2 : i32
    %c2_i32_32 = arith.constant 2 : i32
    %96 = arith.muli %c2_i32_31, %c2_i32_32 : i32
    %97 = arith.index_cast %96 : i32 to index
    %c0_33 = arith.constant 0 : index
    %98 = vector.load %arg22[%97, %c0_33] : memref<16x256xf32, #tpu.memory_space<vmem>>, vector<2x256xf32>
    %99 = arith.truncf %84 : vector<2x64xf32> to vector<2x64xbf16>
    %cst_34 = arith.constant dense<0.000000e+00> : vector<2x256xf32>
    %100 = tpu.matmul %99, %9, %cst_34 {dimension_numbers = #tpu.dot_dimension_numbers<[1], [0], [0], [1], [0, 0, 1, 1], [], []>} : vector<2x64xbf16>, vector<64x256xbf16>, vector<2x256xf32> -> vector<2x256xf32>
    %101 = arith.addf %98, %100 : vector<2x256xf32>
    %102 = vector.extract_strided_slice %101 {offsets = [0, 0], sizes = [2, 64], strides = [1, 1]} : vector<2x256xf32> to vector<2x64xf32>
    %103 = arith.negf %102 : vector<2x64xf32>
    %104 = math.exp %103 : vector<2x64xf32>
    %cst_35 = arith.constant 1.000000e+00 : f32
    %105 = vector.broadcast %cst_35 : f32 to vector<2x64xf32>
    %106 = arith.addf %105, %104 : vector<2x64xf32>
    %107 = arith.divf %105, %106 : vector<2x64xf32>
    %108 = vector.extract_strided_slice %101 {offsets = [0, 64], sizes = [2, 64], strides = [1, 1]} : vector<2x256xf32> to vector<2x64xf32>
    %109 = arith.negf %108 : vector<2x64xf32>
    %110 = math.exp %109 : vector<2x64xf32>
    %cst_36 = arith.constant 1.000000e+00 : f32
    %111 = vector.broadcast %cst_36 : f32 to vector<2x64xf32>
    %112 = arith.addf %111, %110 : vector<2x64xf32>
    %113 = arith.divf %111, %112 : vector<2x64xf32>
    %114 = vector.extract_strided_slice %101 {offsets = [0, 128], sizes = [2, 64], strides = [1, 1]} : vector<2x256xf32> to vector<2x64xf32>
    %115 = math.tanh %114 : vector<2x64xf32>
    %116 = vector.extract_strided_slice %101 {offsets = [0, 192], sizes = [2, 64], strides = [1, 1]} : vector<2x256xf32> to vector<2x64xf32>
    %117 = arith.negf %116 : vector<2x64xf32>
    %118 = math.exp %117 : vector<2x64xf32>
    %cst_37 = arith.constant 1.000000e+00 : f32
    %119 = vector.broadcast %cst_37 : f32 to vector<2x64xf32>
    %120 = arith.addf %119, %118 : vector<2x64xf32>
    %121 = arith.divf %119, %120 : vector<2x64xf32>
    %122 = arith.mulf %113, %82 : vector<2x64xf32>
    %123 = arith.mulf %107, %115 : vector<2x64xf32>
    %124 = arith.addf %122, %123 : vector<2x64xf32>
    %125 = math.tanh %124 : vector<2x64xf32>
    %126 = arith.mulf %121, %125 : vector<2x64xf32>
    %127 = vector.extract_strided_slice %126 {offsets = [0, 0], sizes = [2, 32], strides = [1, 1]} : vector<2x64xf32> to vector<2x32xf32>
    %128 = arith.index_cast %c2_i32_31 : i32 to index
    %c0_38 = arith.constant 0 : index
    %c0_39 = arith.constant 0 : index
    %129 = vector.load %arg24[%128, %c0_38, %c0_39] : memref<8x2x128xf32, #tpu.memory_space<vmem>>, vector<1x2x32xf32>
    %130 = vector.shape_cast %129 : vector<1x2x32xf32> to vector<2x32xf32>
    %131 = vector.shape_cast %127 : vector<2x32xf32> to vector<1x2x32xf32>
    tpu.vector_store %arg24[%128, %c0_38, %c0_39], %131 {strides = array<i32>} : memref<8x2x128xf32, #tpu.memory_space<vmem>>, vector<1x2x32xf32>,
    %132 = vector.extract_strided_slice %126 {offsets = [0, 32], sizes = [2, 32], strides = [1, 1]} : vector<2x64xf32> to vector<2x32xf32>
    %c7_i32_40 = arith.constant 7 : i32
    %133 = arith.subi %c7_i32_40, %c2_i32_31 : i32
    %134 = arith.index_cast %133 : i32 to index
    %c0_41 = arith.constant 0 : index
    %c32_42 = arith.constant 32 : index
    %135 = vector.load %arg24[%134, %c0_41, %c32_42] : memref<8x2x128xf32, #tpu.memory_space<vmem>>, vector<1x2x32xf32>
    %136 = vector.shape_cast %135 : vector<1x2x32xf32> to vector<2x32xf32>
    %137 = vector.shape_cast %132 : vector<2x32xf32> to vector<1x2x32xf32>
    tpu.vector_store %arg24[%134, %c0_41, %c32_42], %137 {strides = array<i32>} : memref<8x2x128xf32, #tpu.memory_space<vmem>>, vector<1x2x32xf32>,
    %c3_i32 = arith.constant 3 : i32
    %c2_i32_43 = arith.constant 2 : i32
    %138 = arith.muli %c3_i32, %c2_i32_43 : i32
    %139 = arith.index_cast %138 : i32 to index
    %c0_44 = arith.constant 0 : index
    %140 = vector.load %arg22[%139, %c0_44] : memref<16x256xf32, #tpu.memory_space<vmem>>, vector<2x256xf32>
    %141 = arith.truncf %126 : vector<2x64xf32> to vector<2x64xbf16>
    %cst_45 = arith.constant dense<0.000000e+00> : vector<2x256xf32>
    %142 = tpu.matmul %141, %9, %cst_45 {dimension_numbers = #tpu.dot_dimension_numbers<[1], [0], [0], [1], [0, 0, 1, 1], [], []>} : vector<2x64xbf16>, vector<64x256xbf16>, vector<2x256xf32> -> vector<2x256xf32>
    %143 = arith.addf %140, %142 : vector<2x256xf32>
    %144 = vector.extract_strided_slice %143 {offsets = [0, 0], sizes = [2, 64], strides = [1, 1]} : vector<2x256xf32> to vector<2x64xf32>
    %145 = arith.negf %144 : vector<2x64xf32>
    %146 = math.exp %145 : vector<2x64xf32>
    %cst_46 = arith.constant 1.000000e+00 : f32
    %147 = vector.broadcast %cst_46 : f32 to vector<2x64xf32>
    %148 = arith.addf %147, %146 : vector<2x64xf32>
    %149 = arith.divf %147, %148 : vector<2x64xf32>
    %150 = vector.extract_strided_slice %143 {offsets = [0, 64], sizes = [2, 64], strides = [1, 1]} : vector<2x256xf32> to vector<2x64xf32>
    %151 = arith.negf %150 : vector<2x64xf32>
    %152 = math.exp %151 : vector<2x64xf32>
    %cst_47 = arith.constant 1.000000e+00 : f32
    %153 = vector.broadcast %cst_47 : f32 to vector<2x64xf32>
    %154 = arith.addf %153, %152 : vector<2x64xf32>
    %155 = arith.divf %153, %154 : vector<2x64xf32>
    %156 = vector.extract_strided_slice %143 {offsets = [0, 128], sizes = [2, 64], strides = [1, 1]} : vector<2x256xf32> to vector<2x64xf32>
    %157 = math.tanh %156 : vector<2x64xf32>
    %158 = vector.extract_strided_slice %143 {offsets = [0, 192], sizes = [2, 64], strides = [1, 1]} : vector<2x256xf32> to vector<2x64xf32>
    %159 = arith.negf %158 : vector<2x64xf32>
    %160 = math.exp %159 : vector<2x64xf32>
    %cst_48 = arith.constant 1.000000e+00 : f32
    %161 = vector.broadcast %cst_48 : f32 to vector<2x64xf32>
    %162 = arith.addf %161, %160 : vector<2x64xf32>
    %163 = arith.divf %161, %162 : vector<2x64xf32>
    %164 = arith.mulf %155, %124 : vector<2x64xf32>
    %165 = arith.mulf %149, %157 : vector<2x64xf32>
    %166 = arith.addf %164, %165 : vector<2x64xf32>
    %167 = math.tanh %166 : vector<2x64xf32>
    %168 = arith.mulf %163, %167 : vector<2x64xf32>
    %169 = vector.extract_strided_slice %168 {offsets = [0, 0], sizes = [2, 32], strides = [1, 1]} : vector<2x64xf32> to vector<2x32xf32>
    %170 = arith.index_cast %c3_i32 : i32 to index
    %c0_49 = arith.constant 0 : index
    %c0_50 = arith.constant 0 : index
    %171 = vector.load %arg24[%170, %c0_49, %c0_50] : memref<8x2x128xf32, #tpu.memory_space<vmem>>, vector<1x2x32xf32>
    %172 = vector.shape_cast %171 : vector<1x2x32xf32> to vector<2x32xf32>
    %173 = vector.shape_cast %169 : vector<2x32xf32> to vector<1x2x32xf32>
    tpu.vector_store %arg24[%170, %c0_49, %c0_50], %173 {strides = array<i32>} : memref<8x2x128xf32, #tpu.memory_space<vmem>>, vector<1x2x32xf32>,
    %174 = vector.extract_strided_slice %168 {offsets = [0, 32], sizes = [2, 32], strides = [1, 1]} : vector<2x64xf32> to vector<2x32xf32>
    %c7_i32_51 = arith.constant 7 : i32
    %175 = arith.subi %c7_i32_51, %c3_i32 : i32
    %176 = arith.index_cast %175 : i32 to index
    %c0_52 = arith.constant 0 : index
    %c32_53 = arith.constant 32 : index
    %177 = vector.load %arg24[%176, %c0_52, %c32_53] : memref<8x2x128xf32, #tpu.memory_space<vmem>>, vector<1x2x32xf32>
    %178 = vector.shape_cast %177 : vector<1x2x32xf32> to vector<2x32xf32>
    %179 = vector.shape_cast %174 : vector<2x32xf32> to vector<1x2x32xf32>
    tpu.vector_store %arg24[%176, %c0_52, %c32_53], %179 {strides = array<i32>} : memref<8x2x128xf32, #tpu.memory_space<vmem>>, vector<1x2x32xf32>,
    %c4_i32 = arith.constant 4 : i32
    %c2_i32_54 = arith.constant 2 : i32
    %180 = arith.muli %c4_i32, %c2_i32_54 : i32
    %181 = arith.index_cast %180 : i32 to index
    %c0_55 = arith.constant 0 : index
    %182 = vector.load %arg22[%181, %c0_55] : memref<16x256xf32, #tpu.memory_space<vmem>>, vector<2x256xf32>
    %183 = arith.truncf %168 : vector<2x64xf32> to vector<2x64xbf16>
    %cst_56 = arith.constant dense<0.000000e+00> : vector<2x256xf32>
    %184 = tpu.matmul %183, %9, %cst_56 {dimension_numbers = #tpu.dot_dimension_numbers<[1], [0], [0], [1], [0, 0, 1, 1], [], []>} : vector<2x64xbf16>, vector<64x256xbf16>, vector<2x256xf32> -> vector<2x256xf32>
    %185 = arith.addf %182, %184 : vector<2x256xf32>
    %186 = vector.extract_strided_slice %185 {offsets = [0, 0], sizes = [2, 64], strides = [1, 1]} : vector<2x256xf32> to vector<2x64xf32>
    %187 = arith.negf %186 : vector<2x64xf32>
    %188 = math.exp %187 : vector<2x64xf32>
    %cst_57 = arith.constant 1.000000e+00 : f32
    %189 = vector.broadcast %cst_57 : f32 to vector<2x64xf32>
    %190 = arith.addf %189, %188 : vector<2x64xf32>
    %191 = arith.divf %189, %190 : vector<2x64xf32>
    %192 = vector.extract_strided_slice %185 {offsets = [0, 64], sizes = [2, 64], strides = [1, 1]} : vector<2x256xf32> to vector<2x64xf32>
    %193 = arith.negf %192 : vector<2x64xf32>
    %194 = math.exp %193 : vector<2x64xf32>
    %cst_58 = arith.constant 1.000000e+00 : f32
    %195 = vector.broadcast %cst_58 : f32 to vector<2x64xf32>
    %196 = arith.addf %195, %194 : vector<2x64xf32>
    %197 = arith.divf %195, %196 : vector<2x64xf32>
    %198 = vector.extract_strided_slice %185 {offsets = [0, 128], sizes = [2, 64], strides = [1, 1]} : vector<2x256xf32> to vector<2x64xf32>
    %199 = math.tanh %198 : vector<2x64xf32>
    %200 = vector.extract_strided_slice %185 {offsets = [0, 192], sizes = [2, 64], strides = [1, 1]} : vector<2x256xf32> to vector<2x64xf32>
    %201 = arith.negf %200 : vector<2x64xf32>
    %202 = math.exp %201 : vector<2x64xf32>
    %cst_59 = arith.constant 1.000000e+00 : f32
    %203 = vector.broadcast %cst_59 : f32 to vector<2x64xf32>
    %204 = arith.addf %203, %202 : vector<2x64xf32>
    %205 = arith.divf %203, %204 : vector<2x64xf32>
    %206 = arith.mulf %197, %166 : vector<2x64xf32>
    %207 = arith.mulf %191, %199 : vector<2x64xf32>
    %208 = arith.addf %206, %207 : vector<2x64xf32>
    %209 = math.tanh %208 : vector<2x64xf32>
    %210 = arith.mulf %205, %209 : vector<2x64xf32>
    %211 = vector.extract_strided_slice %210 {offsets = [0, 0], sizes = [2, 32], strides = [1, 1]} : vector<2x64xf32> to vector<2x32xf32>
    %212 = arith.index_cast %c4_i32 : i32 to index
    %c0_60 = arith.constant 0 : index
    %c0_61 = arith.constant 0 : index
    %213 = vector.load %arg24[%212, %c0_60, %c0_61] : memref<8x2x128xf32, #tpu.memory_space<vmem>>, vector<1x2x32xf32>
    %214 = vector.shape_cast %213 : vector<1x2x32xf32> to vector<2x32xf32>
    %215 = vector.shape_cast %211 : vector<2x32xf32> to vector<1x2x32xf32>
    tpu.vector_store %arg24[%212, %c0_60, %c0_61], %215 {strides = array<i32>} : memref<8x2x128xf32, #tpu.memory_space<vmem>>, vector<1x2x32xf32>,
    %216 = vector.extract_strided_slice %210 {offsets = [0, 32], sizes = [2, 32], strides = [1, 1]} : vector<2x64xf32> to vector<2x32xf32>
    %c7_i32_62 = arith.constant 7 : i32
    %217 = arith.subi %c7_i32_62, %c4_i32 : i32
    %218 = arith.index_cast %217 : i32 to index
    %c0_63 = arith.constant 0 : index
    %c32_64 = arith.constant 32 : index
    %219 = vector.load %arg24[%218, %c0_63, %c32_64] : memref<8x2x128xf32, #tpu.memory_space<vmem>>, vector<1x2x32xf32>
    %220 = vector.shape_cast %219 : vector<1x2x32xf32> to vector<2x32xf32>
    %221 = vector.shape_cast %216 : vector<2x32xf32> to vector<1x2x32xf32>
    tpu.vector_store %arg24[%218, %c0_63, %c32_64], %221 {strides = array<i32>} : memref<8x2x128xf32, #tpu.memory_space<vmem>>, vector<1x2x32xf32>,
    %c5_i32 = arith.constant 5 : i32
    %c2_i32_65 = arith.constant 2 : i32
    %222 = arith.muli %c5_i32, %c2_i32_65 : i32
    %223 = arith.index_cast %222 : i32 to index
    %c0_66 = arith.constant 0 : index
    %224 = vector.load %arg22[%223, %c0_66] : memref<16x256xf32, #tpu.memory_space<vmem>>, vector<2x256xf32>
    %225 = arith.truncf %210 : vector<2x64xf32> to vector<2x64xbf16>
    %cst_67 = arith.constant dense<0.000000e+00> : vector<2x256xf32>
    %226 = tpu.matmul %225, %9, %cst_67 {dimension_numbers = #tpu.dot_dimension_numbers<[1], [0], [0], [1], [0, 0, 1, 1], [], []>} : vector<2x64xbf16>, vector<64x256xbf16>, vector<2x256xf32> -> vector<2x256xf32>
    %227 = arith.addf %224, %226 : vector<2x256xf32>
    %228 = vector.extract_strided_slice %227 {offsets = [0, 0], sizes = [2, 64], strides = [1, 1]} : vector<2x256xf32> to vector<2x64xf32>
    %229 = arith.negf %228 : vector<2x64xf32>
    %230 = math.exp %229 : vector<2x64xf32>
    %cst_68 = arith.constant 1.000000e+00 : f32
    %231 = vector.broadcast %cst_68 : f32 to vector<2x64xf32>
    %232 = arith.addf %231, %230 : vector<2x64xf32>
    %233 = arith.divf %231, %232 : vector<2x64xf32>
    %234 = vector.extract_strided_slice %227 {offsets = [0, 64], sizes = [2, 64], strides = [1, 1]} : vector<2x256xf32> to vector<2x64xf32>
    %235 = arith.negf %234 : vector<2x64xf32>
    %236 = math.exp %235 : vector<2x64xf32>
    %cst_69 = arith.constant 1.000000e+00 : f32
    %237 = vector.broadcast %cst_69 : f32 to vector<2x64xf32>
    %238 = arith.addf %237, %236 : vector<2x64xf32>
    %239 = arith.divf %237, %238 : vector<2x64xf32>
    %240 = vector.extract_strided_slice %227 {offsets = [0, 128], sizes = [2, 64], strides = [1, 1]} : vector<2x256xf32> to vector<2x64xf32>
    %241 = math.tanh %240 : vector<2x64xf32>
    %242 = vector.extract_strided_slice %227 {offsets = [0, 192], sizes = [2, 64], strides = [1, 1]} : vector<2x256xf32> to vector<2x64xf32>
    %243 = arith.negf %242 : vector<2x64xf32>
    %244 = math.exp %243 : vector<2x64xf32>
    %cst_70 = arith.constant 1.000000e+00 : f32
    %245 = vector.broadcast %cst_70 : f32 to vector<2x64xf32>
    %246 = arith.addf %245, %244 : vector<2x64xf32>
    %247 = arith.divf %245, %246 : vector<2x64xf32>
    %248 = arith.mulf %239, %208 : vector<2x64xf32>
    %249 = arith.mulf %233, %241 : vector<2x64xf32>
    %250 = arith.addf %248, %249 : vector<2x64xf32>
    %251 = math.tanh %250 : vector<2x64xf32>
    %252 = arith.mulf %247, %251 : vector<2x64xf32>
    %253 = vector.extract_strided_slice %252 {offsets = [0, 0], sizes = [2, 32], strides = [1, 1]} : vector<2x64xf32> to vector<2x32xf32>
    %254 = arith.index_cast %c5_i32 : i32 to index
    %c0_71 = arith.constant 0 : index
    %c0_72 = arith.constant 0 : index
    %255 = vector.load %arg24[%254, %c0_71, %c0_72] : memref<8x2x128xf32, #tpu.memory_space<vmem>>, vector<1x2x32xf32>
    %256 = vector.shape_cast %255 : vector<1x2x32xf32> to vector<2x32xf32>
    %257 = vector.shape_cast %253 : vector<2x32xf32> to vector<1x2x32xf32>
    tpu.vector_store %arg24[%254, %c0_71, %c0_72], %257 {strides = array<i32>} : memref<8x2x128xf32, #tpu.memory_space<vmem>>, vector<1x2x32xf32>,
    %258 = vector.extract_strided_slice %252 {offsets = [0, 32], sizes = [2, 32], strides = [1, 1]} : vector<2x64xf32> to vector<2x32xf32>
    %c7_i32_73 = arith.constant 7 : i32
    %259 = arith.subi %c7_i32_73, %c5_i32 : i32
    %260 = arith.index_cast %259 : i32 to index
    %c0_74 = arith.constant 0 : index
    %c32_75 = arith.constant 32 : index
    %261 = vector.load %arg24[%260, %c0_74, %c32_75] : memref<8x2x128xf32, #tpu.memory_space<vmem>>, vector<1x2x32xf32>
    %262 = vector.shape_cast %261 : vector<1x2x32xf32> to vector<2x32xf32>
    %263 = vector.shape_cast %258 : vector<2x32xf32> to vector<1x2x32xf32>
    tpu.vector_store %arg24[%260, %c0_74, %c32_75], %263 {strides = array<i32>} : memref<8x2x128xf32, #tpu.memory_space<vmem>>, vector<1x2x32xf32>,
    %c6_i32 = arith.constant 6 : i32
    %c2_i32_76 = arith.constant 2 : i32
    %264 = arith.muli %c6_i32, %c2_i32_76 : i32
    %265 = arith.index_cast %264 : i32 to index
    %c0_77 = arith.constant 0 : index
    %266 = vector.load %arg22[%265, %c0_77] : memref<16x256xf32, #tpu.memory_space<vmem>>, vector<2x256xf32>
    %267 = arith.truncf %252 : vector<2x64xf32> to vector<2x64xbf16>
    %cst_78 = arith.constant dense<0.000000e+00> : vector<2x256xf32>
    %268 = tpu.matmul %267, %9, %cst_78 {dimension_numbers = #tpu.dot_dimension_numbers<[1], [0], [0], [1], [0, 0, 1, 1], [], []>} : vector<2x64xbf16>, vector<64x256xbf16>, vector<2x256xf32> -> vector<2x256xf32>
    %269 = arith.addf %266, %268 : vector<2x256xf32>
    %270 = vector.extract_strided_slice %269 {offsets = [0, 0], sizes = [2, 64], strides = [1, 1]} : vector<2x256xf32> to vector<2x64xf32>
    %271 = arith.negf %270 : vector<2x64xf32>
    %272 = math.exp %271 : vector<2x64xf32>
    %cst_79 = arith.constant 1.000000e+00 : f32
    %273 = vector.broadcast %cst_79 : f32 to vector<2x64xf32>
    %274 = arith.addf %273, %272 : vector<2x64xf32>
    %275 = arith.divf %273, %274 : vector<2x64xf32>
    %276 = vector.extract_strided_slice %269 {offsets = [0, 64], sizes = [2, 64], strides = [1, 1]} : vector<2x256xf32> to vector<2x64xf32>
    %277 = arith.negf %276 : vector<2x64xf32>
    %278 = math.exp %277 : vector<2x64xf32>
    %cst_80 = arith.constant 1.000000e+00 : f32
    %279 = vector.broadcast %cst_80 : f32 to vector<2x64xf32>
    %280 = arith.addf %279, %278 : vector<2x64xf32>
    %281 = arith.divf %279, %280 : vector<2x64xf32>
    %282 = vector.extract_strided_slice %269 {offsets = [0, 128], sizes = [2, 64], strides = [1, 1]} : vector<2x256xf32> to vector<2x64xf32>
    %283 = math.tanh %282 : vector<2x64xf32>
    %284 = vector.extract_strided_slice %269 {offsets = [0, 192], sizes = [2, 64], strides = [1, 1]} : vector<2x256xf32> to vector<2x64xf32>
    %285 = arith.negf %284 : vector<2x64xf32>
    %286 = math.exp %285 : vector<2x64xf32>
    %cst_81 = arith.constant 1.000000e+00 : f32
    %287 = vector.broadcast %cst_81 : f32 to vector<2x64xf32>
    %288 = arith.addf %287, %286 : vector<2x64xf32>
    %289 = arith.divf %287, %288 : vector<2x64xf32>
    %290 = arith.mulf %281, %250 : vector<2x64xf32>
    %291 = arith.mulf %275, %283 : vector<2x64xf32>
    %292 = arith.addf %290, %291 : vector<2x64xf32>
    %293 = math.tanh %292 : vector<2x64xf32>
    %294 = arith.mulf %289, %293 : vector<2x64xf32>
    %295 = vector.extract_strided_slice %294 {offsets = [0, 0], sizes = [2, 32], strides = [1, 1]} : vector<2x64xf32> to vector<2x32xf32>
    %296 = arith.index_cast %c6_i32 : i32 to index
    %c0_82 = arith.constant 0 : index
    %c0_83 = arith.constant 0 : index
    %297 = vector.load %arg24[%296, %c0_82, %c0_83] : memref<8x2x128xf32, #tpu.memory_space<vmem>>, vector<1x2x32xf32>
    %298 = vector.shape_cast %297 : vector<1x2x32xf32> to vector<2x32xf32>
    %299 = vector.shape_cast %295 : vector<2x32xf32> to vector<1x2x32xf32>
    tpu.vector_store %arg24[%296, %c0_82, %c0_83], %299 {strides = array<i32>} : memref<8x2x128xf32, #tpu.memory_space<vmem>>, vector<1x2x32xf32>,
    %300 = vector.extract_strided_slice %294 {offsets = [0, 32], sizes = [2, 32], strides = [1, 1]} : vector<2x64xf32> to vector<2x32xf32>
    %c7_i32_84 = arith.constant 7 : i32
    %301 = arith.subi %c7_i32_84, %c6_i32 : i32
    %302 = arith.index_cast %301 : i32 to index
    %c0_85 = arith.constant 0 : index
    %c32_86 = arith.constant 32 : index
    %303 = vector.load %arg24[%302, %c0_85, %c32_86] : memref<8x2x128xf32, #tpu.memory_space<vmem>>, vector<1x2x32xf32>
    %304 = vector.shape_cast %303 : vector<1x2x32xf32> to vector<2x32xf32>
    %305 = vector.shape_cast %300 : vector<2x32xf32> to vector<1x2x32xf32>
    tpu.vector_store %arg24[%302, %c0_85, %c32_86], %305 {strides = array<i32>} : memref<8x2x128xf32, #tpu.memory_space<vmem>>, vector<1x2x32xf32>,
    %c7_i32_87 = arith.constant 7 : i32
    %c2_i32_88 = arith.constant 2 : i32
    %306 = arith.muli %c7_i32_87, %c2_i32_88 : i32
    %307 = arith.index_cast %306 : i32 to index
    %c0_89 = arith.constant 0 : index
    %308 = vector.load %arg22[%307, %c0_89] : memref<16x256xf32, #tpu.memory_space<vmem>>, vector<2x256xf32>
    %309 = arith.truncf %294 : vector<2x64xf32> to vector<2x64xbf16>
    %cst_90 = arith.constant dense<0.000000e+00> : vector<2x256xf32>
    %310 = tpu.matmul %309, %9, %cst_90 {dimension_numbers = #tpu.dot_dimension_numbers<[1], [0], [0], [1], [0, 0, 1, 1], [], []>} : vector<2x64xbf16>, vector<64x256xbf16>, vector<2x256xf32> -> vector<2x256xf32>
    %311 = arith.addf %308, %310 : vector<2x256xf32>
    %312 = vector.extract_strided_slice %311 {offsets = [0, 0], sizes = [2, 64], strides = [1, 1]} : vector<2x256xf32> to vector<2x64xf32>
    %313 = arith.negf %312 : vector<2x64xf32>
    %314 = math.exp %313 : vector<2x64xf32>
    %cst_91 = arith.constant 1.000000e+00 : f32
    %315 = vector.broadcast %cst_91 : f32 to vector<2x64xf32>
    %316 = arith.addf %315, %314 : vector<2x64xf32>
    %317 = arith.divf %315, %316 : vector<2x64xf32>
    %318 = vector.extract_strided_slice %311 {offsets = [0, 64], sizes = [2, 64], strides = [1, 1]} : vector<2x256xf32> to vector<2x64xf32>
    %319 = arith.negf %318 : vector<2x64xf32>
    %320 = math.exp %319 : vector<2x64xf32>
    %cst_92 = arith.constant 1.000000e+00 : f32
    %321 = vector.broadcast %cst_92 : f32 to vector<2x64xf32>
    %322 = arith.addf %321, %320 : vector<2x64xf32>
    %323 = arith.divf %321, %322 : vector<2x64xf32>
    %324 = vector.extract_strided_slice %311 {offsets = [0, 128], sizes = [2, 64], strides = [1, 1]} : vector<2x256xf32> to vector<2x64xf32>
    %325 = math.tanh %324 : vector<2x64xf32>
    %326 = vector.extract_strided_slice %311 {offsets = [0, 192], sizes = [2, 64], strides = [1, 1]} : vector<2x256xf32> to vector<2x64xf32>
    %327 = arith.negf %326 : vector<2x64xf32>
    %328 = math.exp %327 : vector<2x64xf32>
    %cst_93 = arith.constant 1.000000e+00 : f32
    %329 = vector.broadcast %cst_93 : f32 to vector<2x64xf32>
    %330 = arith.addf %329, %328 : vector<2x64xf32>
    %331 = arith.divf %329, %330 : vector<2x64xf32>
    %332 = arith.mulf %323, %292 : vector<2x64xf32>
    %333 = arith.mulf %317, %325 : vector<2x64xf32>
    %334 = arith.addf %332, %333 : vector<2x64xf32>
    %335 = math.tanh %334 : vector<2x64xf32>
    %336 = arith.mulf %331, %335 : vector<2x64xf32>
    %337 = vector.extract_strided_slice %336 {offsets = [0, 0], sizes = [2, 32], strides = [1, 1]} : vector<2x64xf32> to vector<2x32xf32>
    %338 = arith.index_cast %c7_i32_87 : i32 to index
    %c0_94 = arith.constant 0 : index
    %c0_95 = arith.constant 0 : index
    %339 = vector.load %arg24[%338, %c0_94, %c0_95] : memref<8x2x128xf32, #tpu.memory_space<vmem>>, vector<1x2x32xf32>
    %340 = vector.shape_cast %339 : vector<1x2x32xf32> to vector<2x32xf32>
    %341 = vector.shape_cast %337 : vector<2x32xf32> to vector<1x2x32xf32>
    tpu.vector_store %arg24[%338, %c0_94, %c0_95], %341 {strides = array<i32>} : memref<8x2x128xf32, #tpu.memory_space<vmem>>, vector<1x2x32xf32>,
    %342 = vector.extract_strided_slice %336 {offsets = [0, 32], sizes = [2, 32], strides = [1, 1]} : vector<2x64xf32> to vector<2x32xf32>
    %c7_i32_96 = arith.constant 7 : i32
    %343 = arith.subi %c7_i32_96, %c7_i32_87 : i32
    %344 = arith.index_cast %343 : i32 to index
    %c0_97 = arith.constant 0 : index
    %c32_98 = arith.constant 32 : index
    %345 = vector.load %arg24[%344, %c0_97, %c32_98] : memref<8x2x128xf32, #tpu.memory_space<vmem>>, vector<1x2x32xf32>
    %346 = vector.shape_cast %345 : vector<1x2x32xf32> to vector<2x32xf32>
    %347 = vector.shape_cast %342 : vector<2x32xf32> to vector<1x2x32xf32>
    tpu.vector_store %arg24[%344, %c0_97, %c32_98], %347 {strides = array<i32>} : memref<8x2x128xf32, #tpu.memory_space<vmem>>, vector<1x2x32xf32>,
    %c8_i32 = arith.constant 8 : i32
    %c0_99 = arith.constant 0 : index
    %c0_100 = arith.constant 0 : index
    %c0_101 = arith.constant 0 : index
    %348 = vector.load %arg24[%c0_99, %c0_100, %c0_101] : memref<8x2x128xf32, #tpu.memory_space<vmem>>, vector<1x2x64xf32>
    %349 = vector.shape_cast %348 : vector<1x2x64xf32> to vector<2x64xf32>
    %c0_102 = arith.constant 0 : index
    %c0_103 = arith.constant 0 : index
    %350 = vector.load %arg23[%c0_102, %c0_103] : memref<16x128xf32, #tpu.memory_space<vmem>>, vector<2x64xf32>
    tpu.vector_store %arg23[%c0_102, %c0_103], %349 {strides = array<i32>} : memref<16x128xf32, #tpu.memory_space<vmem>>, vector<2x64xf32>,
    %c7 = arith.constant 7 : index
    %c0_104 = arith.constant 0 : index
    %c0_105 = arith.constant 0 : index
    %351 = vector.load %arg24[%c7, %c0_104, %c0_105] : memref<8x2x128xf32, #tpu.memory_space<vmem>>, vector<1x2x64xf32>
    %352 = vector.shape_cast %351 : vector<1x2x64xf32> to vector<2x64xf32>
    %c0_106 = arith.constant 0 : index
    %c64 = arith.constant 64 : index
    %353 = vector.load %arg23[%c0_106, %c64] : memref<16x128xf32, #tpu.memory_space<vmem>>, vector<2x64xf32>
    tpu.vector_store %arg23[%c0_106, %c64], %352 {strides = array<i32>} : memref<16x128xf32, #tpu.memory_space<vmem>>, vector<2x64xf32>,
    %c1 = arith.constant 1 : index
    %c0_107 = arith.constant 0 : index
    %c0_108 = arith.constant 0 : index
    %354 = vector.load %arg24[%c1, %c0_107, %c0_108] : memref<8x2x128xf32, #tpu.memory_space<vmem>>, vector<1x2x64xf32>
    %355 = vector.shape_cast %354 : vector<1x2x64xf32> to vector<2x64xf32>
    %c2 = arith.constant 2 : index
    %c0_109 = arith.constant 0 : index
    %356 = vector.load %arg23[%c2, %c0_109] : memref<16x128xf32, #tpu.memory_space<vmem>>, vector<2x64xf32>
    tpu.vector_store %arg23[%c2, %c0_109], %355 {strides = array<i32>} : memref<16x128xf32, #tpu.memory_space<vmem>>, vector<2x64xf32>,
    %c6 = arith.constant 6 : index
    %c0_110 = arith.constant 0 : index
    %c0_111 = arith.constant 0 : index
    %357 = vector.load %arg24[%c6, %c0_110, %c0_111] : memref<8x2x128xf32, #tpu.memory_space<vmem>>, vector<1x2x64xf32>
    %358 = vector.shape_cast %357 : vector<1x2x64xf32> to vector<2x64xf32>
    %c2_112 = arith.constant 2 : index
    %c64_113 = arith.constant 64 : index
    %359 = vector.load %arg23[%c2_112, %c64_113] : memref<16x128xf32, #tpu.memory_space<vmem>>, vector<2x64xf32>
    tpu.vector_store %arg23[%c2_112, %c64_113], %358 {strides = array<i32>} : memref<16x128xf32, #tpu.memory_space<vmem>>, vector<2x64xf32>,
    %c2_114 = arith.constant 2 : index
    %c0_115 = arith.constant 0 : index
    %c0_116 = arith.constant 0 : index
    %360 = vector.load %arg24[%c2_114, %c0_115, %c0_116] : memref<8x2x128xf32, #tpu.memory_space<vmem>>, vector<1x2x64xf32>
    %361 = vector.shape_cast %360 : vector<1x2x64xf32> to vector<2x64xf32>
    %c4 = arith.constant 4 : index
    %c0_117 = arith.constant 0 : index
    %362 = vector.load %arg23[%c4, %c0_117] : memref<16x128xf32, #tpu.memory_space<vmem>>, vector<2x64xf32>
    tpu.vector_store %arg23[%c4, %c0_117], %361 {strides = array<i32>} : memref<16x128xf32, #tpu.memory_space<vmem>>, vector<2x64xf32>,
    %c5 = arith.constant 5 : index
    %c0_118 = arith.constant 0 : index
    %c0_119 = arith.constant 0 : index
    %363 = vector.load %arg24[%c5, %c0_118, %c0_119] : memref<8x2x128xf32, #tpu.memory_space<vmem>>, vector<1x2x64xf32>
    %364 = vector.shape_cast %363 : vector<1x2x64xf32> to vector<2x64xf32>
    %c4_120 = arith.constant 4 : index
    %c64_121 = arith.constant 64 : index
    %365 = vector.load %arg23[%c4_120, %c64_121] : memref<16x128xf32, #tpu.memory_space<vmem>>, vector<2x64xf32>
    tpu.vector_store %arg23[%c4_120, %c64_121], %364 {strides = array<i32>} : memref<16x128xf32, #tpu.memory_space<vmem>>, vector<2x64xf32>,
    %c3 = arith.constant 3 : index
    %c0_122 = arith.constant 0 : index
    %c0_123 = arith.constant 0 : index
    %366 = vector.load %arg24[%c3, %c0_122, %c0_123] : memref<8x2x128xf32, #tpu.memory_space<vmem>>, vector<1x2x64xf32>
    %367 = vector.shape_cast %366 : vector<1x2x64xf32> to vector<2x64xf32>
    %c6_124 = arith.constant 6 : index
    %c0_125 = arith.constant 0 : index
    %368 = vector.load %arg23[%c6_124, %c0_125] : memref<16x128xf32, #tpu.memory_space<vmem>>, vector<2x64xf32>
    tpu.vector_store %arg23[%c6_124, %c0_125], %367 {strides = array<i32>} : memref<16x128xf32, #tpu.memory_space<vmem>>, vector<2x64xf32>,
    %c4_126 = arith.constant 4 : index
    %c0_127 = arith.constant 0 : index
    %c0_128 = arith.constant 0 : index
    %369 = vector.load %arg24[%c4_126, %c0_127, %c0_128] : memref<8x2x128xf32, #tpu.memory_space<vmem>>, vector<1x2x64xf32>
    %370 = vector.shape_cast %369 : vector<1x2x64xf32> to vector<2x64xf32>
    %c6_129 = arith.constant 6 : index
    %c64_130 = arith.constant 64 : index
    %371 = vector.load %arg23[%c6_129, %c64_130] : memref<16x128xf32, #tpu.memory_space<vmem>>, vector<2x64xf32>
    tpu.vector_store %arg23[%c6_129, %c64_130], %370 {strides = array<i32>} : memref<16x128xf32, #tpu.memory_space<vmem>>, vector<2x64xf32>,
    %c4_131 = arith.constant 4 : index
    %c0_132 = arith.constant 0 : index
    %c0_133 = arith.constant 0 : index
    %372 = vector.load %arg24[%c4_131, %c0_132, %c0_133] : memref<8x2x128xf32, #tpu.memory_space<vmem>>, vector<1x2x64xf32>
    %373 = vector.shape_cast %372 : vector<1x2x64xf32> to vector<2x64xf32>
    %c8 = arith.constant 8 : index
    %c0_134 = arith.constant 0 : index
    %374 = vector.load %arg23[%c8, %c0_134] : memref<16x128xf32, #tpu.memory_space<vmem>>, vector<2x64xf32>
    tpu.vector_store %arg23[%c8, %c0_134], %373 {strides = array<i32>} : memref<16x128xf32, #tpu.memory_space<vmem>>, vector<2x64xf32>,
    %c3_135 = arith.constant 3 : index
    %c0_136 = arith.constant 0 : index
    %c0_137 = arith.constant 0 : index
    %375 = vector.load %arg24[%c3_135, %c0_136, %c0_137] : memref<8x2x128xf32, #tpu.memory_space<vmem>>, vector<1x2x64xf32>
    %376 = vector.shape_cast %375 : vector<1x2x64xf32> to vector<2x64xf32>
    %c8_138 = arith.constant 8 : index
    %c64_139 = arith.constant 64 : index
    %377 = vector.load %arg23[%c8_138, %c64_139] : memref<16x128xf32, #tpu.memory_space<vmem>>, vector<2x64xf32>
    tpu.vector_store %arg23[%c8_138, %c64_139], %376 {strides = array<i32>} : memref<16x128xf32, #tpu.memory_space<vmem>>, vector<2x64xf32>,
    %c5_140 = arith.constant 5 : index
    %c0_141 = arith.constant 0 : index
    %c0_142 = arith.constant 0 : index
    %378 = vector.load %arg24[%c5_140, %c0_141, %c0_142] : memref<8x2x128xf32, #tpu.memory_space<vmem>>, vector<1x2x64xf32>
    %379 = vector.shape_cast %378 : vector<1x2x64xf32> to vector<2x64xf32>
    %c10 = arith.constant 10 : index
    %c0_143 = arith.constant 0 : index
    %380 = vector.load %arg23[%c10, %c0_143] : memref<16x128xf32, #tpu.memory_space<vmem>>, vector<2x64xf32>
    tpu.vector_store %arg23[%c10, %c0_143], %379 {strides = array<i32>} : memref<16x128xf32, #tpu.memory_space<vmem>>, vector<2x64xf32>,
    %c2_144 = arith.constant 2 : index
    %c0_145 = arith.constant 0 : index
    %c0_146 = arith.constant 0 : index
    %381 = vector.load %arg24[%c2_144, %c0_145, %c0_146] : memref<8x2x128xf32, #tpu.memory_space<vmem>>, vector<1x2x64xf32>
    %382 = vector.shape_cast %381 : vector<1x2x64xf32> to vector<2x64xf32>
    %c10_147 = arith.constant 10 : index
    %c64_148 = arith.constant 64 : index
    %383 = vector.load %arg23[%c10_147, %c64_148] : memref<16x128xf32, #tpu.memory_space<vmem>>, vector<2x64xf32>
    tpu.vector_store %arg23[%c10_147, %c64_148], %382 {strides = array<i32>} : memref<16x128xf32, #tpu.memory_space<vmem>>, vector<2x64xf32>,
    %c6_149 = arith.constant 6 : index
    %c0_150 = arith.constant 0 : index
    %c0_151 = arith.constant 0 : index
    %384 = vector.load %arg24[%c6_149, %c0_150, %c0_151] : memref<8x2x128xf32, #tpu.memory_space<vmem>>, vector<1x2x64xf32>
    %385 = vector.shape_cast %384 : vector<1x2x64xf32> to vector<2x64xf32>
    %c12 = arith.constant 12 : index
    %c0_152 = arith.constant 0 : index
    %386 = vector.load %arg23[%c12, %c0_152] : memref<16x128xf32, #tpu.memory_space<vmem>>, vector<2x64xf32>
    tpu.vector_store %arg23[%c12, %c0_152], %385 {strides = array<i32>} : memref<16x128xf32, #tpu.memory_space<vmem>>, vector<2x64xf32>,
    %c1_153 = arith.constant 1 : index
    %c0_154 = arith.constant 0 : index
    %c0_155 = arith.constant 0 : index
    %387 = vector.load %arg24[%c1_153, %c0_154, %c0_155] : memref<8x2x128xf32, #tpu.memory_space<vmem>>, vector<1x2x64xf32>
    %388 = vector.shape_cast %387 : vector<1x2x64xf32> to vector<2x64xf32>
    %c12_156 = arith.constant 12 : index
    %c64_157 = arith.constant 64 : index
    %389 = vector.load %arg23[%c12_156, %c64_157] : memref<16x128xf32, #tpu.memory_space<vmem>>, vector<2x64xf32>
    tpu.vector_store %arg23[%c12_156, %c64_157], %388 {strides = array<i32>} : memref<16x128xf32, #tpu.memory_space<vmem>>, vector<2x64xf32>,
    %c7_158 = arith.constant 7 : index
    %c0_159 = arith.constant 0 : index
    %c0_160 = arith.constant 0 : index
    %390 = vector.load %arg24[%c7_158, %c0_159, %c0_160] : memref<8x2x128xf32, #tpu.memory_space<vmem>>, vector<1x2x64xf32>
    %391 = vector.shape_cast %390 : vector<1x2x64xf32> to vector<2x64xf32>
    %c14 = arith.constant 14 : index
    %c0_161 = arith.constant 0 : index
    %392 = vector.load %arg23[%c14, %c0_161] : memref<16x128xf32, #tpu.memory_space<vmem>>, vector<2x64xf32>
    tpu.vector_store %arg23[%c14, %c0_161], %391 {strides = array<i32>} : memref<16x128xf32, #tpu.memory_space<vmem>>, vector<2x64xf32>,
    %c0_162 = arith.constant 0 : index
    %c0_163 = arith.constant 0 : index
    %c0_164 = arith.constant 0 : index
    %393 = vector.load %arg24[%c0_162, %c0_163, %c0_164] : memref<8x2x128xf32, #tpu.memory_space<vmem>>, vector<1x2x64xf32>
    %394 = vector.shape_cast %393 : vector<1x2x64xf32> to vector<2x64xf32>
    %c14_165 = arith.constant 14 : index
    %c64_166 = arith.constant 64 : index
    %395 = vector.load %arg23[%c14_165, %c64_166] : memref<16x128xf32, #tpu.memory_space<vmem>>, vector<2x64xf32>
    tpu.vector_store %arg23[%c14_165, %c64_166], %394 {strides = array<i32>} : memref<16x128xf32, #tpu.memory_space<vmem>>, vector<2x64xf32>,
    %c0_167 = arith.constant 0 : index
    %c0_168 = arith.constant 0 : index
    %396 = vector.load %arg23[%c0_167, %c0_168] : memref<16x128xf32, #tpu.memory_space<vmem>>, vector<16x128xf32>
    %397 = arith.truncf %396 : vector<16x128xf32> to vector<16x128xbf16>
    %c0_169 = arith.constant 0 : index
    %c0_170 = arith.constant 0 : index
    %398 = vector.load %arg6[%c0_169, %c0_170] : memref<128x256xbf16, #tpu.memory_space<vmem>>, vector<128x256xbf16>
    %cst_171 = arith.constant dense<0.000000e+00> : vector<16x256xf32>
    %399 = tpu.matmul %397, %398, %cst_171 {dimension_numbers = #tpu.dot_dimension_numbers<[1], [0], [0], [1], [0, 0, 1, 1], [], []>} : vector<16x128xbf16>, vector<128x256xbf16>, vector<16x256xf32> -> vector<16x256xf32>
    %c0_172 = arith.constant 0 : index
    %c0_173 = arith.constant 0 : index
    %400 = vector.load %arg7[%c0_172, %c0_173] : memref<1x256xf32, #tpu.memory_space<vmem>>, vector<1x256xf32>
    %401 = vector.broadcast %400 : vector<1x256xf32> to vector<16x256xf32>
    %402 = arith.addf %399, %401 : vector<16x256xf32>
    %c0_174 = arith.constant 0 : index
    %c0_175 = arith.constant 0 : index
    %403 = vector.load %arg22[%c0_174, %c0_175] : memref<16x256xf32, #tpu.memory_space<vmem>>, vector<16x256xf32>
    tpu.vector_store %arg22[%c0_174, %c0_175], %402 {strides = array<i32>} : memref<16x256xf32, #tpu.memory_space<vmem>>, vector<16x256xf32>,
    %c0_176 = arith.constant 0 : index
    %c0_177 = arith.constant 0 : index
    %404 = vector.load %arg8[%c0_176, %c0_177] : memref<64x256xbf16, #tpu.memory_space<vmem>>, vector<64x256xbf16>
    %cst_178 = arith.constant 0.000000e+00 : f32
    %405 = vector.broadcast %cst_178 : f32 to vector<2x64xf32>
    %cst_179 = arith.constant 0.000000e+00 : f32
    %406 = vector.broadcast %cst_179 : f32 to vector<2x64xf32>
    %c0_i32_180 = arith.constant 0 : i32
    %c2_i32_181 = arith.constant 2 : i32
    %407 = arith.muli %c0_i32_180, %c2_i32_181 : i32
    %408 = arith.index_cast %407 : i32 to index
    %c0_182 = arith.constant 0 : index
    %409 = vector.load %arg22[%408, %c0_182] : memref<16x256xf32, #tpu.memory_space<vmem>>, vector<2x256xf32>
    %410 = arith.truncf %405 : vector<2x64xf32> to vector<2x64xbf16>
    %cst_183 = arith.constant dense<0.000000e+00> : vector<2x256xf32>
    %411 = tpu.matmul %410, %404, %cst_183 {dimension_numbers = #tpu.dot_dimension_numbers<[1], [0], [0], [1], [0, 0, 1, 1], [], []>} : vector<2x64xbf16>, vector<64x256xbf16>, vector<2x256xf32> -> vector<2x256xf32>
    %412 = arith.addf %409, %411 : vector<2x256xf32>
    %413 = vector.extract_strided_slice %412 {offsets = [0, 0], sizes = [2, 64], strides = [1, 1]} : vector<2x256xf32> to vector<2x64xf32>
    %414 = arith.negf %413 : vector<2x64xf32>
    %415 = math.exp %414 : vector<2x64xf32>
    %cst_184 = arith.constant 1.000000e+00 : f32
    %416 = vector.broadcast %cst_184 : f32 to vector<2x64xf32>
    %417 = arith.addf %416, %415 : vector<2x64xf32>
    %418 = arith.divf %416, %417 : vector<2x64xf32>
    %419 = vector.extract_strided_slice %412 {offsets = [0, 64], sizes = [2, 64], strides = [1, 1]} : vector<2x256xf32> to vector<2x64xf32>
    %420 = arith.negf %419 : vector<2x64xf32>
    %421 = math.exp %420 : vector<2x64xf32>
    %cst_185 = arith.constant 1.000000e+00 : f32
    %422 = vector.broadcast %cst_185 : f32 to vector<2x64xf32>
    %423 = arith.addf %422, %421 : vector<2x64xf32>
    %424 = arith.divf %422, %423 : vector<2x64xf32>
    %425 = vector.extract_strided_slice %412 {offsets = [0, 128], sizes = [2, 64], strides = [1, 1]} : vector<2x256xf32> to vector<2x64xf32>
    %426 = math.tanh %425 : vector<2x64xf32>
    %427 = vector.extract_strided_slice %412 {offsets = [0, 192], sizes = [2, 64], strides = [1, 1]} : vector<2x256xf32> to vector<2x64xf32>
    %428 = arith.negf %427 : vector<2x64xf32>
    %429 = math.exp %428 : vector<2x64xf32>
    %cst_186 = arith.constant 1.000000e+00 : f32
    %430 = vector.broadcast %cst_186 : f32 to vector<2x64xf32>
    %431 = arith.addf %430, %429 : vector<2x64xf32>
    %432 = arith.divf %430, %431 : vector<2x64xf32>
    %433 = arith.mulf %424, %406 : vector<2x64xf32>
    %434 = arith.mulf %418, %426 : vector<2x64xf32>
    %435 = arith.addf %433, %434 : vector<2x64xf32>
    %436 = math.tanh %435 : vector<2x64xf32>
    %437 = arith.mulf %432, %436 : vector<2x64xf32>
    %438 = vector.extract_strided_slice %437 {offsets = [0, 0], sizes = [2, 32], strides = [1, 1]} : vector<2x64xf32> to vector<2x32xf32>
    %439 = arith.index_cast %c0_i32_180 : i32 to index
    %c0_187 = arith.constant 0 : index
    %c64_188 = arith.constant 64 : index
    %440 = vector.load %arg24[%439, %c0_187, %c64_188] : memref<8x2x128xf32, #tpu.memory_space<vmem>>, vector<1x2x32xf32>
    %441 = vector.shape_cast %440 : vector<1x2x32xf32> to vector<2x32xf32>
    %442 = vector.shape_cast %438 : vector<2x32xf32> to vector<1x2x32xf32>
    tpu.vector_store %arg24[%439, %c0_187, %c64_188], %442 {strides = array<i32>} : memref<8x2x128xf32, #tpu.memory_space<vmem>>, vector<1x2x32xf32>,
    %443 = vector.extract_strided_slice %437 {offsets = [0, 32], sizes = [2, 32], strides = [1, 1]} : vector<2x64xf32> to vector<2x32xf32>
    %c7_i32_189 = arith.constant 7 : i32
    %444 = arith.subi %c7_i32_189, %c0_i32_180 : i32
    %445 = arith.index_cast %444 : i32 to index
    %c0_190 = arith.constant 0 : index
    %c96 = arith.constant 96 : index
    %446 = vector.load %arg24[%445, %c0_190, %c96] : memref<8x2x128xf32, #tpu.memory_space<vmem>>, vector<1x2x32xf32>
    %447 = vector.shape_cast %446 : vector<1x2x32xf32> to vector<2x32xf32>
    %448 = vector.shape_cast %443 : vector<2x32xf32> to vector<1x2x32xf32>
    tpu.vector_store %arg24[%445, %c0_190, %c96], %448 {strides = array<i32>} : memref<8x2x128xf32, #tpu.memory_space<vmem>>, vector<1x2x32xf32>,
    %c1_i32_191 = arith.constant 1 : i32
    %c2_i32_192 = arith.constant 2 : i32
    %449 = arith.muli %c1_i32_191, %c2_i32_192 : i32
    %450 = arith.index_cast %449 : i32 to index
    %c0_193 = arith.constant 0 : index
    %451 = vector.load %arg22[%450, %c0_193] : memref<16x256xf32, #tpu.memory_space<vmem>>, vector<2x256xf32>
    %452 = arith.truncf %437 : vector<2x64xf32> to vector<2x64xbf16>
    %cst_194 = arith.constant dense<0.000000e+00> : vector<2x256xf32>
    %453 = tpu.matmul %452, %404, %cst_194 {dimension_numbers = #tpu.dot_dimension_numbers<[1], [0], [0], [1], [0, 0, 1, 1], [], []>} : vector<2x64xbf16>, vector<64x256xbf16>, vector<2x256xf32> -> vector<2x256xf32>
    %454 = arith.addf %451, %453 : vector<2x256xf32>
    %455 = vector.extract_strided_slice %454 {offsets = [0, 0], sizes = [2, 64], strides = [1, 1]} : vector<2x256xf32> to vector<2x64xf32>
    %456 = arith.negf %455 : vector<2x64xf32>
    %457 = math.exp %456 : vector<2x64xf32>
    %cst_195 = arith.constant 1.000000e+00 : f32
    %458 = vector.broadcast %cst_195 : f32 to vector<2x64xf32>
    %459 = arith.addf %458, %457 : vector<2x64xf32>
    %460 = arith.divf %458, %459 : vector<2x64xf32>
    %461 = vector.extract_strided_slice %454 {offsets = [0, 64], sizes = [2, 64], strides = [1, 1]} : vector<2x256xf32> to vector<2x64xf32>
    %462 = arith.negf %461 : vector<2x64xf32>
    %463 = math.exp %462 : vector<2x64xf32>
    %cst_196 = arith.constant 1.000000e+00 : f32
    %464 = vector.broadcast %cst_196 : f32 to vector<2x64xf32>
    %465 = arith.addf %464, %463 : vector<2x64xf32>
    %466 = arith.divf %464, %465 : vector<2x64xf32>
    %467 = vector.extract_strided_slice %454 {offsets = [0, 128], sizes = [2, 64], strides = [1, 1]} : vector<2x256xf32> to vector<2x64xf32>
    %468 = math.tanh %467 : vector<2x64xf32>
    %469 = vector.extract_strided_slice %454 {offsets = [0, 192], sizes = [2, 64], strides = [1, 1]} : vector<2x256xf32> to vector<2x64xf32>
    %470 = arith.negf %469 : vector<2x64xf32>
    %471 = math.exp %470 : vector<2x64xf32>
    %cst_197 = arith.constant 1.000000e+00 : f32
    %472 = vector.broadcast %cst_197 : f32 to vector<2x64xf32>
    %473 = arith.addf %472, %471 : vector<2x64xf32>
    %474 = arith.divf %472, %473 : vector<2x64xf32>
    %475 = arith.mulf %466, %435 : vector<2x64xf32>
    %476 = arith.mulf %460, %468 : vector<2x64xf32>
    %477 = arith.addf %475, %476 : vector<2x64xf32>
    %478 = math.tanh %477 : vector<2x64xf32>
    %479 = arith.mulf %474, %478 : vector<2x64xf32>
    %480 = vector.extract_strided_slice %479 {offsets = [0, 0], sizes = [2, 32], strides = [1, 1]} : vector<2x64xf32> to vector<2x32xf32>
    %481 = arith.index_cast %c1_i32_191 : i32 to index
    %c0_198 = arith.constant 0 : index
    %c64_199 = arith.constant 64 : index
    %482 = vector.load %arg24[%481, %c0_198, %c64_199] : memref<8x2x128xf32, #tpu.memory_space<vmem>>, vector<1x2x32xf32>
    %483 = vector.shape_cast %482 : vector<1x2x32xf32> to vector<2x32xf32>
    %484 = vector.shape_cast %480 : vector<2x32xf32> to vector<1x2x32xf32>
    tpu.vector_store %arg24[%481, %c0_198, %c64_199], %484 {strides = array<i32>} : memref<8x2x128xf32, #tpu.memory_space<vmem>>, vector<1x2x32xf32>,
    %485 = vector.extract_strided_slice %479 {offsets = [0, 32], sizes = [2, 32], strides = [1, 1]} : vector<2x64xf32> to vector<2x32xf32>
    %c7_i32_200 = arith.constant 7 : i32
    %486 = arith.subi %c7_i32_200, %c1_i32_191 : i32
    %487 = arith.index_cast %486 : i32 to index
    %c0_201 = arith.constant 0 : index
    %c96_202 = arith.constant 96 : index
    %488 = vector.load %arg24[%487, %c0_201, %c96_202] : memref<8x2x128xf32, #tpu.memory_space<vmem>>, vector<1x2x32xf32>
    %489 = vector.shape_cast %488 : vector<1x2x32xf32> to vector<2x32xf32>
    %490 = vector.shape_cast %485 : vector<2x32xf32> to vector<1x2x32xf32>
    tpu.vector_store %arg24[%487, %c0_201, %c96_202], %490 {strides = array<i32>} : memref<8x2x128xf32, #tpu.memory_space<vmem>>, vector<1x2x32xf32>,
    %c2_i32_203 = arith.constant 2 : i32
    %c2_i32_204 = arith.constant 2 : i32
    %491 = arith.muli %c2_i32_203, %c2_i32_204 : i32
    %492 = arith.index_cast %491 : i32 to index
    %c0_205 = arith.constant 0 : index
    %493 = vector.load %arg22[%492, %c0_205] : memref<16x256xf32, #tpu.memory_space<vmem>>, vector<2x256xf32>
    %494 = arith.truncf %479 : vector<2x64xf32> to vector<2x64xbf16>
    %cst_206 = arith.constant dense<0.000000e+00> : vector<2x256xf32>
    %495 = tpu.matmul %494, %404, %cst_206 {dimension_numbers = #tpu.dot_dimension_numbers<[1], [0], [0], [1], [0, 0, 1, 1], [], []>} : vector<2x64xbf16>, vector<64x256xbf16>, vector<2x256xf32> -> vector<2x256xf32>
    %496 = arith.addf %493, %495 : vector<2x256xf32>
    %497 = vector.extract_strided_slice %496 {offsets = [0, 0], sizes = [2, 64], strides = [1, 1]} : vector<2x256xf32> to vector<2x64xf32>
    %498 = arith.negf %497 : vector<2x64xf32>
    %499 = math.exp %498 : vector<2x64xf32>
    %cst_207 = arith.constant 1.000000e+00 : f32
    %500 = vector.broadcast %cst_207 : f32 to vector<2x64xf32>
    %501 = arith.addf %500, %499 : vector<2x64xf32>
    %502 = arith.divf %500, %501 : vector<2x64xf32>
    %503 = vector.extract_strided_slice %496 {offsets = [0, 64], sizes = [2, 64], strides = [1, 1]} : vector<2x256xf32> to vector<2x64xf32>
    %504 = arith.negf %503 : vector<2x64xf32>
    %505 = math.exp %504 : vector<2x64xf32>
    %cst_208 = arith.constant 1.000000e+00 : f32
    %506 = vector.broadcast %cst_208 : f32 to vector<2x64xf32>
    %507 = arith.addf %506, %505 : vector<2x64xf32>
    %508 = arith.divf %506, %507 : vector<2x64xf32>
    %509 = vector.extract_strided_slice %496 {offsets = [0, 128], sizes = [2, 64], strides = [1, 1]} : vector<2x256xf32> to vector<2x64xf32>
    %510 = math.tanh %509 : vector<2x64xf32>
    %511 = vector.extract_strided_slice %496 {offsets = [0, 192], sizes = [2, 64], strides = [1, 1]} : vector<2x256xf32> to vector<2x64xf32>
    %512 = arith.negf %511 : vector<2x64xf32>
    %513 = math.exp %512 : vector<2x64xf32>
    %cst_209 = arith.constant 1.000000e+00 : f32
    %514 = vector.broadcast %cst_209 : f32 to vector<2x64xf32>
    %515 = arith.addf %514, %513 : vector<2x64xf32>
    %516 = arith.divf %514, %515 : vector<2x64xf32>
    %517 = arith.mulf %508, %477 : vector<2x64xf32>
    %518 = arith.mulf %502, %510 : vector<2x64xf32>
    %519 = arith.addf %517, %518 : vector<2x64xf32>
    %520 = math.tanh %519 : vector<2x64xf32>
    %521 = arith.mulf %516, %520 : vector<2x64xf32>
    %522 = vector.extract_strided_slice %521 {offsets = [0, 0], sizes = [2, 32], strides = [1, 1]} : vector<2x64xf32> to vector<2x32xf32>
    %523 = arith.index_cast %c2_i32_203 : i32 to index
    %c0_210 = arith.constant 0 : index
    %c64_211 = arith.constant 64 : index
    %524 = vector.load %arg24[%523, %c0_210, %c64_211] : memref<8x2x128xf32, #tpu.memory_space<vmem>>, vector<1x2x32xf32>
    %525 = vector.shape_cast %524 : vector<1x2x32xf32> to vector<2x32xf32>
    %526 = vector.shape_cast %522 : vector<2x32xf32> to vector<1x2x32xf32>
    tpu.vector_store %arg24[%523, %c0_210, %c64_211], %526 {strides = array<i32>} : memref<8x2x128xf32, #tpu.memory_space<vmem>>, vector<1x2x32xf32>,
    %527 = vector.extract_strided_slice %521 {offsets = [0, 32], sizes = [2, 32], strides = [1, 1]} : vector<2x64xf32> to vector<2x32xf32>
    %c7_i32_212 = arith.constant 7 : i32
    %528 = arith.subi %c7_i32_212, %c2_i32_203 : i32
    %529 = arith.index_cast %528 : i32 to index
    %c0_213 = arith.constant 0 : index
    %c96_214 = arith.constant 96 : index
    %530 = vector.load %arg24[%529, %c0_213, %c96_214] : memref<8x2x128xf32, #tpu.memory_space<vmem>>, vector<1x2x32xf32>
    %531 = vector.shape_cast %530 : vector<1x2x32xf32> to vector<2x32xf32>
    %532 = vector.shape_cast %527 : vector<2x32xf32> to vector<1x2x32xf32>
    tpu.vector_store %arg24[%529, %c0_213, %c96_214], %532 {strides = array<i32>} : memref<8x2x128xf32, #tpu.memory_space<vmem>>, vector<1x2x32xf32>,
    %c3_i32_215 = arith.constant 3 : i32
    %c2_i32_216 = arith.constant 2 : i32
    %533 = arith.muli %c3_i32_215, %c2_i32_216 : i32
    %534 = arith.index_cast %533 : i32 to index
    %c0_217 = arith.constant 0 : index
    %535 = vector.load %arg22[%534, %c0_217] : memref<16x256xf32, #tpu.memory_space<vmem>>, vector<2x256xf32>
    %536 = arith.truncf %521 : vector<2x64xf32> to vector<2x64xbf16>
    %cst_218 = arith.constant dense<0.000000e+00> : vector<2x256xf32>
    %537 = tpu.matmul %536, %404, %cst_218 {dimension_numbers = #tpu.dot_dimension_numbers<[1], [0], [0], [1], [0, 0, 1, 1], [], []>} : vector<2x64xbf16>, vector<64x256xbf16>, vector<2x256xf32> -> vector<2x256xf32>
    %538 = arith.addf %535, %537 : vector<2x256xf32>
    %539 = vector.extract_strided_slice %538 {offsets = [0, 0], sizes = [2, 64], strides = [1, 1]} : vector<2x256xf32> to vector<2x64xf32>
    %540 = arith.negf %539 : vector<2x64xf32>
    %541 = math.exp %540 : vector<2x64xf32>
    %cst_219 = arith.constant 1.000000e+00 : f32
    %542 = vector.broadcast %cst_219 : f32 to vector<2x64xf32>
    %543 = arith.addf %542, %541 : vector<2x64xf32>
    %544 = arith.divf %542, %543 : vector<2x64xf32>
    %545 = vector.extract_strided_slice %538 {offsets = [0, 64], sizes = [2, 64], strides = [1, 1]} : vector<2x256xf32> to vector<2x64xf32>
    %546 = arith.negf %545 : vector<2x64xf32>
    %547 = math.exp %546 : vector<2x64xf32>
    %cst_220 = arith.constant 1.000000e+00 : f32
    %548 = vector.broadcast %cst_220 : f32 to vector<2x64xf32>
    %549 = arith.addf %548, %547 : vector<2x64xf32>
    %550 = arith.divf %548, %549 : vector<2x64xf32>
    %551 = vector.extract_strided_slice %538 {offsets = [0, 128], sizes = [2, 64], strides = [1, 1]} : vector<2x256xf32> to vector<2x64xf32>
    %552 = math.tanh %551 : vector<2x64xf32>
    %553 = vector.extract_strided_slice %538 {offsets = [0, 192], sizes = [2, 64], strides = [1, 1]} : vector<2x256xf32> to vector<2x64xf32>
    %554 = arith.negf %553 : vector<2x64xf32>
    %555 = math.exp %554 : vector<2x64xf32>
    %cst_221 = arith.constant 1.000000e+00 : f32
    %556 = vector.broadcast %cst_221 : f32 to vector<2x64xf32>
    %557 = arith.addf %556, %555 : vector<2x64xf32>
    %558 = arith.divf %556, %557 : vector<2x64xf32>
    %559 = arith.mulf %550, %519 : vector<2x64xf32>
    %560 = arith.mulf %544, %552 : vector<2x64xf32>
    %561 = arith.addf %559, %560 : vector<2x64xf32>
    %562 = math.tanh %561 : vector<2x64xf32>
    %563 = arith.mulf %558, %562 : vector<2x64xf32>
    %564 = vector.extract_strided_slice %563 {offsets = [0, 0], sizes = [2, 32], strides = [1, 1]} : vector<2x64xf32> to vector<2x32xf32>
    %565 = arith.index_cast %c3_i32_215 : i32 to index
    %c0_222 = arith.constant 0 : index
    %c64_223 = arith.constant 64 : index
    %566 = vector.load %arg24[%565, %c0_222, %c64_223] : memref<8x2x128xf32, #tpu.memory_space<vmem>>, vector<1x2x32xf32>
    %567 = vector.shape_cast %566 : vector<1x2x32xf32> to vector<2x32xf32>
    %568 = vector.shape_cast %564 : vector<2x32xf32> to vector<1x2x32xf32>
    tpu.vector_store %arg24[%565, %c0_222, %c64_223], %568 {strides = array<i32>} : memref<8x2x128xf32, #tpu.memory_space<vmem>>, vector<1x2x32xf32>,
    %569 = vector.extract_strided_slice %563 {offsets = [0, 32], sizes = [2, 32], strides = [1, 1]} : vector<2x64xf32> to vector<2x32xf32>
    %c7_i32_224 = arith.constant 7 : i32
    %570 = arith.subi %c7_i32_224, %c3_i32_215 : i32
    %571 = arith.index_cast %570 : i32 to index
    %c0_225 = arith.constant 0 : index
    %c96_226 = arith.constant 96 : index
    %572 = vector.load %arg24[%571, %c0_225, %c96_226] : memref<8x2x128xf32, #tpu.memory_space<vmem>>, vector<1x2x32xf32>
    %573 = vector.shape_cast %572 : vector<1x2x32xf32> to vector<2x32xf32>
    %574 = vector.shape_cast %569 : vector<2x32xf32> to vector<1x2x32xf32>
    tpu.vector_store %arg24[%571, %c0_225, %c96_226], %574 {strides = array<i32>} : memref<8x2x128xf32, #tpu.memory_space<vmem>>, vector<1x2x32xf32>,
    %c4_i32_227 = arith.constant 4 : i32
    %c2_i32_228 = arith.constant 2 : i32
    %575 = arith.muli %c4_i32_227, %c2_i32_228 : i32
    %576 = arith.index_cast %575 : i32 to index
    %c0_229 = arith.constant 0 : index
    %577 = vector.load %arg22[%576, %c0_229] : memref<16x256xf32, #tpu.memory_space<vmem>>, vector<2x256xf32>
    %578 = arith.truncf %563 : vector<2x64xf32> to vector<2x64xbf16>
    %cst_230 = arith.constant dense<0.000000e+00> : vector<2x256xf32>
    %579 = tpu.matmul %578, %404, %cst_230 {dimension_numbers = #tpu.dot_dimension_numbers<[1], [0], [0], [1], [0, 0, 1, 1], [], []>} : vector<2x64xbf16>, vector<64x256xbf16>, vector<2x256xf32> -> vector<2x256xf32>
    %580 = arith.addf %577, %579 : vector<2x256xf32>
    %581 = vector.extract_strided_slice %580 {offsets = [0, 0], sizes = [2, 64], strides = [1, 1]} : vector<2x256xf32> to vector<2x64xf32>
    %582 = arith.negf %581 : vector<2x64xf32>
    %583 = math.exp %582 : vector<2x64xf32>
    %cst_231 = arith.constant 1.000000e+00 : f32
    %584 = vector.broadcast %cst_231 : f32 to vector<2x64xf32>
    %585 = arith.addf %584, %583 : vector<2x64xf32>
    %586 = arith.divf %584, %585 : vector<2x64xf32>
    %587 = vector.extract_strided_slice %580 {offsets = [0, 64], sizes = [2, 64], strides = [1, 1]} : vector<2x256xf32> to vector<2x64xf32>
    %588 = arith.negf %587 : vector<2x64xf32>
    %589 = math.exp %588 : vector<2x64xf32>
    %cst_232 = arith.constant 1.000000e+00 : f32
    %590 = vector.broadcast %cst_232 : f32 to vector<2x64xf32>
    %591 = arith.addf %590, %589 : vector<2x64xf32>
    %592 = arith.divf %590, %591 : vector<2x64xf32>
    %593 = vector.extract_strided_slice %580 {offsets = [0, 128], sizes = [2, 64], strides = [1, 1]} : vector<2x256xf32> to vector<2x64xf32>
    %594 = math.tanh %593 : vector<2x64xf32>
    %595 = vector.extract_strided_slice %580 {offsets = [0, 192], sizes = [2, 64], strides = [1, 1]} : vector<2x256xf32> to vector<2x64xf32>
    %596 = arith.negf %595 : vector<2x64xf32>
    %597 = math.exp %596 : vector<2x64xf32>
    %cst_233 = arith.constant 1.000000e+00 : f32
    %598 = vector.broadcast %cst_233 : f32 to vector<2x64xf32>
    %599 = arith.addf %598, %597 : vector<2x64xf32>
    %600 = arith.divf %598, %599 : vector<2x64xf32>
    %601 = arith.mulf %592, %561 : vector<2x64xf32>
    %602 = arith.mulf %586, %594 : vector<2x64xf32>
    %603 = arith.addf %601, %602 : vector<2x64xf32>
    %604 = math.tanh %603 : vector<2x64xf32>
    %605 = arith.mulf %600, %604 : vector<2x64xf32>
    %606 = vector.extract_strided_slice %605 {offsets = [0, 0], sizes = [2, 32], strides = [1, 1]} : vector<2x64xf32> to vector<2x32xf32>
    %607 = arith.index_cast %c4_i32_227 : i32 to index
    %c0_234 = arith.constant 0 : index
    %c64_235 = arith.constant 64 : index
    %608 = vector.load %arg24[%607, %c0_234, %c64_235] : memref<8x2x128xf32, #tpu.memory_space<vmem>>, vector<1x2x32xf32>
    %609 = vector.shape_cast %608 : vector<1x2x32xf32> to vector<2x32xf32>
    %610 = vector.shape_cast %606 : vector<2x32xf32> to vector<1x2x32xf32>
    tpu.vector_store %arg24[%607, %c0_234, %c64_235], %610 {strides = array<i32>} : memref<8x2x128xf32, #tpu.memory_space<vmem>>, vector<1x2x32xf32>,
    %611 = vector.extract_strided_slice %605 {offsets = [0, 32], sizes = [2, 32], strides = [1, 1]} : vector<2x64xf32> to vector<2x32xf32>
    %c7_i32_236 = arith.constant 7 : i32
    %612 = arith.subi %c7_i32_236, %c4_i32_227 : i32
    %613 = arith.index_cast %612 : i32 to index
    %c0_237 = arith.constant 0 : index
    %c96_238 = arith.constant 96 : index
    %614 = vector.load %arg24[%613, %c0_237, %c96_238] : memref<8x2x128xf32, #tpu.memory_space<vmem>>, vector<1x2x32xf32>
    %615 = vector.shape_cast %614 : vector<1x2x32xf32> to vector<2x32xf32>
    %616 = vector.shape_cast %611 : vector<2x32xf32> to vector<1x2x32xf32>
    tpu.vector_store %arg24[%613, %c0_237, %c96_238], %616 {strides = array<i32>} : memref<8x2x128xf32, #tpu.memory_space<vmem>>, vector<1x2x32xf32>,
    %c5_i32_239 = arith.constant 5 : i32
    %c2_i32_240 = arith.constant 2 : i32
    %617 = arith.muli %c5_i32_239, %c2_i32_240 : i32
    %618 = arith.index_cast %617 : i32 to index
    %c0_241 = arith.constant 0 : index
    %619 = vector.load %arg22[%618, %c0_241] : memref<16x256xf32, #tpu.memory_space<vmem>>, vector<2x256xf32>
    %620 = arith.truncf %605 : vector<2x64xf32> to vector<2x64xbf16>
    %cst_242 = arith.constant dense<0.000000e+00> : vector<2x256xf32>
    %621 = tpu.matmul %620, %404, %cst_242 {dimension_numbers = #tpu.dot_dimension_numbers<[1], [0], [0], [1], [0, 0, 1, 1], [], []>} : vector<2x64xbf16>, vector<64x256xbf16>, vector<2x256xf32> -> vector<2x256xf32>
    %622 = arith.addf %619, %621 : vector<2x256xf32>
    %623 = vector.extract_strided_slice %622 {offsets = [0, 0], sizes = [2, 64], strides = [1, 1]} : vector<2x256xf32> to vector<2x64xf32>
    %624 = arith.negf %623 : vector<2x64xf32>
    %625 = math.exp %624 : vector<2x64xf32>
    %cst_243 = arith.constant 1.000000e+00 : f32
    %626 = vector.broadcast %cst_243 : f32 to vector<2x64xf32>
    %627 = arith.addf %626, %625 : vector<2x64xf32>
    %628 = arith.divf %626, %627 : vector<2x64xf32>
    %629 = vector.extract_strided_slice %622 {offsets = [0, 64], sizes = [2, 64], strides = [1, 1]} : vector<2x256xf32> to vector<2x64xf32>
    %630 = arith.negf %629 : vector<2x64xf32>
    %631 = math.exp %630 : vector<2x64xf32>
    %cst_244 = arith.constant 1.000000e+00 : f32
    %632 = vector.broadcast %cst_244 : f32 to vector<2x64xf32>
    %633 = arith.addf %632, %631 : vector<2x64xf32>
    %634 = arith.divf %632, %633 : vector<2x64xf32>
    %635 = vector.extract_strided_slice %622 {offsets = [0, 128], sizes = [2, 64], strides = [1, 1]} : vector<2x256xf32> to vector<2x64xf32>
    %636 = math.tanh %635 : vector<2x64xf32>
    %637 = vector.extract_strided_slice %622 {offsets = [0, 192], sizes = [2, 64], strides = [1, 1]} : vector<2x256xf32> to vector<2x64xf32>
    %638 = arith.negf %637 : vector<2x64xf32>
    %639 = math.exp %638 : vector<2x64xf32>
    %cst_245 = arith.constant 1.000000e+00 : f32
    %640 = vector.broadcast %cst_245 : f32 to vector<2x64xf32>
    %641 = arith.addf %640, %639 : vector<2x64xf32>
    %642 = arith.divf %640, %641 : vector<2x64xf32>
    %643 = arith.mulf %634, %603 : vector<2x64xf32>
    %644 = arith.mulf %628, %636 : vector<2x64xf32>
    %645 = arith.addf %643, %644 : vector<2x64xf32>
    %646 = math.tanh %645 : vector<2x64xf32>
    %647 = arith.mulf %642, %646 : vector<2x64xf32>
    %648 = vector.extract_strided_slice %647 {offsets = [0, 0], sizes = [2, 32], strides = [1, 1]} : vector<2x64xf32> to vector<2x32xf32>
    %649 = arith.index_cast %c5_i32_239 : i32 to index
    %c0_246 = arith.constant 0 : index
    %c64_247 = arith.constant 64 : index
    %650 = vector.load %arg24[%649, %c0_246, %c64_247] : memref<8x2x128xf32, #tpu.memory_space<vmem>>, vector<1x2x32xf32>
    %651 = vector.shape_cast %650 : vector<1x2x32xf32> to vector<2x32xf32>
    %652 = vector.shape_cast %648 : vector<2x32xf32> to vector<1x2x32xf32>
    tpu.vector_store %arg24[%649, %c0_246, %c64_247], %652 {strides = array<i32>} : memref<8x2x128xf32, #tpu.memory_space<vmem>>, vector<1x2x32xf32>,
    %653 = vector.extract_strided_slice %647 {offsets = [0, 32], sizes = [2, 32], strides = [1, 1]} : vector<2x64xf32> to vector<2x32xf32>
    %c7_i32_248 = arith.constant 7 : i32
    %654 = arith.subi %c7_i32_248, %c5_i32_239 : i32
    %655 = arith.index_cast %654 : i32 to index
    %c0_249 = arith.constant 0 : index
    %c96_250 = arith.constant 96 : index
    %656 = vector.load %arg24[%655, %c0_249, %c96_250] : memref<8x2x128xf32, #tpu.memory_space<vmem>>, vector<1x2x32xf32>
    %657 = vector.shape_cast %656 : vector<1x2x32xf32> to vector<2x32xf32>
    %658 = vector.shape_cast %653 : vector<2x32xf32> to vector<1x2x32xf32>
    tpu.vector_store %arg24[%655, %c0_249, %c96_250], %658 {strides = array<i32>} : memref<8x2x128xf32, #tpu.memory_space<vmem>>, vector<1x2x32xf32>,
    %c6_i32_251 = arith.constant 6 : i32
    %c2_i32_252 = arith.constant 2 : i32
    %659 = arith.muli %c6_i32_251, %c2_i32_252 : i32
    %660 = arith.index_cast %659 : i32 to index
    %c0_253 = arith.constant 0 : index
    %661 = vector.load %arg22[%660, %c0_253] : memref<16x256xf32, #tpu.memory_space<vmem>>, vector<2x256xf32>
    %662 = arith.truncf %647 : vector<2x64xf32> to vector<2x64xbf16>
    %cst_254 = arith.constant dense<0.000000e+00> : vector<2x256xf32>
    %663 = tpu.matmul %662, %404, %cst_254 {dimension_numbers = #tpu.dot_dimension_numbers<[1], [0], [0], [1], [0, 0, 1, 1], [], []>} : vector<2x64xbf16>, vector<64x256xbf16>, vector<2x256xf32> -> vector<2x256xf32>
    %664 = arith.addf %661, %663 : vector<2x256xf32>
    %665 = vector.extract_strided_slice %664 {offsets = [0, 0], sizes = [2, 64], strides = [1, 1]} : vector<2x256xf32> to vector<2x64xf32>
    %666 = arith.negf %665 : vector<2x64xf32>
    %667 = math.exp %666 : vector<2x64xf32>
    %cst_255 = arith.constant 1.000000e+00 : f32
    %668 = vector.broadcast %cst_255 : f32 to vector<2x64xf32>
    %669 = arith.addf %668, %667 : vector<2x64xf32>
    %670 = arith.divf %668, %669 : vector<2x64xf32>
    %671 = vector.extract_strided_slice %664 {offsets = [0, 64], sizes = [2, 64], strides = [1, 1]} : vector<2x256xf32> to vector<2x64xf32>
    %672 = arith.negf %671 : vector<2x64xf32>
    %673 = math.exp %672 : vector<2x64xf32>
    %cst_256 = arith.constant 1.000000e+00 : f32
    %674 = vector.broadcast %cst_256 : f32 to vector<2x64xf32>
    %675 = arith.addf %674, %673 : vector<2x64xf32>
    %676 = arith.divf %674, %675 : vector<2x64xf32>
    %677 = vector.extract_strided_slice %664 {offsets = [0, 128], sizes = [2, 64], strides = [1, 1]} : vector<2x256xf32> to vector<2x64xf32>
    %678 = math.tanh %677 : vector<2x64xf32>
    %679 = vector.extract_strided_slice %664 {offsets = [0, 192], sizes = [2, 64], strides = [1, 1]} : vector<2x256xf32> to vector<2x64xf32>
    %680 = arith.negf %679 : vector<2x64xf32>
    %681 = math.exp %680 : vector<2x64xf32>
    %cst_257 = arith.constant 1.000000e+00 : f32
    %682 = vector.broadcast %cst_257 : f32 to vector<2x64xf32>
    %683 = arith.addf %682, %681 : vector<2x64xf32>
    %684 = arith.divf %682, %683 : vector<2x64xf32>
    %685 = arith.mulf %676, %645 : vector<2x64xf32>
    %686 = arith.mulf %670, %678 : vector<2x64xf32>
    %687 = arith.addf %685, %686 : vector<2x64xf32>
    %688 = math.tanh %687 : vector<2x64xf32>
    %689 = arith.mulf %684, %688 : vector<2x64xf32>
    %690 = vector.extract_strided_slice %689 {offsets = [0, 0], sizes = [2, 32], strides = [1, 1]} : vector<2x64xf32> to vector<2x32xf32>
    %691 = arith.index_cast %c6_i32_251 : i32 to index
    %c0_258 = arith.constant 0 : index
    %c64_259 = arith.constant 64 : index
    %692 = vector.load %arg24[%691, %c0_258, %c64_259] : memref<8x2x128xf32, #tpu.memory_space<vmem>>, vector<1x2x32xf32>
    %693 = vector.shape_cast %692 : vector<1x2x32xf32> to vector<2x32xf32>
    %694 = vector.shape_cast %690 : vector<2x32xf32> to vector<1x2x32xf32>
    tpu.vector_store %arg24[%691, %c0_258, %c64_259], %694 {strides = array<i32>} : memref<8x2x128xf32, #tpu.memory_space<vmem>>, vector<1x2x32xf32>,
    %695 = vector.extract_strided_slice %689 {offsets = [0, 32], sizes = [2, 32], strides = [1, 1]} : vector<2x64xf32> to vector<2x32xf32>
    %c7_i32_260 = arith.constant 7 : i32
    %696 = arith.subi %c7_i32_260, %c6_i32_251 : i32
    %697 = arith.index_cast %696 : i32 to index
    %c0_261 = arith.constant 0 : index
    %c96_262 = arith.constant 96 : index
    %698 = vector.load %arg24[%697, %c0_261, %c96_262] : memref<8x2x128xf32, #tpu.memory_space<vmem>>, vector<1x2x32xf32>
    %699 = vector.shape_cast %698 : vector<1x2x32xf32> to vector<2x32xf32>
    %700 = vector.shape_cast %695 : vector<2x32xf32> to vector<1x2x32xf32>
    tpu.vector_store %arg24[%697, %c0_261, %c96_262], %700 {strides = array<i32>} : memref<8x2x128xf32, #tpu.memory_space<vmem>>, vector<1x2x32xf32>,
    %c7_i32_263 = arith.constant 7 : i32
    %c2_i32_264 = arith.constant 2 : i32
    %701 = arith.muli %c7_i32_263, %c2_i32_264 : i32
    %702 = arith.index_cast %701 : i32 to index
    %c0_265 = arith.constant 0 : index
    %703 = vector.load %arg22[%702, %c0_265] : memref<16x256xf32, #tpu.memory_space<vmem>>, vector<2x256xf32>
    %704 = arith.truncf %689 : vector<2x64xf32> to vector<2x64xbf16>
    %cst_266 = arith.constant dense<0.000000e+00> : vector<2x256xf32>
    %705 = tpu.matmul %704, %404, %cst_266 {dimension_numbers = #tpu.dot_dimension_numbers<[1], [0], [0], [1], [0, 0, 1, 1], [], []>} : vector<2x64xbf16>, vector<64x256xbf16>, vector<2x256xf32> -> vector<2x256xf32>
    %706 = arith.addf %703, %705 : vector<2x256xf32>
    %707 = vector.extract_strided_slice %706 {offsets = [0, 0], sizes = [2, 64], strides = [1, 1]} : vector<2x256xf32> to vector<2x64xf32>
    %708 = arith.negf %707 : vector<2x64xf32>
    %709 = math.exp %708 : vector<2x64xf32>
    %cst_267 = arith.constant 1.000000e+00 : f32
    %710 = vector.broadcast %cst_267 : f32 to vector<2x64xf32>
    %711 = arith.addf %710, %709 : vector<2x64xf32>
    %712 = arith.divf %710, %711 : vector<2x64xf32>
    %713 = vector.extract_strided_slice %706 {offsets = [0, 64], sizes = [2, 64], strides = [1, 1]} : vector<2x256xf32> to vector<2x64xf32>
    %714 = arith.negf %713 : vector<2x64xf32>
    %715 = math.exp %714 : vector<2x64xf32>
    %cst_268 = arith.constant 1.000000e+00 : f32
    %716 = vector.broadcast %cst_268 : f32 to vector<2x64xf32>
    %717 = arith.addf %716, %715 : vector<2x64xf32>
    %718 = arith.divf %716, %717 : vector<2x64xf32>
    %719 = vector.extract_strided_slice %706 {offsets = [0, 128], sizes = [2, 64], strides = [1, 1]} : vector<2x256xf32> to vector<2x64xf32>
    %720 = math.tanh %719 : vector<2x64xf32>
    %721 = vector.extract_strided_slice %706 {offsets = [0, 192], sizes = [2, 64], strides = [1, 1]} : vector<2x256xf32> to vector<2x64xf32>
    %722 = arith.negf %721 : vector<2x64xf32>
    %723 = math.exp %722 : vector<2x64xf32>
    %cst_269 = arith.constant 1.000000e+00 : f32
    %724 = vector.broadcast %cst_269 : f32 to vector<2x64xf32>
    %725 = arith.addf %724, %723 : vector<2x64xf32>
    %726 = arith.divf %724, %725 : vector<2x64xf32>
    %727 = arith.mulf %718, %687 : vector<2x64xf32>
    %728 = arith.mulf %712, %720 : vector<2x64xf32>
    %729 = arith.addf %727, %728 : vector<2x64xf32>
    %730 = math.tanh %729 : vector<2x64xf32>
    %731 = arith.mulf %726, %730 : vector<2x64xf32>
    %732 = vector.extract_strided_slice %731 {offsets = [0, 0], sizes = [2, 32], strides = [1, 1]} : vector<2x64xf32> to vector<2x32xf32>
    %733 = arith.index_cast %c7_i32_263 : i32 to index
    %c0_270 = arith.constant 0 : index
    %c64_271 = arith.constant 64 : index
    %734 = vector.load %arg24[%733, %c0_270, %c64_271] : memref<8x2x128xf32, #tpu.memory_space<vmem>>, vector<1x2x32xf32>
    %735 = vector.shape_cast %734 : vector<1x2x32xf32> to vector<2x32xf32>
    %736 = vector.shape_cast %732 : vector<2x32xf32> to vector<1x2x32xf32>
    tpu.vector_store %arg24[%733, %c0_270, %c64_271], %736 {strides = array<i32>} : memref<8x2x128xf32, #tpu.memory_space<vmem>>, vector<1x2x32xf32>,
    %737 = vector.extract_strided_slice %731 {offsets = [0, 32], sizes = [2, 32], strides = [1, 1]} : vector<2x64xf32> to vector<2x32xf32>
    %c7_i32_272 = arith.constant 7 : i32
    %738 = arith.subi %c7_i32_272, %c7_i32_263 : i32
    %739 = arith.index_cast %738 : i32 to index
    %c0_273 = arith.constant 0 : index
    %c96_274 = arith.constant 96 : index
    %740 = vector.load %arg24[%739, %c0_273, %c96_274] : memref<8x2x128xf32, #tpu.memory_space<vmem>>, vector<1x2x32xf32>
    %741 = vector.shape_cast %740 : vector<1x2x32xf32> to vector<2x32xf32>
    %742 = vector.shape_cast %737 : vector<2x32xf32> to vector<1x2x32xf32>
    tpu.vector_store %arg24[%739, %c0_273, %c96_274], %742 {strides = array<i32>} : memref<8x2x128xf32, #tpu.memory_space<vmem>>, vector<1x2x32xf32>,
    %c8_i32_275 = arith.constant 8 : i32
    %c0_276 = arith.constant 0 : index
    %c0_277 = arith.constant 0 : index
    %c0_278 = arith.constant 0 : index
    %743 = vector.load %arg24[%c0_276, %c0_277, %c0_278] : memref<8x2x128xf32, #tpu.memory_space<vmem>>, vector<8x2x128xf32>
    %744 = vector.shape_cast %743 : vector<8x2x128xf32> to vector<16x128xf32>
    %745 = arith.truncf %744 : vector<16x128xf32> to vector<16x128xbf16>
    %c0_279 = arith.constant 0 : index
    %c0_280 = arith.constant 0 : index
    %746 = vector.load %arg9[%c0_279, %c0_280] : memref<128x32xbf16, #tpu.memory_space<vmem>>, vector<128x32xbf16>
    %cst_281 = arith.constant dense<0.000000e+00> : vector<16x32xf32>
    %747 = tpu.matmul %745, %746, %cst_281 {dimension_numbers = #tpu.dot_dimension_numbers<[1], [0], [0], [1], [0, 0, 1, 1], [], []>} : vector<16x128xbf16>, vector<128x32xbf16>, vector<16x32xf32> -> vector<16x32xf32>
    %c0_282 = arith.constant 0 : index
    %c0_283 = arith.constant 0 : index
    %748 = vector.load %arg10[%c0_282, %c0_283] : memref<1x32xf32, #tpu.memory_space<vmem>>, vector<1x32xf32>
    %749 = vector.broadcast %748 : vector<1x32xf32> to vector<16x32xf32>
    %750 = arith.addf %747, %749 : vector<16x32xf32>
    %751 = math.tanh %750 : vector<16x32xf32>
    %752 = arith.truncf %751 : vector<16x32xf32> to vector<16x32xbf16>
    %c0_284 = arith.constant 0 : index
    %c0_285 = arith.constant 0 : index
    %753 = vector.load %arg11[%c0_284, %c0_285] : memref<32x1xbf16, #tpu.memory_space<vmem>>, vector<32x1xbf16>
    %cst_286 = arith.constant dense<0.000000e+00> : vector<16x1xf32>
    %754 = tpu.matmul %752, %753, %cst_286 {dimension_numbers = #tpu.dot_dimension_numbers<[1], [0], [0], [1], [0, 0, 1, 1], [], []>} : vector<16x32xbf16>, vector<32x1xbf16>, vector<16x1xf32> -> vector<16x1xf32>
    %c0_287 = arith.constant 0 : index
    %c0_288 = arith.constant 0 : index
    %755 = vector.load %arg12[%c0_287, %c0_288] : memref<1x1xf32, #tpu.memory_space<vmem>>, vector<1x1xf32>
    %756 = vector.broadcast %755 : vector<1x1xf32> to vector<16x1xf32>
    %757 = arith.addf %754, %756 : vector<16x1xf32>
    %758 = vector.shape_cast %757 : vector<16x1xf32> to vector<8x2x1xf32>
    %c0_289 = arith.constant 0 : index
    %c0_290 = arith.constant 0 : index
    %c0_291 = arith.constant 0 : index
    %759 = vector.load %arg2[%c0_289, %c0_290, %c0_291] : memref<8x2x1xf32, #tpu.memory_space<vmem>>, vector<8x2x1xf32>
    %cst_292 = arith.constant -1.000000e+30 : f32
    %760 = vector.broadcast %cst_292 : f32 to vector<8x2x1xf32>
    %761 = arith.mulf %759, %760 : vector<8x2x1xf32>
    %762 = arith.addf %758, %761 : vector<8x2x1xf32>
    %cst_293 = arith.constant dense<0xFF800000> : vector<2x1xf32>
    %763 = vector.multi_reduction <maximumf>, %762, %cst_293 [0] : vector<8x2x1xf32> to vector<2x1xf32>
    %cst_294 = arith.constant 0xFF800000 : f32
    %764 = vector.broadcast %cst_294 : f32 to vector<2x1xf32>
    %765 = arith.maximumf %764, %763 : vector<2x1xf32>
    %766 = vector.shape_cast %765 : vector<2x1xf32> to vector<1x2x1xf32>
    %767 = vector.broadcast %766 : vector<1x2x1xf32> to vector<8x2x1xf32>
    %768 = arith.subf %762, %767 : vector<8x2x1xf32>
    %769 = math.exp %768 : vector<8x2x1xf32>
    %cst_295 = arith.constant dense<0.000000e+00> : vector<2x1xf32>
    %770 = vector.multi_reduction <add>, %769, %cst_295 [0] : vector<8x2x1xf32> to vector<2x1xf32>
    %771 = vector.shape_cast %770 : vector<2x1xf32> to vector<1x2x1xf32>
    %772 = vector.broadcast %771 : vector<1x2x1xf32> to vector<8x2x1xf32>
    %773 = arith.divf %769, %772 : vector<8x2x1xf32>
    %774 = vector.broadcast %773 : vector<8x2x1xf32> to vector<8x2x128xf32>
    %775 = arith.mulf %774, %743 : vector<8x2x128xf32>
    %cst_296 = arith.constant dense<0.000000e+00> : vector<2x128xf32>
    %776 = vector.multi_reduction <add>, %775, %cst_296 [0] : vector<8x2x128xf32> to vector<2x128xf32>
    %777 = arith.truncf %776 : vector<2x128xf32> to vector<2x128xbf16>
    %c0_297 = arith.constant 0 : index
    %c0_298 = arith.constant 0 : index
    %778 = vector.load %arg13[%c0_297, %c0_298] : memref<128x32xbf16, #tpu.memory_space<vmem>>, vector<128x32xbf16>
    %cst_299 = arith.constant dense<0.000000e+00> : vector<2x32xf32>
    %779 = tpu.matmul %777, %778, %cst_299 {dimension_numbers = #tpu.dot_dimension_numbers<[1], [0], [0], [1], [0, 0, 1, 1], [], []>} : vector<2x128xbf16>, vector<128x32xbf16>, vector<2x32xf32> -> vector<2x32xf32>
    %c0_300 = arith.constant 0 : index
    %c0_301 = arith.constant 0 : index
    %780 = vector.load %arg14[%c0_300, %c0_301] : memref<1x32xf32, #tpu.memory_space<vmem>>, vector<1x32xf32>
    %781 = vector.broadcast %780 : vector<1x32xf32> to vector<2x32xf32>
    %782 = arith.addf %779, %781 : vector<2x32xf32>
    %cst_302 = arith.constant 0.000000e+00 : f32
    %783 = vector.broadcast %cst_302 : f32 to vector<2x32xf32>
    %784 = arith.maximumf %782, %783 : vector<2x32xf32>
    %785 = arith.truncf %784 : vector<2x32xf32> to vector<2x32xbf16>
    %c0_303 = arith.constant 0 : index
    %c0_304 = arith.constant 0 : index
    %786 = vector.load %arg15[%c0_303, %c0_304] : memref<32x16xbf16, #tpu.memory_space<vmem>>, vector<32x16xbf16>
    %cst_305 = arith.constant dense<0.000000e+00> : vector<2x16xf32>
    %787 = tpu.matmul %785, %786, %cst_305 {dimension_numbers = #tpu.dot_dimension_numbers<[1], [0], [0], [1], [0, 0, 1, 1], [], []>} : vector<2x32xbf16>, vector<32x16xbf16>, vector<2x16xf32> -> vector<2x16xf32>
    %c0_306 = arith.constant 0 : index
    %c0_307 = arith.constant 0 : index
    %788 = vector.load %arg16[%c0_306, %c0_307] : memref<1x16xf32, #tpu.memory_space<vmem>>, vector<1x16xf32>
    %789 = vector.broadcast %788 : vector<1x16xf32> to vector<2x16xf32>
    %790 = arith.addf %787, %789 : vector<2x16xf32>
    %cst_308 = arith.constant 0.000000e+00 : f32
    %791 = vector.broadcast %cst_308 : f32 to vector<2x16xf32>
    %792 = arith.maximumf %790, %791 : vector<2x16xf32>
    %793 = arith.truncf %792 : vector<2x16xf32> to vector<2x16xbf16>
    %c0_309 = arith.constant 0 : index
    %c0_310 = arith.constant 0 : index
    %794 = vector.load %arg17[%c0_309, %c0_310] : memref<16x8xbf16, #tpu.memory_space<vmem>>, vector<16x8xbf16>
    %cst_311 = arith.constant dense<0.000000e+00> : vector<2x8xf32>
    %795 = tpu.matmul %793, %794, %cst_311 {dimension_numbers = #tpu.dot_dimension_numbers<[1], [0], [0], [1], [0, 0, 1, 1], [], []>} : vector<2x16xbf16>, vector<16x8xbf16>, vector<2x8xf32> -> vector<2x8xf32>
    %c0_312 = arith.constant 0 : index
    %c0_313 = arith.constant 0 : index
    %796 = vector.load %arg18[%c0_312, %c0_313] : memref<1x8xf32, #tpu.memory_space<vmem>>, vector<1x8xf32>
    %797 = vector.broadcast %796 : vector<1x8xf32> to vector<2x8xf32>
    %798 = arith.addf %795, %797 : vector<2x8xf32>
    %cst_314 = arith.constant 0.000000e+00 : f32
    %799 = vector.broadcast %cst_314 : f32 to vector<2x8xf32>
    %800 = arith.maximumf %798, %799 : vector<2x8xf32>
    %801 = arith.truncf %800 : vector<2x8xf32> to vector<2x8xbf16>
    %c0_315 = arith.constant 0 : index
    %c0_316 = arith.constant 0 : index
    %802 = vector.load %arg19[%c0_315, %c0_316] : memref<8x5xbf16, #tpu.memory_space<vmem>>, vector<8x5xbf16>
    %cst_317 = arith.constant dense<0.000000e+00> : vector<2x5xf32>
    %803 = tpu.matmul %801, %802, %cst_317 {dimension_numbers = #tpu.dot_dimension_numbers<[1], [0], [0], [1], [0, 0, 1, 1], [], []>} : vector<2x8xbf16>, vector<8x5xbf16>, vector<2x5xf32> -> vector<2x5xf32>
    %c0_318 = arith.constant 0 : index
    %c0_319 = arith.constant 0 : index
    %804 = vector.load %arg20[%c0_318, %c0_319] : memref<1x5xf32, #tpu.memory_space<vmem>>, vector<1x5xf32>
    %805 = vector.broadcast %804 : vector<1x5xf32> to vector<2x5xf32>
    %806 = arith.addf %803, %805 : vector<2x5xf32>
    %cst_320 = arith.constant dense<0xFF800000> : vector<2xf32>
    %807 = vector.multi_reduction <maximumf>, %806, %cst_320 [1] : vector<2x5xf32> to vector<2xf32>
    %cst_321 = arith.constant 0xFF800000 : f32
    %808 = vector.broadcast %cst_321 : f32 to vector<2xf32>
    %809 = arith.maximumf %808, %807 : vector<2xf32>
    %810 = vector.shape_cast %809 : vector<2xf32> to vector<2x1xf32>
    %811 = vector.broadcast %810 : vector<2x1xf32> to vector<2x5xf32>
    %812 = arith.subf %806, %811 : vector<2x5xf32>
    %813 = math.exp %812 : vector<2x5xf32>
    %cst_322 = arith.constant dense<0.000000e+00> : vector<2xf32>
    %814 = vector.multi_reduction <add>, %813, %cst_322 [1] : vector<2x5xf32> to vector<2xf32>
    %815 = vector.shape_cast %814 : vector<2xf32> to vector<2x1xf32>
    %816 = math.log %815 : vector<2x1xf32>
    %817 = vector.broadcast %816 : vector<2x1xf32> to vector<2x5xf32>
    %818 = arith.subf %812, %817 : vector<2x5xf32>
    %c0_323 = arith.constant 0 : index
    %c0_324 = arith.constant 0 : index
    %819 = vector.load %arg21[%c0_323, %c0_324] : memref<2x5xf32, #tpu.memory_space<vmem>>, vector<2x5xf32>
    tpu.vector_store %arg21[%c0_323, %c0_324], %818 {strides = array<i32>} : memref<2x5xf32, #tpu.memory_space<vmem>>, vector<2x5xf32>,
    return
  }
  func.func @transform_0(%arg0: i32) -> (i32, i32, i32) {
    %c0_i32 = arith.constant 0 : i32
    %c0_i32_0 = arith.constant 0 : i32
    %c0_i32_1 = arith.constant 0 : i32
    return %c0_i32, %arg0, %c0_i32_0 : i32, i32, i32
  }
  func.func @transform_1(%arg0: i32) -> (i32, i32, i32) {
    %c0_i32 = arith.constant 0 : i32
    %c0_i32_0 = arith.constant 0 : i32
    %c0_i32_1 = arith.constant 0 : i32
    return %c0_i32, %arg0, %c0_i32_0 : i32, i32, i32
  }
  func.func @transform_2(%arg0: i32) -> (i32, i32) {
    %c0_i32 = arith.constant 0 : i32
    %c0_i32_0 = arith.constant 0 : i32
    %c0_i32_1 = arith.constant 0 : i32
    return %c0_i32, %c0_i32_0 : i32, i32
  }
  func.func @transform_3(%arg0: i32) -> (i32, i32) {
    %c0_i32 = arith.constant 0 : i32
    %c0_i32_0 = arith.constant 0 : i32
    %c0_i32_1 = arith.constant 0 : i32
    return %c0_i32, %c0_i32_0 : i32, i32
  }
  func.func @transform_4(%arg0: i32) -> (i32, i32) {
    %c0_i32 = arith.constant 0 : i32
    %c0_i32_0 = arith.constant 0 : i32
    %c0_i32_1 = arith.constant 0 : i32
    return %c0_i32, %c0_i32_0 : i32, i32
  }
  func.func @transform_5(%arg0: i32) -> (i32, i32) {
    %c0_i32 = arith.constant 0 : i32
    %c0_i32_0 = arith.constant 0 : i32
    %c0_i32_1 = arith.constant 0 : i32
    return %c0_i32, %c0_i32_0 : i32, i32
  }
  func.func @transform_6(%arg0: i32) -> (i32, i32) {
    %c0_i32 = arith.constant 0 : i32
    %c0_i32_0 = arith.constant 0 : i32
    %c0_i32_1 = arith.constant 0 : i32
    return %c0_i32, %c0_i32_0 : i32, i32
  }
  func.func @transform_7(%arg0: i32) -> (i32, i32) {
    %c0_i32 = arith.constant 0 : i32
    %c0_i32_0 = arith.constant 0 : i32
    %c0_i32_1 = arith.constant 0 : i32
    return %c0_i32, %c0_i32_0 : i32, i32
  }
  func.func @transform_8(%arg0: i32) -> (i32, i32) {
    %c0_i32 = arith.constant 0 : i32
    %c0_i32_0 = arith.constant 0 : i32
    %c0_i32_1 = arith.constant 0 : i32
    return %c0_i32, %c0_i32_0 : i32, i32
  }
  func.func @transform_9(%arg0: i32) -> (i32, i32) {
    %c0_i32 = arith.constant 0 : i32
    %c0_i32_0 = arith.constant 0 : i32
    %c0_i32_1 = arith.constant 0 : i32
    return %c0_i32, %c0_i32_0 : i32, i32
  }
  func.func @transform_10(%arg0: i32) -> (i32, i32) {
    %c0_i32 = arith.constant 0 : i32
    %c0_i32_0 = arith.constant 0 : i32
    %c0_i32_1 = arith.constant 0 : i32
    return %c0_i32, %c0_i32_0 : i32, i32
  }
  func.func @transform_11(%arg0: i32) -> (i32, i32) {
    %c0_i32 = arith.constant 0 : i32
    %c0_i32_0 = arith.constant 0 : i32
    %c0_i32_1 = arith.constant 0 : i32
    return %c0_i32, %c0_i32_0 : i32, i32
  }
  func.func @transform_12(%arg0: i32) -> (i32, i32) {
    %c0_i32 = arith.constant 0 : i32
    %c0_i32_0 = arith.constant 0 : i32
    %c0_i32_1 = arith.constant 0 : i32
    return %c0_i32, %c0_i32_0 : i32, i32
  }
  func.func @transform_13(%arg0: i32) -> (i32, i32) {
    %c0_i32 = arith.constant 0 : i32
    %c0_i32_0 = arith.constant 0 : i32
    %c0_i32_1 = arith.constant 0 : i32
    return %c0_i32, %c0_i32_0 : i32, i32
  }
  func.func @transform_14(%arg0: i32) -> (i32, i32) {
    %c0_i32 = arith.constant 0 : i32
    %c0_i32_0 = arith.constant 0 : i32
    %c0_i32_1 = arith.constant 0 : i32
    return %c0_i32, %c0_i32_0 : i32, i32
  }
  func.func @transform_15(%arg0: i32) -> (i32, i32) {
    %c0_i32 = arith.constant 0 : i32
    %c0_i32_0 = arith.constant 0 : i32
    %c0_i32_1 = arith.constant 0 : i32
    return %c0_i32, %c0_i32_0 : i32, i32
  }
  func.func @transform_16(%arg0: i32) -> (i32, i32) {
    %c0_i32 = arith.constant 0 : i32
    %c0_i32_0 = arith.constant 0 : i32
    %c0_i32_1 = arith.constant 0 : i32
    return %c0_i32, %c0_i32_0 : i32, i32
  }
  func.func @transform_17(%arg0: i32) -> (i32, i32) {
    %c0_i32 = arith.constant 0 : i32
    %c0_i32_0 = arith.constant 0 : i32
    %c0_i32_1 = arith.constant 0 : i32
    return %c0_i32, %c0_i32_0 : i32, i32
  }
  func.func @transform_18(%arg0: i32) -> (i32, i32) {
    %c0_i32 = arith.constant 0 : i32
    %c0_i32_0 = arith.constant 0 : i32
    %c0_i32_1 = arith.constant 0 : i32
    return %c0_i32, %c0_i32_0 : i32, i32
  }
  func.func @transform_19(%arg0: i32) -> (i32, i32) {
    %c0_i32 = arith.constant 0 : i32
    %c0_i32_0 = arith.constant 0 : i32
    %c0_i32_1 = arith.constant 0 : i32
    return %c0_i32, %c0_i32_0 : i32, i32
  }
  func.func @transform_20(%arg0: i32) -> (i32, i32) {
    %c0_i32 = arith.constant 0 : i32
    %c0_i32_0 = arith.constant 0 : i32
    return %arg0, %c0_i32 : i32, i32
  }
}

</mosaic_0001>

<llo_original>
// kernel: tpu_custom_call.1
$region0: #{tpu_custom_call.1}
  #allocation0 [shape = 'u32[]', space=smem, size = 0x4, offset = 0x4, fixed_abs, tag = 'smem constant byte address 0x4 - core index']
  #allocation1 [shape = 'u32[144,128]{1,0:T(1,128)}', space=vmem, size = 0x12000, scoped, tag = 'internal scratch']
  #allocation2 [shape = 'f32[16,256]{1,0:T(8,128)}', space=vmem, size = 0x4000, scoped, tag = 'scratch operand']
  #allocation3 [shape = 'f32[16,128]{1,0:T(8,128)}', space=vmem, size = 0x2000, scoped, tag = 'scratch operand']
  #allocation4 [shape = 'f32[8,2,128]{2,1,0:T(2,128)}', space=vmem, size = 0x2000, scoped, tag = 'scratch operand']
  #allocation5 [shape = 'f32[1,1]{1,0:T(1,128)S(1)}', space=vmem, size = 0x200, scoped, tag = 'scoped memory for tpu_custom_call.1']
  %s0 = inlined_call_operand.hbm [shape: f32[8,2,128], index: 0, kind: input, shape index: {}]
  %s1 = inlined_call_operand.vmem [shape: f32[8,2,1], index: 1, kind: input, shape index: {}]
  %s2 = inlined_call_operand.vmem [shape: bf16[128,256], index: 2, kind: input, shape index: {}]
  %s3 = inlined_call_operand.hbm [shape: f32[1,256], index: 3, kind: input, shape index: {}]
  %s4 = inlined_call_operand.vmem [shape: bf16[64,256], index: 4, kind: input, shape index: {}]
  %s5 = inlined_call_operand.hbm [shape: bf16[128,256], index: 5, kind: input, shape index: {}]
  %s6 = inlined_call_operand.hbm [shape: f32[1,256], index: 6, kind: input, shape index: {}]
  %s7 = inlined_call_operand.vmem [shape: bf16[64,256], index: 7, kind: input, shape index: {}]
  %s8 = inlined_call_operand.vmem [shape: bf16[128,32], index: 8, kind: input, shape index: {}]
  %s9 = inlined_call_operand.hbm [shape: f32[1,32], index: 9, kind: input, shape index: {}]
  %s10 = inlined_call_operand.vmem [shape: bf16[32,1], index: 10, kind: input, shape index: {}]
  %s11 = inlined_call_operand.<no memory space> [shape: f32[1,1], index: 11, kind: input, shape index: {}]
  %s12 = inlined_call_operand.vmem [shape: bf16[128,32], index: 12, kind: input, shape index: {}]
  %s13 = inlined_call_operand.hbm [shape: f32[1,32], index: 13, kind: input, shape index: {}]
  %s14 = inlined_call_operand.vmem [shape: bf16[32,16], index: 14, kind: input, shape index: {}]
  %s15 = inlined_call_operand.vmem [shape: f32[1,16], index: 15, kind: input, shape index: {}]
  %s16 = inlined_call_operand.vmem [shape: bf16[16,8], index: 16, kind: input, shape index: {}]
  %s17 = inlined_call_operand.vmem [shape: f32[1,8], index: 17, kind: input, shape index: {}]
  %s18 = inlined_call_operand.vmem [shape: bf16[8,5], index: 18, kind: input, shape index: {}]
  %s19 = inlined_call_operand.vmem [shape: f32[1,5], index: 19, kind: input, shape index: {}]
  %s20 = inlined_call_operand.hbm [shape: f32[2,5], index: 20, kind: output, shape index: {}]
  %s21 = sld [smem:[#allocation0]]
  $region114: #{tpu_custom_call.1} parent=0
    _
  %s23 = ssub.s32 1, %s21
  %s24 = scalar_select 0, %s23, %s21
  %v25 = vstv %s11
  %26 = vst [vmem:[#allocation5] sm:$0x1] %v25
  $region1: #{tpu_custom_call.1} parent=0
    #allocation6 [shape = 'u8[8192]{0}', space=vmem, size = 0x2000, scoped, tag = 'input window, operand 0, single buffered']
    #allocation7 [shape = 's32[1]{0}', space=sflag, size = 0x4, scoped, tag = 'scoped memory for tpu_custom_call.1']
    #allocation8 [shape = 's32[1]{0}', space=sflag, size = 0x4, scoped, tag = 'scoped memory for tpu_custom_call.1']
    #allocation9 [shape = 'u8[1024]{0}', space=vmem, size = 0x400, scoped, tag = 'input window, operand 3, single buffered']
    #allocation10 [shape = 's32[1]{0}', space=sflag, size = 0x4, scoped, tag = 'scoped memory for tpu_custom_call.1']
    #allocation11 [shape = 'u8[65536]{0}', space=vmem, size = 0x10000, scoped, tag = 'input window, operand 5, single buffered']
    #allocation12 [shape = 'u8[1024]{0}', space=vmem, size = 0x400, scoped, tag = 'input window, operand 6, single buffered']
    #allocation13 [shape = 's32[1]{0}', space=sflag, size = 0x4, scoped, tag = 'scoped memory for tpu_custom_call.1']
    #allocation14 [shape = 'u8[512]{0}', space=vmem, size = 0x400, scoped, tag = 'input window, operand 9, single buffered']
    #allocation15 [shape = 'u8[512]{0}', space=vmem, size = 0x400, scoped, tag = 'input window, operand 13, single buffered']
    #allocation16 [shape = 's32[1]{0}', space=sflag, size = 0x4, scoped, tag = 'scoped memory for tpu_custom_call.1']
    #allocation17 [shape = 'u8[1024]{0}', space=vmem, size = 0x400, scoped, tag = 'output window, operand 0, single buffered']
    %27 = vsyncpa [#allocation7], 0
    %28 = vsyncpa [#allocation10], 0
    %29 = vsyncpa [#allocation13], 0
    %30 = vsyncpa [#allocation16], 0
    %31 = vsyncpa [#allocation8], 0
    // Predicated region
    $region2: #{tpu_custom_call.1} parent=1 // pred_check
      _
    $region3: #{tpu_custom_call.1} parent=1 // pred_check_branch
      %33 = sbr.rel (0) target = $region5
    $region4: #{tpu_custom_call.1} parent=1 // pred_region
      %s35 = ssub.s32 256, 256
      %36 = vsyncadd [#allocation7], %s35
      %s37 = sshll.u32 [#allocation6], 4
      %s38 = int_to_ptr.vmem [resolvable:$true] %s37
      %43 = dma.hbm_to_vmem [thread:$0]  %s0, 256, %s38, [#allocation7], 32, 32, 2
    $region5: #{tpu_custom_call.1} parent=1 // pred_fallthru
      _
    // Predicated region
    $region6: #{tpu_custom_call.1} parent=1 // pred_check
      _
    $region7: #{tpu_custom_call.1} parent=1 // pred_check_branch
      %45 = sbr.rel (0) target = $region9
    $region8: #{tpu_custom_call.1} parent=1 // pred_region
      _
    $region9: #{tpu_custom_call.1} parent=1 // pred_fallthru
      _
    // Predicated region
    $region10: #{tpu_custom_call.1} parent=1 // pred_check
      _
    $region11: #{tpu_custom_call.1} parent=1 // pred_check_branch
      %47 = sbr.rel (0) target = $region13
    $region12: #{tpu_custom_call.1} parent=1 // pred_region
      _
    $region13: #{tpu_custom_call.1} parent=1 // pred_fallthru
      _
    // Predicated region
    $region14: #{tpu_custom_call.1} parent=1 // pred_check
      _
    $region15: #{tpu_custom_call.1} parent=1 // pred_check_branch
      %49 = sbr.rel (0) target = $region17
    $region16: #{tpu_custom_call.1} parent=1 // pred_region
      %s51 = ssub.s32 32, 32
      %52 = vsyncadd [#allocation10], %s51
      %s54 = sshll.u32 [#allocation9], 4
      %s55 = int_to_ptr.vmem [resolvable:$true] %s54
      %57 = dma.hbm_to_vmem [thread:$0]  %s3, 32, %s55, [#allocation10]
    $region17: #{tpu_custom_call.1} parent=1 // pred_fallthru
      _
    // Predicated region
    $region18: #{tpu_custom_call.1} parent=1 // pred_check
      _
    $region19: #{tpu_custom_call.1} parent=1 // pred_check_branch
      %59 = sbr.rel (0) target = $region21
    $region20: #{tpu_custom_call.1} parent=1 // pred_region
      _
    $region21: #{tpu_custom_call.1} parent=1 // pred_fallthru
      _
    // Predicated region
    $region22: #{tpu_custom_call.1} parent=1 // pred_check
      _
    $region23: #{tpu_custom_call.1} parent=1 // pred_check_branch
      %61 = sbr.rel (0) target = $region25
    $region24: #{tpu_custom_call.1} parent=1 // pred_region
      %s63 = ssub.s32 2048, 2048
      %64 = vsyncadd [#allocation10], %s63
      %s65 = sshll.u32 [#allocation11], 4
      %s66 = int_to_ptr.vmem [resolvable:$true] %s65
      %71 = dma.hbm_to_vmem [thread:$0]  %s5, 2048, %s66, [#allocation10], 128, 128, 8
    $region25: #{tpu_custom_call.1} parent=1 // pred_fallthru
      _
    // Predicated region
    $region26: #{tpu_custom_call.1} parent=1 // pred_check
      _
    $region27: #{tpu_custom_call.1} parent=1 // pred_check_branch
      %73 = sbr.rel (0) target = $region29
    $region28: #{tpu_custom_call.1} parent=1 // pred_region
      %s75 = ssub.s32 32, 32
      %76 = vsyncadd [#allocation13], %s75
      %s78 = sshll.u32 [#allocation12], 4
      %s79 = int_to_ptr.vmem [resolvable:$true] %s78
      %81 = dma.hbm_to_vmem [thread:$0]  %s6, 32, %s79, [#allocation13]
    $region29: #{tpu_custom_call.1} parent=1 // pred_fallthru
      _
    // Predicated region
    $region30: #{tpu_custom_call.1} parent=1 // pred_check
      _
    $region31: #{tpu_custom_call.1} parent=1 // pred_check_branch
      %83 = sbr.rel (0) target = $region33
    $region32: #{tpu_custom_call.1} parent=1 // pred_region
      _
    $region33: #{tpu_custom_call.1} parent=1 // pred_fallthru
      _
    // Predicated region
    $region34: #{tpu_custom_call.1} parent=1 // pred_check
      _
    $region35: #{tpu_custom_call.1} parent=1 // pred_check_branch
      %85 = sbr.rel (0) target = $region37
    $region36: #{tpu_custom_call.1} parent=1 // pred_region
      _
    $region37: #{tpu_custom_call.1} parent=1 // pred_fallthru
      _
    // Predicated region
    $region38: #{tpu_custom_call.1} parent=1 // pred_check
      _
    $region39: #{tpu_custom_call.1} parent=1 // pred_check_branch
      %87 = sbr.rel (0) target = $region41
    $region40: #{tpu_custom_call.1} parent=1 // pred_region
      %s89 = ssub.s32 16, 16
      %90 = vsyncadd [#allocation13], %s89
      %s92 = sshll.u32 [#allocation14], 4
      %s93 = int_to_ptr.vmem [resolvable:$true] %s92
      %95 = dma.hbm_to_vmem [thread:$0]  %s9, 16, %s93, [#allocation13]
    $region41: #{tpu_custom_call.1} parent=1 // pred_fallthru
      _
    // Predicated region
    $region42: #{tpu_custom_call.1} parent=1 // pred_check
      _
    $region43: #{tpu_custom_call.1} parent=1 // pred_check_branch
      %97 = sbr.rel (0) target = $region45
    $region44: #{tpu_custom_call.1} parent=1 // pred_region
      _
    $region45: #{tpu_custom_call.1} parent=1 // pred_fallthru
      _
    // Predicated region
    $region46: #{tpu_custom_call.1} parent=1 // pred_check
      _
    $region47: #{tpu_custom_call.1} parent=1 // pred_check_branch
      %99 = sbr.rel (0) target = $region49
    $region48: #{tpu_custom_call.1} parent=1 // pred_region
      _
    $region49: #{tpu_custom_call.1} parent=1 // pred_fallthru
      _
    // Predicated region
    $region50: #{tpu_custom_call.1} parent=1 // pred_check
      _
    $region51: #{tpu_custom_call.1} parent=1 // pred_check_branch
      %101 = sbr.rel (0) target = $region53
    $region52: #{tpu_custom_call.1} parent=1 // pred_region
      _
    $region53: #{tpu_custom_call.1} parent=1 // pred_fallthru
      _
    // Predicated region
    $region54: #{tpu_custom_call.1} parent=1 // pred_check
      _
    $region55: #{tpu_custom_call.1} parent=1 // pred_check_branch
      %103 = sbr.rel (0) target = $region57
    $region56: #{tpu_custom_call.1} parent=1 // pred_region
      %s105 = ssub.s32 16, 16
      %106 = vsyncadd [#allocation16], %s105
      %s108 = sshll.u32 [#allocation15], 4
      %s109 = int_to_ptr.vmem [resolvable:$true] %s108
      %111 = dma.hbm_to_vmem [thread:$0]  %s13, 16, %s109, [#allocation16]
    $region57: #{tpu_custom_call.1} parent=1 // pred_fallthru
      _
    // Predicated region
    $region58: #{tpu_custom_call.1} parent=1 // pred_check
      _
    $region59: #{tpu_custom_call.1} parent=1 // pred_check_branch
      %113 = sbr.rel (0) target = $region61
    $region60: #{tpu_custom_call.1} parent=1 // pred_region
      _
    $region61: #{tpu_custom_call.1} parent=1 // pred_fallthru
      _
    // Predicated region
    $region62: #{tpu_custom_call.1} parent=1 // pred_check
      _
    $region63: #{tpu_custom_call.1} parent=1 // pred_check_branch
      %115 = sbr.rel (0) target = $region65
    $region64: #{tpu_custom_call.1} parent=1 // pred_region
      _
    $region65: #{tpu_custom_call.1} parent=1 // pred_fallthru
      _
    // Predicated region
    $region66: #{tpu_custom_call.1} parent=1 // pred_check
      _
    $region67: #{tpu_custom_call.1} parent=1 // pred_check_branch
      %117 = sbr.rel (0) target = $region69
    $region68: #{tpu_custom_call.1} parent=1 // pred_region
      _
    $region69: #{tpu_custom_call.1} parent=1 // pred_fallthru
      _
    // Predicated region
    $region70: #{tpu_custom_call.1} parent=1 // pred_check
      _
    $region71: #{tpu_custom_call.1} parent=1 // pred_check_branch
      %119 = sbr.rel (0) target = $region73
    $region72: #{tpu_custom_call.1} parent=1 // pred_region
      _
    $region73: #{tpu_custom_call.1} parent=1 // pred_fallthru
      _
    // Predicated region
    $region74: #{tpu_custom_call.1} parent=1 // pred_check
      _
    $region75: #{tpu_custom_call.1} parent=1 // pred_check_branch
      %121 = sbr.rel (0) target = $region77
    $region76: #{tpu_custom_call.1} parent=1 // pred_region
      _
    $region77: #{tpu_custom_call.1} parent=1 // pred_fallthru
      _
    // Predicated region
    $region78: #{tpu_custom_call.1} parent=1 // pred_check
      _
    $region79: #{tpu_custom_call.1} parent=1 // pred_check_branch
      %123 = sbr.rel (0) target = $region81
    $region80: #{tpu_custom_call.1} parent=1 // pred_region
      _
    $region81: #{tpu_custom_call.1} parent=1 // pred_fallthru
      _
    // Predicated region
    $region82: #{tpu_custom_call.1} parent=1 // pred_check
      _
    $region83: #{tpu_custom_call.1} parent=1 // pred_check_branch
      %125 = sbr.rel (0) target = $region85
    $region84: #{tpu_custom_call.1} parent=1 // pred_region
      %126 = dma.done [#allocation7], 256
    $region85: #{tpu_custom_call.1} parent=1 // pred_fallthru
      _
    // Predicated region
    $region86: #{tpu_custom_call.1} parent=1 // pred_check
      _
    $region87: #{tpu_custom_call.1} parent=1 // pred_check_branch
      %128 = sbr.rel (0) target = $region89
    $region88: #{tpu_custom_call.1} parent=1 // pred_region
      %129 = dma.done [#allocation10], 32
    $region89: #{tpu_custom_call.1} parent=1 // pred_fallthru
      _
    // Predicated region
    $region90: #{tpu_custom_call.1} parent=1 // pred_check
      _
    $region91: #{tpu_custom_call.1} parent=1 // pred_check_branch
      %131 = sbr.rel (0) target = $region93
    $region92: #{tpu_custom_call.1} parent=1 // pred_region
      %132 = dma.done [#allocation10], 2048
    $region93: #{tpu_custom_call.1} parent=1 // pred_fallthru
      _
    // Predicated region
    $region94: #{tpu_custom_call.1} parent=1 // pred_check
      _
    $region95: #{tpu_custom_call.1} parent=1 // pred_check_branch
      %134 = sbr.rel (0) target = $region97
    $region96: #{tpu_custom_call.1} parent=1 // pred_region
      %135 = dma.done [#allocation13], 32
    $region97: #{tpu_custom_call.1} parent=1 // pred_fallthru
      _
    // Predicated region
    $region98: #{tpu_custom_call.1} parent=1 // pred_check
      _
    $region99: #{tpu_custom_call.1} parent=1 // pred_check_branch
      %137 = sbr.rel (0) target = $region101
    $region100: #{tpu_custom_call.1} parent=1 // pred_region
      %138 = dma.done [#allocation13], 16
    $region101: #{tpu_custom_call.1} parent=1 // pred_fallthru
      _
    // Predicated region
    $region102: #{tpu_custom_call.1} parent=1 // pred_check
      _
    $region103: #{tpu_custom_call.1} parent=1 // pred_check_branch
      %140 = sbr.rel (0) target = $region105
    $region104: #{tpu_custom_call.1} parent=1 // pred_region
      %141 = dma.done [#allocation16], 16
    $region105: #{tpu_custom_call.1} parent=1 // pred_fallthru
      _
    %v143 = vld [vmem:[#allocation6] sm:$0x3]
    %v144 = vld [vmem:[#allocation6 + $0x2] sm:$0x3]
    %v145 = vld [vmem:[#allocation6 + $0x4] sm:$0x3]
    %v146 = vld [vmem:[#allocation6 + $0x6] sm:$0x3]
    %v147 = vld [vmem:[#allocation6 + $0x8] sm:$0x3]
    %v148 = vld [vmem:[#allocation6 + $0xa] sm:$0x3]
    %v149 = vld [vmem:[#allocation6 + $0xc] sm:$0x3]
    %v150 = vld [vmem:[#allocation6 + $0xe] sm:$0x3]
    %v159 = vcombine.low %v143, %v144
    %v160 = vcombine.low %v145, %v146
    %v162 = vunpack.c.l.s4 1983009808
    %v163 = vunpack.c.0.s8 %v162
    %v164 = vlaneseq
    %v165 = vshrl.u32 %v164, 7
    %v166 = vsub.s32 %v163, %v165
    %v167 = vrot.slane %v159, %v166
    %v169 = vunpack.c.l.s4 1983009808
    %v170 = vunpack.c.0.s8 %v169
    %v171 = vlaneseq
    %v172 = vshrl.u32 %v171, 7
    %v173 = vsub.s32 %v170, %v172
    %v174 = vrot.slane %v160, %v173
    %v175 = vcombine.low %v167, %v174
    %v176 = vcombine.low %v147, %v148
    %v177 = vcombine.low %v149, %v150
    %v179 = vunpack.c.l.s4 1983009808
    %v180 = vunpack.c.0.s8 %v179
    %v181 = vlaneseq
    %v182 = vshrl.u32 %v181, 7
    %v183 = vsub.s32 %v180, %v182
    %v184 = vrot.slane %v176, %v183
    %v186 = vunpack.c.l.s4 1983009808
    %v187 = vunpack.c.0.s8 %v186
    %v188 = vlaneseq
    %v189 = vshrl.u32 %v188, 7
    %v190 = vsub.s32 %v187, %v189
    %v191 = vrot.slane %v177, %v190
    %v192 = vcombine.low %v184, %v191
    %v195 = vpack.c.bf16 %v192, %v175
    %v196 = vld [vmem:[%s2] sm:$0xff]
    %v197 = vld [vmem:[%s2 + $0x8] sm:$0xff]
    %v198 = vld [vmem:[%s2 + $0x10] sm:$0xff]
    %v199 = vld [vmem:[%s2 + $0x18] sm:$0xff]
    %v200 = vld [vmem:[%s2 + $0x20] sm:$0xff]
    %v201 = vld [vmem:[%s2 + $0x28] sm:$0xff]
    %v202 = vld [vmem:[%s2 + $0x30] sm:$0xff]
    %v203 = vld [vmem:[%s2 + $0x38] sm:$0xff]
    %v204 = vld [vmem:[%s2 + $0x40] sm:$0xff]
    %v205 = vld [vmem:[%s2 + $0x48] sm:$0xff]
    %v206 = vld [vmem:[%s2 + $0x50] sm:$0xff]
    %v207 = vld [vmem:[%s2 + $0x58] sm:$0xff]
    %v208 = vld [vmem:[%s2 + $0x60] sm:$0xff]
    %v209 = vld [vmem:[%s2 + $0x68] sm:$0xff]
    %v210 = vld [vmem:[%s2 + $0x70] sm:$0xff]
    %v211 = vld [vmem:[%s2 + $0x78] sm:$0xff]
    %v212 = vld [vmem:[#allocation9] sm:$0x3]
    %v214 = vlaneseq
    %v215 = vshrl.u32 %v214, 7
    %v216 = vsub.s32 0, %v215
    %v217 = vrot.slane %v212, %v216
    %v218 = vlaneseq
    %v219 = vshrl.u32 %v218, 7
    %v220 = vsub.s32 1, %v219
    %v221 = vrot.slane %v212, %v220
    %v240 = vunpack.c.l.b16 %v196
    %v241 = vunpack.c.h.b16 %v196
    %v242 = vunpack.c.l.b16 %v197
    %v243 = vunpack.c.h.b16 %v197
    %v244 = vunpack.c.l.b16 %v198
    %v245 = vunpack.c.h.b16 %v198
    %v246 = vunpack.c.l.b16 %v199
    %v247 = vunpack.c.h.b16 %v199
    %v248 = vunpack.c.l.b16 %v200
    %v249 = vunpack.c.h.b16 %v200
    %v250 = vunpack.c.l.b16 %v201
    %v251 = vunpack.c.h.b16 %v201
    %v252 = vunpack.c.l.b16 %v202
    %v253 = vunpack.c.h.b16 %v202
    %v254 = vunpack.c.l.b16 %v203
    %v255 = vunpack.c.h.b16 %v203
    %v256 = vunpack.c.l.b16 %v204
    %v257 = vunpack.c.h.b16 %v204
    %v258 = vunpack.c.l.b16 %v205
    %v259 = vunpack.c.h.b16 %v205
    %v260 = vunpack.c.l.b16 %v206
    %v261 = vunpack.c.h.b16 %v206
    %v262 = vunpack.c.l.b16 %v207
    %v263 = vunpack.c.h.b16 %v207
    %v264 = vunpack.c.l.b16 %v208
    %v265 = vunpack.c.h.b16 %v208
    %v266 = vunpack.c.l.b16 %v209
    %v267 = vunpack.c.h.b16 %v209
    %v268 = vunpack.c.l.b16 %v210
    %v269 = vunpack.c.h.b16 %v210
    %v270 = vunpack.c.l.b16 %v211
    %v271 = vunpack.c.h.b16 %v211
    %v272 = vpack.c.b16 %v242, %v240
    %v273 = vpack.c.b16 %v243, %v241
    %v274 = vpack.c.b16 %v246, %v244
    %v275 = vpack.c.b16 %v247, %v245
    %v276 = vpack.c.b16 %v250, %v248
    %v277 = vpack.c.b16 %v251, %v249
    %v278 = vpack.c.b16 %v254, %v252
    %v279 = vpack.c.b16 %v255, %v253
    %v280 = vpack.c.b16 %v258, %v256
    %v281 = vpack.c.b16 %v259, %v257
    %v282 = vpack.c.b16 %v262, %v260
    %v283 = vpack.c.b16 %v263, %v261
    %v284 = vpack.c.b16 %v266, %v264
    %v285 = vpack.c.b16 %v267, %v265
    %v286 = vpack.c.b16 %v270, %v268
    %v287 = vpack.c.b16 %v271, %v269
    %304 = vmatprep.subr.bf16.mxu0 %v273
    %305 = vmatpush1.bf16.msra.mxu0 %v272
    %306 = vmatprep.subr.bf16.mxu0 %v275
    %307 = vmatpush1.bf16.msra.mxu0 %v274
    %308 = vmatprep.subr.bf16.mxu0 %v277
    %309 = vmatpush1.bf16.msra.mxu0 %v276
    %310 = vmatprep.subr.bf16.mxu0 %v279
    %311 = vmatpush1.bf16.msra.mxu0 %v278
    %312 = vmatprep.subr.bf16.mxu0 %v281
    %313 = vmatpush1.bf16.msra.mxu0 %v280
    %314 = vmatprep.subr.bf16.mxu0 %v283
    %315 = vmatpush1.bf16.msra.mxu0 %v282
    %316 = vmatprep.subr.bf16.mxu0 %v285
    %317 = vmatpush1.bf16.msra.mxu0 %v284
    %318 = vmatprep.subr.bf16.mxu0 %v287
    %319 = vmatpush1.bf16.msra.mxu0 %v286
    %320 = vmatprep.subr.bf16.mxu0 0
    %321 = vmatpush1.bf16.msra.mxu0 0
    %322 = vmatprep.subr.bf16.mxu0 0
    %323 = vmatpush1.bf16.msra.mxu0 0
    %324 = vmatprep.subr.bf16.mxu0 0
    %325 = vmatpush1.bf16.msra.mxu0 0
    %326 = vmatprep.subr.bf16.mxu0 0
    %327 = vmatpush1.bf16.msra.mxu0 0
    %328 = vmatprep.subr.bf16.mxu0 0
    %329 = vmatpush1.bf16.msra.mxu0 0
    %330 = vmatprep.subr.bf16.mxu0 0
    %331 = vmatpush1.bf16.msra.mxu0 0
    %332 = vmatprep.subr.bf16.mxu0 0
    %333 = vmatpush1.bf16.msra.mxu0 0
    %334 = vmatprep.subr.bf16.mxu0 0
    %335 = vmatpush1.bf16.msra.mxu0 0
    %336 = vmatprep.mubr.bf16.mxu0 0
    %337 = vmatmul.mubr.bf16.gmra.mrb[0].mxu0 %v195
    %v338 = vpop.f32.mrb[0].mxu0
    %v339 = vadd.f32 %v217, %v338
    %v340 = vpop.f32.mrb[0].mxu0
    %v341 = vadd.f32 %v221, %v340
    %v342 = vpop.f32.mrb[0].mxu0
    %v343 = vadd.f32 %v217, %v342
    %v344 = vpop.f32.mrb[0].mxu0
    %v345 = vadd.f32 %v221, %v344
    %346 = vdwg.mxu0
    %347 = vst [vmem:[#allocation2] sm:$0xff] %v339
    %348 = vst [vmem:[#allocation2 + $0x8] sm:$0xff] %v341
    %349 = vst [vmem:[#allocation2 + $0x10] sm:$0xff] %v343
    %350 = vst [vmem:[#allocation2 + $0x18] sm:$0xff] %v345
    %v351 = vld [vmem:[%s4] sm:$0xff]
    %v352 = vld [vmem:[%s4 + $0x8] sm:$0xff]
    %v353 = vld [vmem:[%s4 + $0x10] sm:$0xff]
    %v354 = vld [vmem:[%s4 + $0x18] sm:$0xff]
    %v355 = vld [vmem:[%s4 + $0x20] sm:$0xff]
    %v356 = vld [vmem:[%s4 + $0x28] sm:$0xff]
    %v357 = vld [vmem:[%s4 + $0x30] sm:$0xff]
    %v358 = vld [vmem:[%s4 + $0x38] sm:$0xff]
    %v359 = vld [vmem:[#allocation2] sm:$0x3]
    %v360 = vld [vmem:[#allocation2 + $0x8] sm:$0x3]
    %v369 = vunpack.c.l.b16 %v351
    %v370 = vunpack.c.h.b16 %v351
    %v371 = vunpack.c.l.b16 %v352
    %v372 = vunpack.c.h.b16 %v352
    %v373 = vunpack.c.l.b16 %v353
    %v374 = vunpack.c.h.b16 %v353
    %v375 = vunpack.c.l.b16 %v354
    %v376 = vunpack.c.h.b16 %v354
    %v377 = vunpack.c.l.b16 %v355
    %v378 = vunpack.c.h.b16 %v355
    %v379 = vunpack.c.l.b16 %v356
    %v380 = vunpack.c.h.b16 %v356
    %v381 = vunpack.c.l.b16 %v357
    %v382 = vunpack.c.h.b16 %v357
    %v383 = vunpack.c.l.b16 %v358
    %v384 = vunpack.c.h.b16 %v358
    %v385 = vpack.c.b16 %v371, %v369
    %v386 = vpack.c.b16 %v372, %v370
    %v387 = vpack.c.b16 %v375, %v373
    %v388 = vpack.c.b16 %v376, %v374
    %v389 = vpack.c.b16 %v379, %v377
    %v390 = vpack.c.b16 %v380, %v378
    %v391 = vpack.c.b16 %v383, %v381
    %v392 = vpack.c.b16 %v384, %v382
    %vm401 = vcmask 523264
    %v403 = vsel %vm401, 0, 0
    %405 = vmatprep.subr.bf16.mxu0 %v386
    %406 = vmatpush1.bf16.msra.mxu0 %v385
    %407 = vmatprep.subr.bf16.mxu0 %v388
    %408 = vmatpush1.bf16.msra.mxu0 %v387
    %409 = vmatprep.subr.bf16.mxu0 %v390
    %410 = vmatpush1.bf16.msra.mxu0 %v389
    %411 = vmatprep.subr.bf16.mxu0 %v392
    %412 = vmatpush1.bf16.msra.mxu0 %v391
    %413 = vmatprep.subr.bf16.mxu0 0
    %414 = vmatpush1.bf16.msra.mxu0 0
    %415 = vmatprep.subr.bf16.mxu0 0
    %416 = vmatpush1.bf16.msra.mxu0 0
    %417 = vmatprep.subr.bf16.mxu0 0
    %418 = vmatpush1.bf16.msra.mxu0 0
    %419 = vmatprep.subr.bf16.mxu0 0
    %420 = vmatpush1.bf16.msra.mxu0 0
    %421 = vmatprep.subr.bf16.mxu0 0
    %422 = vmatpush1.bf16.msra.mxu0 0
    %423 = vmatprep.subr.bf16.mxu0 0
    %424 = vmatpush1.bf16.msra.mxu0 0
    %425 = vmatprep.subr.bf16.mxu0 0
    %426 = vmatpush1.bf16.msra.mxu0 0
    %427 = vmatprep.subr.bf16.mxu0 0
    %428 = vmatpush1.bf16.msra.mxu0 0
    %429 = vmatprep.subr.bf16.mxu0 0
    %430 = vmatpush1.bf16.msra.mxu0 0
    %431 = vmatprep.subr.bf16.mxu0 0
    %432 = vmatpush1.bf16.msra.mxu0 0
    %433 = vmatprep.subr.bf16.mxu0 0
    %434 = vmatpush1.bf16.msra.mxu0 0
    %435 = vmatprep.subr.bf16.mxu0 0
    %436 = vmatpush1.bf16.msra.mxu0 0
    %437 = vmatprep.mubr.bf16.mxu0 0
    %438 = vmatmul.mubr.bf16.gmra.mrb[0].mxu0 %v403
    %v439 = vpop.f32.mrb[0].mxu0
    %v440 = vadd.f32 0.0, %v439
    %v441 = vpop.f32.mrb[0].mxu0
    %v442 = vadd.f32 0.0, %v441
    %v443 = vpop.f32.mrb[0].mxu0
    %v444 = vpop.f32.mrb[0].mxu0
    %445 = vdwg.mxu0
    %v446 = vadd.f32 %v359, %v440
    %v447 = vadd.f32 %v360, %v442
    %v448 = vxor.u32 %v446, 2147483648
    %v449 = vmul.f32 %v448, 1.442695
    %v450 = vpow.pop %v449
    %v451 = vadd.f32 %v450, 1.0
    %v452 = vrcp.pop %v451
    %v453 = vmul.f32 1.0, %v452
    %v454 = vtanh.pop %v447
    %v455 = vxor.u32 %v447, 2147483648
    %v456 = vmul.f32 %v455, 1.442695
    %v457 = vpow.pop %v456
    %v458 = vadd.f32 %v457, 1.0
    %v459 = vrcp.pop %v458
    %v460 = vmul.f32 1.0, %v459
    %v461 = vmul.f32 %v453, 0.0
    %v462 = vmul.f32 %v453, %v454
    %464 = vrot.lane.b32.xlu0 %v462, 64
    %v465 = vpop.permute.xlu0 %464
    %v467 = vadd.f32 %v461, %v465
    %v468 = vtanh.pop %v467
    %v469 = vmul.f32 %v460, %v468
    %471 = vrot.lane.b32.xlu0 %v469, 64
    %v472 = vpop.permute.xlu0 %471
    %vm474 = vcmask 254976
    %475 = vst.msk [vmem:[#allocation4] sm:$0x3] %vm474, %v472
    %s476 = scalar_lea.vmem [#allocation4], 14
    %vm477 = vcmask 517376
    %478 = vst.msk [vmem:[%s476] sm:$0x3] %vm477, %v472
    %v479 = vld [vmem:[#allocation2] sm:$0xc]
    %v480 = vld [vmem:[#allocation2 + $0x8] sm:$0xc]
    %v481 = vpack.c.bf16 %v469, %v469
    %483 = vrot.lane.b32.xlu0 %v481, 64
    %v484 = vpop.permute.xlu0 %483
    %v486 = vsel %vm401, %v484, 0
    %488 = vmatprep.subr.bf16.mxu0 %v386
    %489 = vmatpush1.bf16.msra.mxu0 %v385
    %490 = vmatprep.subr.bf16.mxu0 %v388
    %491 = vmatpush1.bf16.msra.mxu0 %v387
    %492 = vmatprep.subr.bf16.mxu0 %v390
    %493 = vmatpush1.bf16.msra.mxu0 %v389
    %494 = vmatprep.subr.bf16.mxu0 %v392
    %495 = vmatpush1.bf16.msra.mxu0 %v391
    %496 = vmatprep.subr.bf16.mxu0 0
    %497 = vmatpush1.bf16.msra.mxu0 0
    %498 = vmatprep.subr.bf16.mxu0 0
    %499 = vmatpush1.bf16.msra.mxu0 0
    %500 = vmatprep.subr.bf16.mxu0 0
    %501 = vmatpush1.bf16.msra.mxu0 0
    %502 = vmatprep.subr.bf16.mxu0 0
    %503 = vmatpush1.bf16.msra.mxu0 0
    %504 = vmatprep.subr.bf16.mxu0 0
    %505 = vmatpush1.bf16.msra.mxu0 0
    %506 = vmatprep.subr.bf16.mxu0 0
    %507 = vmatpush1.bf16.msra.mxu0 0
    %508 = vmatprep.subr.bf16.mxu0 0
    %509 = vmatpush1.bf16.msra.mxu0 0
    %510 = vmatprep.subr.bf16.mxu0 0
    %511 = vmatpush1.bf16.msra.mxu0 0
    %512 = vmatprep.subr.bf16.mxu0 0
    %513 = vmatpush1.bf16.msra.mxu0 0
    %514 = vmatprep.subr.bf16.mxu0 0
    %515 = vmatpush1.bf16.msra.mxu0 0
    %516 = vmatprep.subr.bf16.mxu0 0
    %517 = vmatpush1.bf16.msra.mxu0 0
    %518 = vmatprep.subr.bf16.mxu0 0
    %519 = vmatpush1.bf16.msra.mxu0 0
    %520 = vmatprep.mubr.bf16.mxu0 0
    %521 = vmatmul.mubr.bf16.gmra.mrb[0].mxu0 %v486
    %v522 = vpop.f32.mrb[0].mxu0
    %v523 = vadd.f32 0.0, %v522
    %v524 = vpop.f32.mrb[0].mxu0
    %v525 = vadd.f32 0.0, %v524
    %v526 = vpop.f32.mrb[0].mxu0
    %v527 = vpop.f32.mrb[0].mxu0
    %528 = vdwg.mxu0
    %v531 = vrot.slane %v523, 6
    %v532 = vrot.slane %v525, 6
    %v535 = vadd.f32 %v479, %v531
    %v536 = vadd.f32 %v480, %v532
    %v537 = vxor.u32 %v535, 2147483648
    %v538 = vmul.f32 %v537, 1.442695
    %v539 = vpow.pop %v538
    %v540 = vadd.f32 %v539, 1.0
    %v541 = vrcp.pop %v540
    %v542 = vmul.f32 1.0, %v541
    %v543 = vtanh.pop %v536
    %v544 = vxor.u32 %v536, 2147483648
    %v545 = vmul.f32 %v544, 1.442695
    %v546 = vpow.pop %v545
    %v547 = vadd.f32 %v546, 1.0
    %v548 = vrcp.pop %v547
    %v549 = vmul.f32 1.0, %v548
    %v551 = vrot.slane %v467, 6
    %v553 = vmul.f32 %v542, %v551
    %v554 = vmul.f32 %v542, %v543
    %556 = vrot.lane.b32.xlu0 %v554, 64
    %v557 = vpop.permute.xlu0 %556
    %v559 = vadd.f32 %v553, %v557
    %v560 = vtanh.pop %v559
    %v561 = vmul.f32 %v549, %v560
    %563 = vrot.lane.b32.xlu0 %v561, 64
    %v564 = vpop.permute.xlu0 %563
    %s566 = scalar_lea.vmem [#allocation4], 2
    %vm567 = vcmask 257026
    %568 = vst.msk [vmem:[%s566 - $0x2] sm:$0xc] %vm567, %v564
    %s569 = scalar_lea.vmem [#allocation4], 12
    %vm570 = vcmask 519426
    %571 = vst.msk [vmem:[%s569 - $0x2] sm:$0xc] %vm570, %v564
    %v572 = vld [vmem:[#allocation2] sm:$0x30]
    %v573 = vld [vmem:[#allocation2 + $0x8] sm:$0x30]
    %v574 = vpack.c.bf16 %v561, %v561
    %v576 = vrot.slane %v574, 1
    %577 = vrot.lane.b32.xlu0 %v576, 64
    %v578 = vpop.permute.xlu0 %577
    %v580 = vsel %vm401, %v578, 0
    %582 = vmatprep.subr.bf16.mxu0 %v386
    %583 = vmatpush1.bf16.msra.mxu0 %v385
    %584 = vmatprep.subr.bf16.mxu0 %v388
    %585 = vmatpush1.bf16.msra.mxu0 %v387
    %586 = vmatprep.subr.bf16.mxu0 %v390
    %587 = vmatpush1.bf16.msra.mxu0 %v389
    %588 = vmatprep.subr.bf16.mxu0 %v392
    %589 = vmatpush1.bf16.msra.mxu0 %v391
    %590 = vmatprep.subr.bf16.mxu0 0
    %591 = vmatpush1.bf16.msra.mxu0 0
    %592 = vmatprep.subr.bf16.mxu0 0
    %593 = vmatpush1.bf16.msra.mxu0 0
    %594 = vmatprep.subr.bf16.mxu0 0
    %595 = vmatpush1.bf16.msra.mxu0 0
    %596 = vmatprep.subr.bf16.mxu0 0
    %597 = vmatpush1.bf16.msra.mxu0 0
    %598 = vmatprep.subr.bf16.mxu0 0
    %599 = vmatpush1.bf16.msra.mxu0 0
    %600 = vmatprep.subr.bf16.mxu0 0
    %601 = vmatpush1.bf16.msra.mxu0 0
    %602 = vmatprep.subr.bf16.mxu0 0
    %603 = vmatpush1.bf16.msra.mxu0 0
    %604 = vmatprep.subr.bf16.mxu0 0
    %605 = vmatpush1.bf16.msra.mxu0 0
    %606 = vmatprep.subr.bf16.mxu0 0
    %607 = vmatpush1.bf16.msra.mxu0 0
    %608 = vmatprep.subr.bf16.mxu0 0
    %609 = vmatpush1.bf16.msra.mxu0 0
    %610 = vmatprep.subr.bf16.mxu0 0
    %611 = vmatpush1.bf16.msra.mxu0 0
    %612 = vmatprep.subr.bf16.mxu0 0
    %613 = vmatpush1.bf16.msra.mxu0 0
    %614 = vmatprep.mubr.bf16.mxu0 0
    %615 = vmatmul.mubr.bf16.gmra.mrb[0].mxu0 %v580
    %v616 = vpop.f32.mrb[0].mxu0
    %v617 = vadd.f32 0.0, %v616
    %v618 = vpop.f32.mrb[0].mxu0
    %v619 = vadd.f32 0.0, %v618
    %v620 = vpop.f32.mrb[0].mxu0
    %v621 = vpop.f32.mrb[0].mxu0
    %622 = vdwg.mxu0
    %v625 = vrot.slane %v617, 4
    %v626 = vrot.slane %v619, 4
    %v629 = vadd.f32 %v572, %v625
    %v630 = vadd.f32 %v573, %v626
    %v631 = vxor.u32 %v629, 2147483648
    %v632 = vmul.f32 %v631, 1.442695
    %v633 = vpow.pop %v632
    %v634 = vadd.f32 %v633, 1.0
    %v635 = vrcp.pop %v634
    %v636 = vmul.f32 1.0, %v635
    %v637 = vtanh.pop %v630
    %v638 = vxor.u32 %v630, 2147483648
    %v639 = vmul.f32 %v638, 1.442695
    %v640 = vpow.pop %v639
    %v641 = vadd.f32 %v640, 1.0
    %v642 = vrcp.pop %v641
    %v643 = vmul.f32 1.0, %v642
    %v645 = vrot.slane %v559, 6
    %v647 = vmul.f32 %v636, %v645
    %v648 = vmul.f32 %v636, %v637
    %650 = vrot.lane.b32.xlu0 %v648, 64
    %v651 = vpop.permute.xlu0 %650
    %v653 = vadd.f32 %v647, %v651
    %v654 = vtanh.pop %v653
    %v655 = vmul.f32 %v643, %v654
    %657 = vrot.lane.b32.xlu0 %v655, 64
    %v658 = vpop.permute.xlu0 %657
    %s660 = scalar_lea.vmem [#allocation4], 4
    %vm661 = vcmask 259076
    %662 = vst.msk [vmem:[%s660 - $0x4] sm:$0x30] %vm661, %v658
    %s663 = scalar_lea.vmem [#allocation4], 10
    %vm664 = vcmask 521476
    %665 = vst.msk [vmem:[%s663 - $0x4] sm:$0x30] %vm664, %v658
    %v666 = vld [vmem:[#allocation2] sm:$0xc0]
    %v667 = vld [vmem:[#allocation2 + $0x8] sm:$0xc0]
    %v668 = vpack.c.bf16 %v655, %v655
    %v670 = vrot.slane %v668, 2
    %671 = vrot.lane.b32.xlu0 %v670, 64
    %v672 = vpop.permute.xlu0 %671
    %v674 = vsel %vm401, %v672, 0
    %676 = vmatprep.subr.bf16.mxu0 %v386
    %677 = vmatpush1.bf16.msra.mxu0 %v385
    %678 = vmatprep.subr.bf16.mxu0 %v388
    %679 = vmatpush1.bf16.msra.mxu0 %v387
    %680 = vmatprep.subr.bf16.mxu0 %v390
    %681 = vmatpush1.bf16.msra.mxu0 %v389
    %682 = vmatprep.subr.bf16.mxu0 %v392
    %683 = vmatpush1.bf16.msra.mxu0 %v391
    %684 = vmatprep.subr.bf16.mxu0 0
    %685 = vmatpush1.bf16.msra.mxu0 0
    %686 = vmatprep.subr.bf16.mxu0 0
    %687 = vmatpush1.bf16.msra.mxu0 0
    %688 = vmatprep.subr.bf16.mxu0 0
    %689 = vmatpush1.bf16.msra.mxu0 0
    %690 = vmatprep.subr.bf16.mxu0 0
    %691 = vmatpush1.bf16.msra.mxu0 0
    %692 = vmatprep.subr.bf16.mxu0 0
    %693 = vmatpush1.bf16.msra.mxu0 0
    %694 = vmatprep.subr.bf16.mxu0 0
    %695 = vmatpush1.bf16.msra.mxu0 0
    %696 = vmatprep.subr.bf16.mxu0 0
    %697 = vmatpush1.bf16.msra.mxu0 0
    %698 = vmatprep.subr.bf16.mxu0 0
    %699 = vmatpush1.bf16.msra.mxu0 0
    %700 = vmatprep.subr.bf16.mxu0 0
    %701 = vmatpush1.bf16.msra.mxu0 0
    %702 = vmatprep.subr.bf16.mxu0 0
    %703 = vmatpush1.bf16.msra.mxu0 0
    %704 = vmatprep.subr.bf16.mxu0 0
    %705 = vmatpush1.bf16.msra.mxu0 0
    %706 = vmatprep.subr.bf16.mxu0 0
    %707 = vmatpush1.bf16.msra.mxu0 0
    %708 = vmatprep.mubr.bf16.mxu0 0
    %709 = vmatmul.mubr.bf16.gmra.mrb[0].mxu0 %v674
    %v710 = vpop.f32.mrb[0].mxu0
    %v711 = vadd.f32 0.0, %v710
    %v712 = vpop.f32.mrb[0].mxu0
    %v713 = vadd.f32 0.0, %v712
    %v714 = vpop.f32.mrb[0].mxu0
    %v715 = vpop.f32.mrb[0].mxu0
    %716 = vdwg.mxu0
    %v719 = vrot.slane %v711, 2
    %v720 = vrot.slane %v713, 2
    %v723 = vadd.f32 %v666, %v719
    %v724 = vadd.f32 %v667, %v720
    %v725 = vxor.u32 %v723, 2147483648
    %v726 = vmul.f32 %v725, 1.442695
    %v727 = vpow.pop %v726
    %v728 = vadd.f32 %v727, 1.0
    %v729 = vrcp.pop %v728
    %v730 = vmul.f32 1.0, %v729
    %v731 = vtanh.pop %v724
    %v732 = vxor.u32 %v724, 2147483648
    %v733 = vmul.f32 %v732, 1.442695
    %v734 = vpow.pop %v733
    %v735 = vadd.f32 %v734, 1.0
    %v736 = vrcp.pop %v735
    %v737 = vmul.f32 1.0, %v736
    %v739 = vrot.slane %v653, 6
    %v741 = vmul.f32 %v730, %v739
    %v742 = vmul.f32 %v730, %v731
    %744 = vrot.lane.b32.xlu0 %v742, 64
    %v745 = vpop.permute.xlu0 %744
    %v747 = vadd.f32 %v741, %v745
    %v748 = vtanh.pop %v747
    %v749 = vmul.f32 %v737, %v748
    %751 = vrot.lane.b32.xlu0 %v749, 64
    %v752 = vpop.permute.xlu0 %751
    %s754 = scalar_lea.vmem [#allocation4], 6
    %vm755 = vcmask 261126
    %756 = vst.msk [vmem:[%s754 - $0x6] sm:$0xc0] %vm755, %v752
    %s757 = scalar_lea.vmem [#allocation4], 8
    %vm758 = vcmask 523526
    %759 = vst.msk [vmem:[%s757 - $0x6] sm:$0xc0] %vm758, %v752
    %v760 = vld [vmem:[#allocation2 + $0x10] sm:$0x3]
    %v761 = vld [vmem:[#allocation2 + $0x18] sm:$0x3]
    %v762 = vpack.c.bf16 %v749, %v749
    %v764 = vrot.slane %v762, 3
    %765 = vrot.lane.b32.xlu0 %v764, 64
    %v766 = vpop.permute.xlu0 %765
    %v768 = vsel %vm401, %v766, 0
    %770 = vmatprep.subr.bf16.mxu0 %v386
    %771 = vmatpush1.bf16.msra.mxu0 %v385
    %772 = vmatprep.subr.bf16.mxu0 %v388
    %773 = vmatpush1.bf16.msra.mxu0 %v387
    %774 = vmatprep.subr.bf16.mxu0 %v390
    %775 = vmatpush1.bf16.msra.mxu0 %v389
    %776 = vmatprep.subr.bf16.mxu0 %v392
    %777 = vmatpush1.bf16.msra.mxu0 %v391
    %778 = vmatprep.subr.bf16.mxu0 0
    %779 = vmatpush1.bf16.msra.mxu0 0
    %780 = vmatprep.subr.bf16.mxu0 0
    %781 = vmatpush1.bf16.msra.mxu0 0
    %782 = vmatprep.subr.bf16.mxu0 0
    %783 = vmatpush1.bf16.msra.mxu0 0
    %784 = vmatprep.subr.bf16.mxu0 0
    %785 = vmatpush1.bf16.msra.mxu0 0
    %786 = vmatprep.subr.bf16.mxu0 0
    %787 = vmatpush1.bf16.msra.mxu0 0
    %788 = vmatprep.subr.bf16.mxu0 0
    %789 = vmatpush1.bf16.msra.mxu0 0
    %790 = vmatprep.subr.bf16.mxu0 0
    %791 = vmatpush1.bf16.msra.mxu0 0
    %792 = vmatprep.subr.bf16.mxu0 0
    %793 = vmatpush1.bf16.msra.mxu0 0
    %794 = vmatprep.subr.bf16.mxu0 0
    %795 = vmatpush1.bf16.msra.mxu0 0
    %796 = vmatprep.subr.bf16.mxu0 0
    %797 = vmatpush1.bf16.msra.mxu0 0
    %798 = vmatprep.subr.bf16.mxu0 0
    %799 = vmatpush1.bf16.msra.mxu0 0
    %800 = vmatprep.subr.bf16.mxu0 0
    %801 = vmatpush1.bf16.msra.mxu0 0
    %802 = vmatprep.mubr.bf16.mxu0 0
    %803 = vmatmul.mubr.bf16.gmra.mrb[0].mxu0 %v768
    %v804 = vpop.f32.mrb[0].mxu0
    %v805 = vadd.f32 0.0, %v804
    %v806 = vpop.f32.mrb[0].mxu0
    %v807 = vadd.f32 0.0, %v806
    %v808 = vpop.f32.mrb[0].mxu0
    %v809 = vpop.f32.mrb[0].mxu0
    %810 = vdwg.mxu0
    %v811 = vadd.f32 %v760, %v805
    %v812 = vadd.f32 %v761, %v807
    %v813 = vxor.u32 %v811, 2147483648
    %v814 = vmul.f32 %v813, 1.442695
    %v815 = vpow.pop %v814
    %v816 = vadd.f32 %v815, 1.0
    %v817 = vrcp.pop %v816
    %v818 = vmul.f32 1.0, %v817
    %v819 = vtanh.pop %v812
    %v820 = vxor.u32 %v812, 2147483648
    %v821 = vmul.f32 %v820, 1.442695
    %v822 = vpow.pop %v821
    %v823 = vadd.f32 %v822, 1.0
    %v824 = vrcp.pop %v823
    %v825 = vmul.f32 1.0, %v824
    %v827 = vrot.slane %v747, 6
    %v829 = vmul.f32 %v818, %v827
    %v830 = vmul.f32 %v818, %v819
    %832 = vrot.lane.b32.xlu0 %v830, 64
    %v833 = vpop.permute.xlu0 %832
    %v835 = vadd.f32 %v829, %v833
    %v836 = vtanh.pop %v835
    %v837 = vmul.f32 %v825, %v836
    %839 = vrot.lane.b32.xlu0 %v837, 64
    %v840 = vpop.permute.xlu0 %839
    %842 = vst.msk [vmem:[%s757] sm:$0x3] %vm474, %v840
    %843 = vst.msk [vmem:[%s754] sm:$0x3] %vm477, %v840
    %v844 = vld [vmem:[#allocation2 + $0x10] sm:$0xc]
    %v845 = vld [vmem:[#allocation2 + $0x18] sm:$0xc]
    %v846 = vpack.c.bf16 %v837, %v837
    %848 = vrot.lane.b32.xlu0 %v846, 64
    %v849 = vpop.permute.xlu0 %848
    %v851 = vsel %vm401, %v849, 0
    %853 = vmatprep.subr.bf16.mxu0 %v386
    %854 = vmatpush1.bf16.msra.mxu0 %v385
    %855 = vmatprep.subr.bf16.mxu0 %v388
    %856 = vmatpush1.bf16.msra.mxu0 %v387
    %857 = vmatprep.subr.bf16.mxu0 %v390
    %858 = vmatpush1.bf16.msra.mxu0 %v389
    %859 = vmatprep.subr.bf16.mxu0 %v392
    %860 = vmatpush1.bf16.msra.mxu0 %v391
    %861 = vmatprep.subr.bf16.mxu0 0
    %862 = vmatpush1.bf16.msra.mxu0 0
    %863 = vmatprep.subr.bf16.mxu0 0
    %864 = vmatpush1.bf16.msra.mxu0 0
    %865 = vmatprep.subr.bf16.mxu0 0
    %866 = vmatpush1.bf16.msra.mxu0 0
    %867 = vmatprep.subr.bf16.mxu0 0
    %868 = vmatpush1.bf16.msra.mxu0 0
    %869 = vmatprep.subr.bf16.mxu0 0
    %870 = vmatpush1.bf16.msra.mxu0 0
    %871 = vmatprep.subr.bf16.mxu0 0
    %872 = vmatpush1.bf16.msra.mxu0 0
    %873 = vmatprep.subr.bf16.mxu0 0
    %874 = vmatpush1.bf16.msra.mxu0 0
    %875 = vmatprep.subr.bf16.mxu0 0
    %876 = vmatpush1.bf16.msra.mxu0 0
    %877 = vmatprep.subr.bf16.mxu0 0
    %878 = vmatpush1.bf16.msra.mxu0 0
    %879 = vmatprep.subr.bf16.mxu0 0
    %880 = vmatpush1.bf16.msra.mxu0 0
    %881 = vmatprep.subr.bf16.mxu0 0
    %882 = vmatpush1.bf16.msra.mxu0 0
    %883 = vmatprep.subr.bf16.mxu0 0
    %884 = vmatpush1.bf16.msra.mxu0 0
    %885 = vmatprep.mubr.bf16.mxu0 0
    %886 = vmatmul.mubr.bf16.gmra.mrb[0].mxu0 %v851
    %v887 = vpop.f32.mrb[0].mxu0
    %v888 = vadd.f32 0.0, %v887
    %v889 = vpop.f32.mrb[0].mxu0
    %v890 = vadd.f32 0.0, %v889
    %v891 = vpop.f32.mrb[0].mxu0
    %v892 = vpop.f32.mrb[0].mxu0
    %893 = vdwg.mxu0
    %v896 = vrot.slane %v888, 6
    %v897 = vrot.slane %v890, 6
    %v900 = vadd.f32 %v844, %v896
    %v901 = vadd.f32 %v845, %v897
    %v902 = vxor.u32 %v900, 2147483648
    %v903 = vmul.f32 %v902, 1.442695
    %v904 = vpow.pop %v903
    %v905 = vadd.f32 %v904, 1.0
    %v906 = vrcp.pop %v905
    %v907 = vmul.f32 1.0, %v906
    %v908 = vtanh.pop %v901
    %v909 = vxor.u32 %v901, 2147483648
    %v910 = vmul.f32 %v909, 1.442695
    %v911 = vpow.pop %v910
    %v912 = vadd.f32 %v911, 1.0
    %v913 = vrcp.pop %v912
    %v914 = vmul.f32 1.0, %v913
    %v916 = vrot.slane %v835, 6
    %v918 = vmul.f32 %v907, %v916
    %v919 = vmul.f32 %v907, %v908
    %921 = vrot.lane.b32.xlu0 %v919, 64
    %v922 = vpop.permute.xlu0 %921
    %v924 = vadd.f32 %v918, %v922
    %v925 = vtanh.pop %v924
    %v926 = vmul.f32 %v914, %v925
    %928 = vrot.lane.b32.xlu0 %v926, 64
    %v929 = vpop.permute.xlu0 %928
    %931 = vst.msk [vmem:[%s663 - $0x2] sm:$0xc] %vm567, %v929
    %932 = vst.msk [vmem:[%s660 - $0x2] sm:$0xc] %vm570, %v929
    %v933 = vld [vmem:[#allocation2 + $0x10] sm:$0x30]
    %v934 = vld [vmem:[#allocation2 + $0x18] sm:$0x30]
    %v935 = vpack.c.bf16 %v926, %v926
    %v937 = vrot.slane %v935, 1
    %938 = vrot.lane.b32.xlu0 %v937, 64
    %v939 = vpop.permute.xlu0 %938
    %v941 = vsel %vm401, %v939, 0
    %943 = vmatprep.subr.bf16.mxu0 %v386
    %944 = vmatpush1.bf16.msra.mxu0 %v385
    %945 = vmatprep.subr.bf16.mxu0 %v388
    %946 = vmatpush1.bf16.msra.mxu0 %v387
    %947 = vmatprep.subr.bf16.mxu0 %v390
    %948 = vmatpush1.bf16.msra.mxu0 %v389
    %949 = vmatprep.subr.bf16.mxu0 %v392
    %950 = vmatpush1.bf16.msra.mxu0 %v391
    %951 = vmatprep.subr.bf16.mxu0 0
    %952 = vmatpush1.bf16.msra.mxu0 0
    %953 = vmatprep.subr.bf16.mxu0 0
    %954 = vmatpush1.bf16.msra.mxu0 0
    %955 = vmatprep.subr.bf16.mxu0 0
    %956 = vmatpush1.bf16.msra.mxu0 0
    %957 = vmatprep.subr.bf16.mxu0 0
    %958 = vmatpush1.bf16.msra.mxu0 0
    %959 = vmatprep.subr.bf16.mxu0 0
    %960 = vmatpush1.bf16.msra.mxu0 0
    %961 = vmatprep.subr.bf16.mxu0 0
    %962 = vmatpush1.bf16.msra.mxu0 0
    %963 = vmatprep.subr.bf16.mxu0 0
    %964 = vmatpush1.bf16.msra.mxu0 0
    %965 = vmatprep.subr.bf16.mxu0 0
    %966 = vmatpush1.bf16.msra.mxu0 0
    %967 = vmatprep.subr.bf16.mxu0 0
    %968 = vmatpush1.bf16.msra.mxu0 0
    %969 = vmatprep.subr.bf16.mxu0 0
    %970 = vmatpush1.bf16.msra.mxu0 0
    %971 = vmatprep.subr.bf16.mxu0 0
    %972 = vmatpush1.bf16.msra.mxu0 0
    %973 = vmatprep.subr.bf16.mxu0 0
    %974 = vmatpush1.bf16.msra.mxu0 0
    %975 = vmatprep.mubr.bf16.mxu0 0
    %976 = vmatmul.mubr.bf16.gmra.mrb[0].mxu0 %v941
    %v977 = vpop.f32.mrb[0].mxu0
    %v978 = vadd.f32 0.0, %v977
    %v979 = vpop.f32.mrb[0].mxu0
    %v980 = vadd.f32 0.0, %v979
    %v981 = vpop.f32.mrb[0].mxu0
    %v982 = vpop.f32.mrb[0].mxu0
    %983 = vdwg.mxu0
    %v986 = vrot.slane %v978, 4
    %v987 = vrot.slane %v980, 4
    %v990 = vadd.f32 %v933, %v986
    %v991 = vadd.f32 %v934, %v987
    %v992 = vxor.u32 %v990, 2147483648
    %v993 = vmul.f32 %v992, 1.442695
    %v994 = vpow.pop %v993
    %v995 = vadd.f32 %v994, 1.0
    %v996 = vrcp.pop %v995
    %v997 = vmul.f32 1.0, %v996
    %v998 = vtanh.pop %v991
    %v999 = vxor.u32 %v991, 2147483648
    %v1000 = vmul.f32 %v999, 1.442695
    %v1001 = vpow.pop %v1000
    %v1002 = vadd.f32 %v1001, 1.0
    %v1003 = vrcp.pop %v1002
    %v1004 = vmul.f32 1.0, %v1003
    %v1006 = vrot.slane %v924, 6
    %v1008 = vmul.f32 %v997, %v1006
    %v1009 = vmul.f32 %v997, %v998
    %1011 = vrot.lane.b32.xlu0 %v1009, 64
    %v1012 = vpop.permute.xlu0 %1011
    %v1014 = vadd.f32 %v1008, %v1012
    %v1015 = vtanh.pop %v1014
    %v1016 = vmul.f32 %v1004, %v1015
    %1018 = vrot.lane.b32.xlu0 %v1016, 64
    %v1019 = vpop.permute.xlu0 %1018
    %1021 = vst.msk [vmem:[%s569 - $0x4] sm:$0x30] %vm661, %v1019
    %1022 = vst.msk [vmem:[%s566 - $0x4] sm:$0x30] %vm664, %v1019
    %v1023 = vld [vmem:[#allocation2 + $0x10] sm:$0xc0]
    %v1024 = vld [vmem:[#allocation2 + $0x18] sm:$0xc0]
    %v1025 = vpack.c.bf16 %v1016, %v1016
    %v1027 = vrot.slane %v1025, 2
    %1028 = vrot.lane.b32.xlu0 %v1027, 64
    %v1029 = vpop.permute.xlu0 %1028
    %v1031 = vsel %vm401, %v1029, 0
    %1033 = vmatprep.subr.bf16.mxu0 %v386
    %1034 = vmatpush1.bf16.msra.mxu0 %v385
    %1035 = vmatprep.subr.bf16.mxu0 %v388
    %1036 = vmatpush1.bf16.msra.mxu0 %v387
    %1037 = vmatprep.subr.bf16.mxu0 %v390
    %1038 = vmatpush1.bf16.msra.mxu0 %v389
    %1039 = vmatprep.subr.bf16.mxu0 %v392
    %1040 = vmatpush1.bf16.msra.mxu0 %v391
    %1041 = vmatprep.subr.bf16.mxu0 0
    %1042 = vmatpush1.bf16.msra.mxu0 0
    %1043 = vmatprep.subr.bf16.mxu0 0
    %1044 = vmatpush1.bf16.msra.mxu0 0
    %1045 = vmatprep.subr.bf16.mxu0 0
    %1046 = vmatpush1.bf16.msra.mxu0 0
    %1047 = vmatprep.subr.bf16.mxu0 0
    %1048 = vmatpush1.bf16.msra.mxu0 0
    %1049 = vmatprep.subr.bf16.mxu0 0
    %1050 = vmatpush1.bf16.msra.mxu0 0
    %1051 = vmatprep.subr.bf16.mxu0 0
    %1052 = vmatpush1.bf16.msra.mxu0 0
    %1053 = vmatprep.subr.bf16.mxu0 0
    %1054 = vmatpush1.bf16.msra.mxu0 0
    %1055 = vmatprep.subr.bf16.mxu0 0
    %1056 = vmatpush1.bf16.msra.mxu0 0
    %1057 = vmatprep.subr.bf16.mxu0 0
    %1058 = vmatpush1.bf16.msra.mxu0 0
    %1059 = vmatprep.subr.bf16.mxu0 0
    %1060 = vmatpush1.bf16.msra.mxu0 0
    %1061 = vmatprep.subr.bf16.mxu0 0
    %1062 = vmatpush1.bf16.msra.mxu0 0
    %1063 = vmatprep.subr.bf16.mxu0 0
    %1064 = vmatpush1.bf16.msra.mxu0 0
    %1065 = vmatprep.mubr.bf16.mxu0 0
    %1066 = vmatmul.mubr.bf16.gmra.mrb[0].mxu0 %v1031
    %v1067 = vpop.f32.mrb[0].mxu0
    %v1068 = vadd.f32 0.0, %v1067
    %v1069 = vpop.f32.mrb[0].mxu0
    %v1070 = vadd.f32 0.0, %v1069
    %v1071 = vpop.f32.mrb[0].mxu0
    %v1072 = vpop.f32.mrb[0].mxu0
    %1073 = vdwg.mxu0
    %v1076 = vrot.slane %v1068, 2
    %v1077 = vrot.slane %v1070, 2
    %v1080 = vadd.f32 %v1023, %v1076
    %v1081 = vadd.f32 %v1024, %v1077
    %v1082 = vxor.u32 %v1080, 2147483648
    %v1083 = vmul.f32 %v1082, 1.442695
    %v1084 = vpow.pop %v1083
    %v1085 = vadd.f32 %v1084, 1.0
    %v1086 = vrcp.pop %v1085
    %v1087 = vmul.f32 1.0, %v1086
    %v1088 = vtanh.pop %v1081
    %v1089 = vxor.u32 %v1081, 2147483648
    %v1090 = vmul.f32 %v1089, 1.442695
    %v1091 = vpow.pop %v1090
    %v1092 = vadd.f32 %v1091, 1.0
    %v1093 = vrcp.pop %v1092
    %v1094 = vmul.f32 1.0, %v1093
    %v1096 = vrot.slane %v1014, 6
    %v1098 = vmul.f32 %v1087, %v1096
    %v1099 = vmul.f32 %v1087, %v1088
    %1101 = vrot.lane.b32.xlu0 %v1099, 64
    %v1102 = vpop.permute.xlu0 %1101
    %v1104 = vadd.f32 %v1098, %v1102
    %v1105 = vtanh.pop %v1104
    %v1106 = vmul.f32 %v1094, %v1105
    %1108 = vrot.lane.b32.xlu0 %v1106, 64
    %v1109 = vpop.permute.xlu0 %1108
    %1111 = vst.msk [vmem:[%s476 - $0x6] sm:$0xc0] %vm755, %v1109
    %1112 = vst.msk [vmem:[#allocation4 - $0x6] sm:$0xc0] %vm758, %v1109
    %v1113 = vld [vmem:[#allocation4] sm:$0x3]
    %vm1114 = vcmask 517120
    %1115 = vst.msk [vmem:[#allocation3] sm:$0x3] %vm1114, %v1113
    %v1116 = vld [vmem:[%s476] sm:$0x3]
    %1118 = vrot.lane.b32.xlu0 %v1116, 64
    %v1119 = vpop.permute.xlu0 %1118
    %vm1121 = vcmask 1041920
    %1122 = vst.msk [vmem:[#allocation3] sm:$0x3] %vm1121, %v1119
    %v1123 = vld [vmem:[%s566] sm:$0x3]
    %1124 = vst.msk [vmem:[#allocation3 + $0x2] sm:$0x3] %vm1114, %v1123
    %v1125 = vld [vmem:[%s569] sm:$0x3]
    %1127 = vrot.lane.b32.xlu0 %v1125, 64
    %v1128 = vpop.permute.xlu0 %1127
    %1130 = vst.msk [vmem:[#allocation3 + $0x2] sm:$0x3] %vm1121, %v1128
    %v1131 = vld [vmem:[%s660] sm:$0x3]
    %1132 = vst.msk [vmem:[#allocation3 + $0x4] sm:$0x3] %vm1114, %v1131
    %v1133 = vld [vmem:[%s663] sm:$0x3]
    %1135 = vrot.lane.b32.xlu0 %v1133, 64
    %v1136 = vpop.permute.xlu0 %1135
    %1138 = vst.msk [vmem:[#allocation3 + $0x4] sm:$0x3] %vm1121, %v1136
    %v1139 = vld [vmem:[%s754] sm:$0x3]
    %1140 = vst.msk [vmem:[#allocation3 + $0x6] sm:$0x3] %vm1114, %v1139
    %v1141 = vld [vmem:[%s757] sm:$0x3]
    %1143 = vrot.lane.b32.xlu0 %v1141, 64
    %v1144 = vpop.permute.xlu0 %1143
    %1146 = vst.msk [vmem:[#allocation3 + $0x6] sm:$0x3] %vm1121, %v1144
    %v1147 = vld [vmem:[%s757] sm:$0x3]
    %1148 = vst.msk [vmem:[#allocation3 + $0x8] sm:$0x3] %vm1114, %v1147
    %v1149 = vld [vmem:[%s754] sm:$0x3]
    %1151 = vrot.lane.b32.xlu0 %v1149, 64
    %v1152 = vpop.permute.xlu0 %1151
    %1154 = vst.msk [vmem:[#allocation3 + $0x8] sm:$0x3] %vm1121, %v1152
    %v1155 = vld [vmem:[%s663] sm:$0x3]
    %1156 = vst.msk [vmem:[#allocation3 + $0xa] sm:$0x3] %vm1114, %v1155
    %v1157 = vld [vmem:[%s660] sm:$0x3]
    %1159 = vrot.lane.b32.xlu0 %v1157, 64
    %v1160 = vpop.permute.xlu0 %1159
    %1162 = vst.msk [vmem:[#allocation3 + $0xa] sm:$0x3] %vm1121, %v1160
    %v1163 = vld [vmem:[%s569] sm:$0x3]
    %1164 = vst.msk [vmem:[#allocation3 + $0xc] sm:$0x3] %vm1114, %v1163
    %v1165 = vld [vmem:[%s566] sm:$0x3]
    %1167 = vrot.lane.b32.xlu0 %v1165, 64
    %v1168 = vpop.permute.xlu0 %1167
    %1170 = vst.msk [vmem:[#allocation3 + $0xc] sm:$0x3] %vm1121, %v1168
    %v1171 = vld [vmem:[%s476] sm:$0x3]
    %1172 = vst.msk [vmem:[#allocation3 + $0xe] sm:$0x3] %vm1114, %v1171
    %v1173 = vld [vmem:[#allocation4] sm:$0x3]
    %1175 = vrot.lane.b32.xlu0 %v1173, 64
    %v1176 = vpop.permute.xlu0 %1175
    %1178 = vst.msk [vmem:[#allocation3 + $0xe] sm:$0x3] %vm1121, %v1176
    %v1179 = vld [vmem:[#allocation3] sm:$0xff]
    %v1180 = vld [vmem:[#allocation3 + $0x8] sm:$0xff]
    %v1181 = vpack.c.bf16 %v1180, %v1179
    %v1182 = vld [vmem:[#allocation11] sm:$0xff]
    %v1183 = vld [vmem:[#allocation11 + $0x8] sm:$0xff]
    %v1184 = vld [vmem:[#allocation11 + $0x10] sm:$0xff]
    %v1185 = vld [vmem:[#allocation11 + $0x18] sm:$0xff]
    %v1186 = vld [vmem:[#allocation11 + $0x20] sm:$0xff]
    %v1187 = vld [vmem:[#allocation11 + $0x28] sm:$0xff]
    %v1188 = vld [vmem:[#allocation11 + $0x30] sm:$0xff]
    %v1189 = vld [vmem:[#allocation11 + $0x38] sm:$0xff]
    %v1190 = vld [vmem:[#allocation11 + $0x40] sm:$0xff]
    %v1191 = vld [vmem:[#allocation11 + $0x48] sm:$0xff]
    %v1192 = vld [vmem:[#allocation11 + $0x50] sm:$0xff]
    %v1193 = vld [vmem:[#allocation11 + $0x58] sm:$0xff]
    %v1194 = vld [vmem:[#allocation11 + $0x60] sm:$0xff]
    %v1195 = vld [vmem:[#allocation11 + $0x68] sm:$0xff]
    %v1196 = vld [vmem:[#allocation11 + $0x70] sm:$0xff]
    %v1197 = vld [vmem:[#allocation11 + $0x78] sm:$0xff]
    %v1198 = vld [vmem:[#allocation12] sm:$0x3]
    %v1200 = vlaneseq
    %v1201 = vshrl.u32 %v1200, 7
    %v1202 = vsub.s32 0, %v1201
    %v1203 = vrot.slane %v1198, %v1202
    %v1204 = vlaneseq
    %v1205 = vshrl.u32 %v1204, 7
    %v1206 = vsub.s32 1, %v1205
    %v1207 = vrot.slane %v1198, %v1206
    %v1226 = vunpack.c.l.b16 %v1182
    %v1227 = vunpack.c.h.b16 %v1182
    %v1228 = vunpack.c.l.b16 %v1183
    %v1229 = vunpack.c.h.b16 %v1183
    %v1230 = vunpack.c.l.b16 %v1184
    %v1231 = vunpack.c.h.b16 %v1184
    %v1232 = vunpack.c.l.b16 %v1185
    %v1233 = vunpack.c.h.b16 %v1185
    %v1234 = vunpack.c.l.b16 %v1186
    %v1235 = vunpack.c.h.b16 %v1186
    %v1236 = vunpack.c.l.b16 %v1187
    %v1237 = vunpack.c.h.b16 %v1187
    %v1238 = vunpack.c.l.b16 %v1188
    %v1239 = vunpack.c.h.b16 %v1188
    %v1240 = vunpack.c.l.b16 %v1189
    %v1241 = vunpack.c.h.b16 %v1189
    %v1242 = vunpack.c.l.b16 %v1190
    %v1243 = vunpack.c.h.b16 %v1190
    %v1244 = vunpack.c.l.b16 %v1191
    %v1245 = vunpack.c.h.b16 %v1191
    %v1246 = vunpack.c.l.b16 %v1192
    %v1247 = vunpack.c.h.b16 %v1192
    %v1248 = vunpack.c.l.b16 %v1193
    %v1249 = vunpack.c.h.b16 %v1193
    %v1250 = vunpack.c.l.b16 %v1194
    %v1251 = vunpack.c.h.b16 %v1194
    %v1252 = vunpack.c.l.b16 %v1195
    %v1253 = vunpack.c.h.b16 %v1195
    %v1254 = vunpack.c.l.b16 %v1196
    %v1255 = vunpack.c.h.b16 %v1196
    %v1256 = vunpack.c.l.b16 %v1197
    %v1257 = vunpack.c.h.b16 %v1197
    %v1258 = vpack.c.b16 %v1228, %v1226
    %v1259 = vpack.c.b16 %v1229, %v1227
    %v1260 = vpack.c.b16 %v1232, %v1230
    %v1261 = vpack.c.b16 %v1233, %v1231
    %v1262 = vpack.c.b16 %v1236, %v1234
    %v1263 = vpack.c.b16 %v1237, %v1235
    %v1264 = vpack.c.b16 %v1240, %v1238
    %v1265 = vpack.c.b16 %v1241, %v1239
    %v1266 = vpack.c.b16 %v1244, %v1242
    %v1267 = vpack.c.b16 %v1245, %v1243
    %v1268 = vpack.c.b16 %v1248, %v1246
    %v1269 = vpack.c.b16 %v1249, %v1247
    %v1270 = vpack.c.b16 %v1252, %v1250
    %v1271 = vpack.c.b16 %v1253, %v1251
    %v1272 = vpack.c.b16 %v1256, %v1254
    %v1273 = vpack.c.b16 %v1257, %v1255
    %1290 = vmatprep.subr.bf16.mxu0 %v1259
    %1291 = vmatpush1.bf16.msra.mxu0 %v1258
    %1292 = vmatprep.subr.bf16.mxu0 %v1261
    %1293 = vmatpush1.bf16.msra.mxu0 %v1260
    %1294 = vmatprep.subr.bf16.mxu0 %v1263
    %1295 = vmatpush1.bf16.msra.mxu0 %v1262
    %1296 = vmatprep.subr.bf16.mxu0 %v1265
    %1297 = vmatpush1.bf16.msra.mxu0 %v1264
    %1298 = vmatprep.subr.bf16.mxu0 %v1267
    %1299 = vmatpush1.bf16.msra.mxu0 %v1266
    %1300 = vmatprep.subr.bf16.mxu0 %v1269
    %1301 = vmatpush1.bf16.msra.mxu0 %v1268
    %1302 = vmatprep.subr.bf16.mxu0 %v1271
    %1303 = vmatpush1.bf16.msra.mxu0 %v1270
    %1304 = vmatprep.subr.bf16.mxu0 %v1273
    %1305 = vmatpush1.bf16.msra.mxu0 %v1272
    %1306 = vmatprep.subr.bf16.mxu0 0
    %1307 = vmatpush1.bf16.msra.mxu0 0
    %1308 = vmatprep.subr.bf16.mxu0 0
    %1309 = vmatpush1.bf16.msra.mxu0 0
    %1310 = vmatprep.subr.bf16.mxu0 0
    %1311 = vmatpush1.bf16.msra.mxu0 0
    %1312 = vmatprep.subr.bf16.mxu0 0
    %1313 = vmatpush1.bf16.msra.mxu0 0
    %1314 = vmatprep.subr.bf16.mxu0 0
    %1315 = vmatpush1.bf16.msra.mxu0 0
    %1316 = vmatprep.subr.bf16.mxu0 0
    %1317 = vmatpush1.bf16.msra.mxu0 0
    %1318 = vmatprep.subr.bf16.mxu0 0
    %1319 = vmatpush1.bf16.msra.mxu0 0
    %1320 = vmatprep.subr.bf16.mxu0 0
    %1321 = vmatpush1.bf16.msra.mxu0 0
    %1322 = vmatprep.mubr.bf16.mxu0 0
    %1323 = vmatmul.mubr.bf16.gmra.mrb[0].mxu0 %v1181
    %v1324 = vpop.f32.mrb[0].mxu0
    %v1325 = vadd.f32 %v1203, %v1324
    %v1326 = vpop.f32.mrb[0].mxu0
    %v1327 = vadd.f32 %v1207, %v1326
    %v1328 = vpop.f32.mrb[0].mxu0
    %v1329 = vadd.f32 %v1203, %v1328
    %v1330 = vpop.f32.mrb[0].mxu0
    %v1331 = vadd.f32 %v1207, %v1330
    %1332 = vdwg.mxu0
    %1333 = vst [vmem:[#allocation2] sm:$0xff] %v1325
    %1334 = vst [vmem:[#allocation2 + $0x8] sm:$0xff] %v1327
    %1335 = vst [vmem:[#allocation2 + $0x10] sm:$0xff] %v1329
    %1336 = vst [vmem:[#allocation2 + $0x18] sm:$0xff] %v1331
    %v1337 = vld [vmem:[%s7] sm:$0xff]
    %v1338 = vld [vmem:[%s7 + $0x8] sm:$0xff]
    %v1339 = vld [vmem:[%s7 + $0x10] sm:$0xff]
    %v1340 = vld [vmem:[%s7 + $0x18] sm:$0xff]
    %v1341 = vld [vmem:[%s7 + $0x20] sm:$0xff]
    %v1342 = vld [vmem:[%s7 + $0x28] sm:$0xff]
    %v1343 = vld [vmem:[%s7 + $0x30] sm:$0xff]
    %v1344 = vld [vmem:[%s7 + $0x38] sm:$0xff]
    %v1345 = vld [vmem:[#allocation2] sm:$0x3]
    %v1346 = vld [vmem:[#allocation2 + $0x8] sm:$0x3]
    %v1355 = vunpack.c.l.b16 %v1337
    %v1356 = vunpack.c.h.b16 %v1337
    %v1357 = vunpack.c.l.b16 %v1338
    %v1358 = vunpack.c.h.b16 %v1338
    %v1359 = vunpack.c.l.b16 %v1339
    %v1360 = vunpack.c.h.b16 %v1339
    %v1361 = vunpack.c.l.b16 %v1340
    %v1362 = vunpack.c.h.b16 %v1340
    %v1363 = vunpack.c.l.b16 %v1341
    %v1364 = vunpack.c.h.b16 %v1341
    %v1365 = vunpack.c.l.b16 %v1342
    %v1366 = vunpack.c.h.b16 %v1342
    %v1367 = vunpack.c.l.b16 %v1343
    %v1368 = vunpack.c.h.b16 %v1343
    %v1369 = vunpack.c.l.b16 %v1344
    %v1370 = vunpack.c.h.b16 %v1344
    %v1371 = vpack.c.b16 %v1357, %v1355
    %v1372 = vpack.c.b16 %v1358, %v1356
    %v1373 = vpack.c.b16 %v1361, %v1359
    %v1374 = vpack.c.b16 %v1362, %v1360
    %v1375 = vpack.c.b16 %v1365, %v1363
    %v1376 = vpack.c.b16 %v1366, %v1364
    %v1377 = vpack.c.b16 %v1369, %v1367
    %v1378 = vpack.c.b16 %v1370, %v1368
    %1387 = vmatprep.subr.bf16.mxu0 %v1372
    %1388 = vmatpush1.bf16.msra.mxu0 %v1371
    %1389 = vmatprep.subr.bf16.mxu0 %v1374
    %1390 = vmatpush1.bf16.msra.mxu0 %v1373
    %1391 = vmatprep.subr.bf16.mxu0 %v1376
    %1392 = vmatpush1.bf16.msra.mxu0 %v1375
    %1393 = vmatprep.subr.bf16.mxu0 %v1378
    %1394 = vmatpush1.bf16.msra.mxu0 %v1377
    %1395 = vmatprep.subr.bf16.mxu0 0
    %1396 = vmatpush1.bf16.msra.mxu0 0
    %1397 = vmatprep.subr.bf16.mxu0 0
    %1398 = vmatpush1.bf16.msra.mxu0 0
    %1399 = vmatprep.subr.bf16.mxu0 0
    %1400 = vmatpush1.bf16.msra.mxu0 0
    %1401 = vmatprep.subr.bf16.mxu0 0
    %1402 = vmatpush1.bf16.msra.mxu0 0
    %1403 = vmatprep.subr.bf16.mxu0 0
    %1404 = vmatpush1.bf16.msra.mxu0 0
    %1405 = vmatprep.subr.bf16.mxu0 0
    %1406 = vmatpush1.bf16.msra.mxu0 0
    %1407 = vmatprep.subr.bf16.mxu0 0
    %1408 = vmatpush1.bf16.msra.mxu0 0
    %1409 = vmatprep.subr.bf16.mxu0 0
    %1410 = vmatpush1.bf16.msra.mxu0 0
    %1411 = vmatprep.subr.bf16.mxu0 0
    %1412 = vmatpush1.bf16.msra.mxu0 0
    %1413 = vmatprep.subr.bf16.mxu0 0
    %1414 = vmatpush1.bf16.msra.mxu0 0
    %1415 = vmatprep.subr.bf16.mxu0 0
    %1416 = vmatpush1.bf16.msra.mxu0 0
    %1417 = vmatprep.subr.bf16.mxu0 0
    %1418 = vmatpush1.bf16.msra.mxu0 0
    %1419 = vmatprep.mubr.bf16.mxu0 0
    %1420 = vmatmul.mubr.bf16.gmra.mrb[0].mxu0 %v403
    %v1421 = vpop.f32.mrb[0].mxu0
    %v1422 = vadd.f32 0.0, %v1421
    %v1423 = vpop.f32.mrb[0].mxu0
    %v1424 = vadd.f32 0.0, %v1423
    %v1425 = vpop.f32.mrb[0].mxu0
    %v1426 = vpop.f32.mrb[0].mxu0
    %1427 = vdwg.mxu0
    %v1428 = vadd.f32 %v1345, %v1422
    %v1429 = vadd.f32 %v1346, %v1424
    %v1430 = vxor.u32 %v1428, 2147483648
    %v1431 = vmul.f32 %v1430, 1.442695
    %v1432 = vpow.pop %v1431
    %v1433 = vadd.f32 %v1432, 1.0
    %v1434 = vrcp.pop %v1433
    %v1435 = vmul.f32 1.0, %v1434
    %v1436 = vtanh.pop %v1429
    %v1437 = vxor.u32 %v1429, 2147483648
    %v1438 = vmul.f32 %v1437, 1.442695
    %v1439 = vpow.pop %v1438
    %v1440 = vadd.f32 %v1439, 1.0
    %v1441 = vrcp.pop %v1440
    %v1442 = vmul.f32 1.0, %v1441
    %v1443 = vmul.f32 %v1435, 0.0
    %v1444 = vmul.f32 %v1435, %v1436
    %1446 = vrot.lane.b32.xlu0 %v1444, 64
    %v1447 = vpop.permute.xlu0 %1446
    %v1449 = vadd.f32 %v1443, %v1447
    %v1450 = vtanh.pop %v1449
    %v1451 = vmul.f32 %v1442, %v1450
    %vm1452 = vcmask 779776
    %1453 = vst.msk [vmem:[#allocation4] sm:$0x3] %vm1452, %v1451
    %vm1454 = vcmask 1042176
    %1455 = vst.msk [vmem:[%s476] sm:$0x3] %vm1454, %v1451
    %v1456 = vld [vmem:[#allocation2] sm:$0xc]
    %v1457 = vld [vmem:[#allocation2 + $0x8] sm:$0xc]
    %v1458 = vpack.c.bf16 %v1451, %v1451
    %1460 = vrot.lane.b32.xlu0 %v1458, 64
    %v1461 = vpop.permute.xlu0 %1460
    %v1463 = vsel %vm401, %v1461, 0
    %1465 = vmatprep.subr.bf16.mxu0 %v1372
    %1466 = vmatpush1.bf16.msra.mxu0 %v1371
    %1467 = vmatprep.subr.bf16.mxu0 %v1374
    %1468 = vmatpush1.bf16.msra.mxu0 %v1373
    %1469 = vmatprep.subr.bf16.mxu0 %v1376
    %1470 = vmatpush1.bf16.msra.mxu0 %v1375
    %1471 = vmatprep.subr.bf16.mxu0 %v1378
    %1472 = vmatpush1.bf16.msra.mxu0 %v1377
    %1473 = vmatprep.subr.bf16.mxu0 0
    %1474 = vmatpush1.bf16.msra.mxu0 0
    %1475 = vmatprep.subr.bf16.mxu0 0
    %1476 = vmatpush1.bf16.msra.mxu0 0
    %1477 = vmatprep.subr.bf16.mxu0 0
    %1478 = vmatpush1.bf16.msra.mxu0 0
    %1479 = vmatprep.subr.bf16.mxu0 0
    %1480 = vmatpush1.bf16.msra.mxu0 0
    %1481 = vmatprep.subr.bf16.mxu0 0
    %1482 = vmatpush1.bf16.msra.mxu0 0
    %1483 = vmatprep.subr.bf16.mxu0 0
    %1484 = vmatpush1.bf16.msra.mxu0 0
    %1485 = vmatprep.subr.bf16.mxu0 0
    %1486 = vmatpush1.bf16.msra.mxu0 0
    %1487 = vmatprep.subr.bf16.mxu0 0
    %1488 = vmatpush1.bf16.msra.mxu0 0
    %1489 = vmatprep.subr.bf16.mxu0 0
    %1490 = vmatpush1.bf16.msra.mxu0 0
    %1491 = vmatprep.subr.bf16.mxu0 0
    %1492 = vmatpush1.bf16.msra.mxu0 0
    %1493 = vmatprep.subr.bf16.mxu0 0
    %1494 = vmatpush1.bf16.msra.mxu0 0
    %1495 = vmatprep.subr.bf16.mxu0 0
    %1496 = vmatpush1.bf16.msra.mxu0 0
    %1497 = vmatprep.mubr.bf16.mxu0 0
    %1498 = vmatmul.mubr.bf16.gmra.mrb[0].mxu0 %v1463
    %v1499 = vpop.f32.mrb[0].mxu0
    %v1500 = vadd.f32 0.0, %v1499
    %v1501 = vpop.f32.mrb[0].mxu0
    %v1502 = vadd.f32 0.0, %v1501
    %v1503 = vpop.f32.mrb[0].mxu0
    %v1504 = vpop.f32.mrb[0].mxu0
    %1505 = vdwg.mxu0
    %v1508 = vrot.slane %v1500, 6
    %v1509 = vrot.slane %v1502, 6
    %v1512 = vadd.f32 %v1456, %v1508
    %v1513 = vadd.f32 %v1457, %v1509
    %v1514 = vxor.u32 %v1512, 2147483648
    %v1515 = vmul.f32 %v1514, 1.442695
    %v1516 = vpow.pop %v1515
    %v1517 = vadd.f32 %v1516, 1.0
    %v1518 = vrcp.pop %v1517
    %v1519 = vmul.f32 1.0, %v1518
    %v1520 = vtanh.pop %v1513
    %v1521 = vxor.u32 %v1513, 2147483648
    %v1522 = vmul.f32 %v1521, 1.442695
    %v1523 = vpow.pop %v1522
    %v1524 = vadd.f32 %v1523, 1.0
    %v1525 = vrcp.pop %v1524
    %v1526 = vmul.f32 1.0, %v1525
    %v1528 = vrot.slane %v1449, 6
    %v1530 = vmul.f32 %v1519, %v1528
    %v1531 = vmul.f32 %v1519, %v1520
    %1533 = vrot.lane.b32.xlu0 %v1531, 64
    %v1534 = vpop.permute.xlu0 %1533
    %v1536 = vadd.f32 %v1530, %v1534
    %v1537 = vtanh.pop %v1536
    %v1538 = vmul.f32 %v1526, %v1537
    %vm1539 = vcmask 781826
    %1540 = vst.msk [vmem:[%s566 - $0x2] sm:$0xc] %vm1539, %v1538
    %vm1541 = vcmask 1044226
    %1542 = vst.msk [vmem:[%s569 - $0x2] sm:$0xc] %vm1541, %v1538
    %v1543 = vld [vmem:[#allocation2] sm:$0x30]
    %v1544 = vld [vmem:[#allocation2 + $0x8] sm:$0x30]
    %v1545 = vpack.c.bf16 %v1538, %v1538
    %v1547 = vrot.slane %v1545, 1
    %1548 = vrot.lane.b32.xlu0 %v1547, 64
    %v1549 = vpop.permute.xlu0 %1548
    %v1551 = vsel %vm401, %v1549, 0
    %1553 = vmatprep.subr.bf16.mxu0 %v1372
    %1554 = vmatpush1.bf16.msra.mxu0 %v1371
    %1555 = vmatprep.subr.bf16.mxu0 %v1374
    %1556 = vmatpush1.bf16.msra.mxu0 %v1373
    %1557 = vmatprep.subr.bf16.mxu0 %v1376
    %1558 = vmatpush1.bf16.msra.mxu0 %v1375
    %1559 = vmatprep.subr.bf16.mxu0 %v1378
    %1560 = vmatpush1.bf16.msra.mxu0 %v1377
    %1561 = vmatprep.subr.bf16.mxu0 0
    %1562 = vmatpush1.bf16.msra.mxu0 0
    %1563 = vmatprep.subr.bf16.mxu0 0
    %1564 = vmatpush1.bf16.msra.mxu0 0
    %1565 = vmatprep.subr.bf16.mxu0 0
    %1566 = vmatpush1.bf16.msra.mxu0 0
    %1567 = vmatprep.subr.bf16.mxu0 0
    %1568 = vmatpush1.bf16.msra.mxu0 0
    %1569 = vmatprep.subr.bf16.mxu0 0
    %1570 = vmatpush1.bf16.msra.mxu0 0
    %1571 = vmatprep.subr.bf16.mxu0 0
    %1572 = vmatpush1.bf16.msra.mxu0 0
    %1573 = vmatprep.subr.bf16.mxu0 0
    %1574 = vmatpush1.bf16.msra.mxu0 0
    %1575 = vmatprep.subr.bf16.mxu0 0
    %1576 = vmatpush1.bf16.msra.mxu0 0
    %1577 = vmatprep.subr.bf16.mxu0 0
    %1578 = vmatpush1.bf16.msra.mxu0 0
    %1579 = vmatprep.subr.bf16.mxu0 0
    %1580 = vmatpush1.bf16.msra.mxu0 0
    %1581 = vmatprep.subr.bf16.mxu0 0
    %1582 = vmatpush1.bf16.msra.mxu0 0
    %1583 = vmatprep.subr.bf16.mxu0 0
    %1584 = vmatpush1.bf16.msra.mxu0 0
    %1585 = vmatprep.mubr.bf16.mxu0 0
    %1586 = vmatmul.mubr.bf16.gmra.mrb[0].mxu0 %v1551
    %v1587 = vpop.f32.mrb[0].mxu0
    %v1588 = vadd.f32 0.0, %v1587
    %v1589 = vpop.f32.mrb[0].mxu0
    %v1590 = vadd.f32 0.0, %v1589
    %v1591 = vpop.f32.mrb[0].mxu0
    %v1592 = vpop.f32.mrb[0].mxu0
    %1593 = vdwg.mxu0
    %v1596 = vrot.slane %v1588, 4
    %v1597 = vrot.slane %v1590, 4
    %v1600 = vadd.f32 %v1543, %v1596
    %v1601 = vadd.f32 %v1544, %v1597
    %v1602 = vxor.u32 %v1600, 2147483648
    %v1603 = vmul.f32 %v1602, 1.442695
    %v1604 = vpow.pop %v1603
    %v1605 = vadd.f32 %v1604, 1.0
    %v1606 = vrcp.pop %v1605
    %v1607 = vmul.f32 1.0, %v1606
    %v1608 = vtanh.pop %v1601
    %v1609 = vxor.u32 %v1601, 2147483648
    %v1610 = vmul.f32 %v1609, 1.442695
    %v1611 = vpow.pop %v1610
    %v1612 = vadd.f32 %v1611, 1.0
    %v1613 = vrcp.pop %v1612
    %v1614 = vmul.f32 1.0, %v1613
    %v1616 = vrot.slane %v1536, 6
    %v1618 = vmul.f32 %v1607, %v1616
    %v1619 = vmul.f32 %v1607, %v1608
    %1621 = vrot.lane.b32.xlu0 %v1619, 64
    %v1622 = vpop.permute.xlu0 %1621
    %v1624 = vadd.f32 %v1618, %v1622
    %v1625 = vtanh.pop %v1624
    %v1626 = vmul.f32 %v1614, %v1625
    %vm1627 = vcmask 783876
    %1628 = vst.msk [vmem:[%s660 - $0x4] sm:$0x30] %vm1627, %v1626
    %vm1629 = vcmask 1046276
    %1630 = vst.msk [vmem:[%s663 - $0x4] sm:$0x30] %vm1629, %v1626
    %v1631 = vld [vmem:[#allocation2] sm:$0xc0]
    %v1632 = vld [vmem:[#allocation2 + $0x8] sm:$0xc0]
    %v1633 = vpack.c.bf16 %v1626, %v1626
    %v1635 = vrot.slane %v1633, 2
    %1636 = vrot.lane.b32.xlu0 %v1635, 64
    %v1637 = vpop.permute.xlu0 %1636
    %v1639 = vsel %vm401, %v1637, 0
    %1641 = vmatprep.subr.bf16.mxu0 %v1372
    %1642 = vmatpush1.bf16.msra.mxu0 %v1371
    %1643 = vmatprep.subr.bf16.mxu0 %v1374
    %1644 = vmatpush1.bf16.msra.mxu0 %v1373
    %1645 = vmatprep.subr.bf16.mxu0 %v1376
    %1646 = vmatpush1.bf16.msra.mxu0 %v1375
    %1647 = vmatprep.subr.bf16.mxu0 %v1378
    %1648 = vmatpush1.bf16.msra.mxu0 %v1377
    %1649 = vmatprep.subr.bf16.mxu0 0
    %1650 = vmatpush1.bf16.msra.mxu0 0
    %1651 = vmatprep.subr.bf16.mxu0 0
    %1652 = vmatpush1.bf16.msra.mxu0 0
    %1653 = vmatprep.subr.bf16.mxu0 0
    %1654 = vmatpush1.bf16.msra.mxu0 0
    %1655 = vmatprep.subr.bf16.mxu0 0
    %1656 = vmatpush1.bf16.msra.mxu0 0
    %1657 = vmatprep.subr.bf16.mxu0 0
    %1658 = vmatpush1.bf16.msra.mxu0 0
    %1659 = vmatprep.subr.bf16.mxu0 0
    %1660 = vmatpush1.bf16.msra.mxu0 0
    %1661 = vmatprep.subr.bf16.mxu0 0
    %1662 = vmatpush1.bf16.msra.mxu0 0
    %1663 = vmatprep.subr.bf16.mxu0 0
    %1664 = vmatpush1.bf16.msra.mxu0 0
    %1665 = vmatprep.subr.bf16.mxu0 0
    %1666 = vmatpush1.bf16.msra.mxu0 0
    %1667 = vmatprep.subr.bf16.mxu0 0
    %1668 = vmatpush1.bf16.msra.mxu0 0
    %1669 = vmatprep.subr.bf16.mxu0 0
    %1670 = vmatpush1.bf16.msra.mxu0 0
    %1671 = vmatprep.subr.bf16.mxu0 0
    %1672 = vmatpush1.bf16.msra.mxu0 0
    %1673 = vmatprep.mubr.bf16.mxu0 0
    %1674 = vmatmul.mubr.bf16.gmra.mrb[0].mxu0 %v1639
    %v1675 = vpop.f32.mrb[0].mxu0
    %v1676 = vadd.f32 0.0, %v1675
    %v1677 = vpop.f32.mrb[0].mxu0
    %v1678 = vadd.f32 0.0, %v1677
    %v1679 = vpop.f32.mrb[0].mxu0
    %v1680 = vpop.f32.mrb[0].mxu0
    %1681 = vdwg.mxu0
    %v1684 = vrot.slane %v1676, 2
    %v1685 = vrot.slane %v1678, 2
    %v1688 = vadd.f32 %v1631, %v1684
    %v1689 = vadd.f32 %v1632, %v1685
    %v1690 = vxor.u32 %v1688, 2147483648
    %v1691 = vmul.f32 %v1690, 1.442695
    %v1692 = vpow.pop %v1691
    %v1693 = vadd.f32 %v1692, 1.0
    %v1694 = vrcp.pop %v1693
    %v1695 = vmul.f32 1.0, %v1694
    %v1696 = vtanh.pop %v1689
    %v1697 = vxor.u32 %v1689, 2147483648
    %v1698 = vmul.f32 %v1697, 1.442695
    %v1699 = vpow.pop %v1698
    %v1700 = vadd.f32 %v1699, 1.0
    %v1701 = vrcp.pop %v1700
    %v1702 = vmul.f32 1.0, %v1701
    %v1704 = vrot.slane %v1624, 6
    %v1706 = vmul.f32 %v1695, %v1704
    %v1707 = vmul.f32 %v1695, %v1696
    %1709 = vrot.lane.b32.xlu0 %v1707, 64
    %v1710 = vpop.permute.xlu0 %1709
    %v1712 = vadd.f32 %v1706, %v1710
    %v1713 = vtanh.pop %v1712
    %v1714 = vmul.f32 %v1702, %v1713
    %vm1715 = vcmask 785926
    %1716 = vst.msk [vmem:[%s754 - $0x6] sm:$0xc0] %vm1715, %v1714
    %vm1717 = vcmask 1048326
    %1718 = vst.msk [vmem:[%s757 - $0x6] sm:$0xc0] %vm1717, %v1714
    %v1719 = vld [vmem:[#allocation2 + $0x10] sm:$0x3]
    %v1720 = vld [vmem:[#allocation2 + $0x18] sm:$0x3]
    %v1721 = vpack.c.bf16 %v1714, %v1714
    %v1723 = vrot.slane %v1721, 3
    %1724 = vrot.lane.b32.xlu0 %v1723, 64
    %v1725 = vpop.permute.xlu0 %1724
    %v1727 = vsel %vm401, %v1725, 0
    %1729 = vmatprep.subr.bf16.mxu0 %v1372
    %1730 = vmatpush1.bf16.msra.mxu0 %v1371
    %1731 = vmatprep.subr.bf16.mxu0 %v1374
    %1732 = vmatpush1.bf16.msra.mxu0 %v1373
    %1733 = vmatprep.subr.bf16.mxu0 %v1376
    %1734 = vmatpush1.bf16.msra.mxu0 %v1375
    %1735 = vmatprep.subr.bf16.mxu0 %v1378
    %1736 = vmatpush1.bf16.msra.mxu0 %v1377
    %1737 = vmatprep.subr.bf16.mxu0 0
    %1738 = vmatpush1.bf16.msra.mxu0 0
    %1739 = vmatprep.subr.bf16.mxu0 0
    %1740 = vmatpush1.bf16.msra.mxu0 0
    %1741 = vmatprep.subr.bf16.mxu0 0
    %1742 = vmatpush1.bf16.msra.mxu0 0
    %1743 = vmatprep.subr.bf16.mxu0 0
    %1744 = vmatpush1.bf16.msra.mxu0 0
    %1745 = vmatprep.subr.bf16.mxu0 0
    %1746 = vmatpush1.bf16.msra.mxu0 0
    %1747 = vmatprep.subr.bf16.mxu0 0
    %1748 = vmatpush1.bf16.msra.mxu0 0
    %1749 = vmatprep.subr.bf16.mxu0 0
    %1750 = vmatpush1.bf16.msra.mxu0 0
    %1751 = vmatprep.subr.bf16.mxu0 0
    %1752 = vmatpush1.bf16.msra.mxu0 0
    %1753 = vmatprep.subr.bf16.mxu0 0
    %1754 = vmatpush1.bf16.msra.mxu0 0
    %1755 = vmatprep.subr.bf16.mxu0 0
    %1756 = vmatpush1.bf16.msra.mxu0 0
    %1757 = vmatprep.subr.bf16.mxu0 0
    %1758 = vmatpush1.bf16.msra.mxu0 0
    %1759 = vmatprep.subr.bf16.mxu0 0
    %1760 = vmatpush1.bf16.msra.mxu0 0
    %1761 = vmatprep.mubr.bf16.mxu0 0
    %1762 = vmatmul.mubr.bf16.gmra.mrb[0].mxu0 %v1727
    %v1763 = vpop.f32.mrb[0].mxu0
    %v1764 = vadd.f32 0.0, %v1763
    %v1765 = vpop.f32.mrb[0].mxu0
    %v1766 = vadd.f32 0.0, %v1765
    %v1767 = vpop.f32.mrb[0].mxu0
    %v1768 = vpop.f32.mrb[0].mxu0
    %1769 = vdwg.mxu0
    %v1770 = vadd.f32 %v1719, %v1764
    %v1771 = vadd.f32 %v1720, %v1766
    %v1772 = vxor.u32 %v1770, 2147483648
    %v1773 = vmul.f32 %v1772, 1.442695
    %v1774 = vpow.pop %v1773
    %v1775 = vadd.f32 %v1774, 1.0
    %v1776 = vrcp.pop %v1775
    %v1777 = vmul.f32 1.0, %v1776
    %v1778 = vtanh.pop %v1771
    %v1779 = vxor.u32 %v1771, 2147483648
    %v1780 = vmul.f32 %v1779, 1.442695
    %v1781 = vpow.pop %v1780
    %v1782 = vadd.f32 %v1781, 1.0
    %v1783 = vrcp.pop %v1782
    %v1784 = vmul.f32 1.0, %v1783
    %v1786 = vrot.slane %v1712, 6
    %v1788 = vmul.f32 %v1777, %v1786
    %v1789 = vmul.f32 %v1777, %v1778
    %1791 = vrot.lane.b32.xlu0 %v1789, 64
    %v1792 = vpop.permute.xlu0 %1791
    %v1794 = vadd.f32 %v1788, %v1792
    %v1795 = vtanh.pop %v1794
    %v1796 = vmul.f32 %v1784, %v1795
    %1797 = vst.msk [vmem:[%s757] sm:$0x3] %vm1452, %v1796
    %1798 = vst.msk [vmem:[%s754] sm:$0x3] %vm1454, %v1796
    %v1799 = vld [vmem:[#allocation2 + $0x10] sm:$0xc]
    %v1800 = vld [vmem:[#allocation2 + $0x18] sm:$0xc]
    %v1801 = vpack.c.bf16 %v1796, %v1796
    %1803 = vrot.lane.b32.xlu0 %v1801, 64
    %v1804 = vpop.permute.xlu0 %1803
    %v1806 = vsel %vm401, %v1804, 0
    %1808 = vmatprep.subr.bf16.mxu0 %v1372
    %1809 = vmatpush1.bf16.msra.mxu0 %v1371
    %1810 = vmatprep.subr.bf16.mxu0 %v1374
    %1811 = vmatpush1.bf16.msra.mxu0 %v1373
    %1812 = vmatprep.subr.bf16.mxu0 %v1376
    %1813 = vmatpush1.bf16.msra.mxu0 %v1375
    %1814 = vmatprep.subr.bf16.mxu0 %v1378
    %1815 = vmatpush1.bf16.msra.mxu0 %v1377
    %1816 = vmatprep.subr.bf16.mxu0 0
    %1817 = vmatpush1.bf16.msra.mxu0 0
    %1818 = vmatprep.subr.bf16.mxu0 0
    %1819 = vmatpush1.bf16.msra.mxu0 0
    %1820 = vmatprep.subr.bf16.mxu0 0
    %1821 = vmatpush1.bf16.msra.mxu0 0
    %1822 = vmatprep.subr.bf16.mxu0 0
    %1823 = vmatpush1.bf16.msra.mxu0 0
    %1824 = vmatprep.subr.bf16.mxu0 0
    %1825 = vmatpush1.bf16.msra.mxu0 0
    %1826 = vmatprep.subr.bf16.mxu0 0
    %1827 = vmatpush1.bf16.msra.mxu0 0
    %1828 = vmatprep.subr.bf16.mxu0 0
    %1829 = vmatpush1.bf16.msra.mxu0 0
    %1830 = vmatprep.subr.bf16.mxu0 0
    %1831 = vmatpush1.bf16.msra.mxu0 0
    %1832 = vmatprep.subr.bf16.mxu0 0
    %1833 = vmatpush1.bf16.msra.mxu0 0
    %1834 = vmatprep.subr.bf16.mxu0 0
    %1835 = vmatpush1.bf16.msra.mxu0 0
    %1836 = vmatprep.subr.bf16.mxu0 0
    %1837 = vmatpush1.bf16.msra.mxu0 0
    %1838 = vmatprep.subr.bf16.mxu0 0
    %1839 = vmatpush1.bf16.msra.mxu0 0
    %1840 = vmatprep.mubr.bf16.mxu0 0
    %1841 = vmatmul.mubr.bf16.gmra.mrb[0].mxu0 %v1806
    %v1842 = vpop.f32.mrb[0].mxu0
    %v1843 = vadd.f32 0.0, %v1842
    %v1844 = vpop.f32.mrb[0].mxu0
    %v1845 = vadd.f32 0.0, %v1844
    %v1846 = vpop.f32.mrb[0].mxu0
    %v1847 = vpop.f32.mrb[0].mxu0
    %1848 = vdwg.mxu0
    %v1851 = vrot.slane %v1843, 6
    %v1852 = vrot.slane %v1845, 6
    %v1855 = vadd.f32 %v1799, %v1851
    %v1856 = vadd.f32 %v1800, %v1852
    %v1857 = vxor.u32 %v1855, 2147483648
    %v1858 = vmul.f32 %v1857, 1.442695
    %v1859 = vpow.pop %v1858
    %v1860 = vadd.f32 %v1859, 1.0
    %v1861 = vrcp.pop %v1860
    %v1862 = vmul.f32 1.0, %v1861
    %v1863 = vtanh.pop %v1856
    %v1864 = vxor.u32 %v1856, 2147483648
    %v1865 = vmul.f32 %v1864, 1.442695
    %v1866 = vpow.pop %v1865
    %v1867 = vadd.f32 %v1866, 1.0
    %v1868 = vrcp.pop %v1867
    %v1869 = vmul.f32 1.0, %v1868
    %v1871 = vrot.slane %v1794, 6
    %v1873 = vmul.f32 %v1862, %v1871
    %v1874 = vmul.f32 %v1862, %v1863
    %1876 = vrot.lane.b32.xlu0 %v1874, 64
    %v1877 = vpop.permute.xlu0 %1876
    %v1879 = vadd.f32 %v1873, %v1877
    %v1880 = vtanh.pop %v1879
    %v1881 = vmul.f32 %v1869, %v1880
    %1882 = vst.msk [vmem:[%s663 - $0x2] sm:$0xc] %vm1539, %v1881
    %1883 = vst.msk [vmem:[%s660 - $0x2] sm:$0xc] %vm1541, %v1881
    %v1884 = vld [vmem:[#allocation2 + $0x10] sm:$0x30]
    %v1885 = vld [vmem:[#allocation2 + $0x18] sm:$0x30]
    %v1886 = vpack.c.bf16 %v1881, %v1881
    %v1888 = vrot.slane %v1886, 1
    %1889 = vrot.lane.b32.xlu0 %v1888, 64
    %v1890 = vpop.permute.xlu0 %1889
    %v1892 = vsel %vm401, %v1890, 0
    %1894 = vmatprep.subr.bf16.mxu0 %v1372
    %1895 = vmatpush1.bf16.msra.mxu0 %v1371
    %1896 = vmatprep.subr.bf16.mxu0 %v1374
    %1897 = vmatpush1.bf16.msra.mxu0 %v1373
    %1898 = vmatprep.subr.bf16.mxu0 %v1376
    %1899 = vmatpush1.bf16.msra.mxu0 %v1375
    %1900 = vmatprep.subr.bf16.mxu0 %v1378
    %1901 = vmatpush1.bf16.msra.mxu0 %v1377
    %1902 = vmatprep.subr.bf16.mxu0 0
    %1903 = vmatpush1.bf16.msra.mxu0 0
    %1904 = vmatprep.subr.bf16.mxu0 0
    %1905 = vmatpush1.bf16.msra.mxu0 0
    %1906 = vmatprep.subr.bf16.mxu0 0
    %1907 = vmatpush1.bf16.msra.mxu0 0
    %1908 = vmatprep.subr.bf16.mxu0 0
    %1909 = vmatpush1.bf16.msra.mxu0 0
    %1910 = vmatprep.subr.bf16.mxu0 0
    %1911 = vmatpush1.bf16.msra.mxu0 0
    %1912 = vmatprep.subr.bf16.mxu0 0
    %1913 = vmatpush1.bf16.msra.mxu0 0
    %1914 = vmatprep.subr.bf16.mxu0 0
    %1915 = vmatpush1.bf16.msra.mxu0 0
    %1916 = vmatprep.subr.bf16.mxu0 0
    %1917 = vmatpush1.bf16.msra.mxu0 0
    %1918 = vmatprep.subr.bf16.mxu0 0
    %1919 = vmatpush1.bf16.msra.mxu0 0
    %1920 = vmatprep.subr.bf16.mxu0 0
    %1921 = vmatpush1.bf16.msra.mxu0 0
    %1922 = vmatprep.subr.bf16.mxu0 0
    %1923 = vmatpush1.bf16.msra.mxu0 0
    %1924 = vmatprep.subr.bf16.mxu0 0
    %1925 = vmatpush1.bf16.msra.mxu0 0
    %1926 = vmatprep.mubr.bf16.mxu0 0
    %1927 = vmatmul.mubr.bf16.gmra.mrb[0].mxu0 %v1892
    %v1928 = vpop.f32.mrb[0].mxu0
    %v1929 = vadd.f32 0.0, %v1928
    %v1930 = vpop.f32.mrb[0].mxu0
    %v1931 = vadd.f32 0.0, %v1930
    %v1932 = vpop.f32.mrb[0].mxu0
    %v1933 = vpop.f32.mrb[0].mxu0
    %1934 = vdwg.mxu0
    %v1937 = vrot.slane %v1929, 4
    %v1938 = vrot.slane %v1931, 4
    %v1941 = vadd.f32 %v1884, %v1937
    %v1942 = vadd.f32 %v1885, %v1938
    %v1943 = vxor.u32 %v1941, 2147483648
    %v1944 = vmul.f32 %v1943, 1.442695
    %v1945 = vpow.pop %v1944
    %v1946 = vadd.f32 %v1945, 1.0
    %v1947 = vrcp.pop %v1946
    %v1948 = vmul.f32 1.0, %v1947
    %v1949 = vtanh.pop %v1942
    %v1950 = vxor.u32 %v1942, 2147483648
    %v1951 = vmul.f32 %v1950, 1.442695
    %v1952 = vpow.pop %v1951
    %v1953 = vadd.f32 %v1952, 1.0
    %v1954 = vrcp.pop %v1953
    %v1955 = vmul.f32 1.0, %v1954
    %v1957 = vrot.slane %v1879, 6
    %v1959 = vmul.f32 %v1948, %v1957
    %v1960 = vmul.f32 %v1948, %v1949
    %1962 = vrot.lane.b32.xlu0 %v1960, 64
    %v1963 = vpop.permute.xlu0 %1962
    %v1965 = vadd.f32 %v1959, %v1963
    %v1966 = vtanh.pop %v1965
    %v1967 = vmul.f32 %v1955, %v1966
    %1968 = vst.msk [vmem:[%s569 - $0x4] sm:$0x30] %vm1627, %v1967
    %1969 = vst.msk [vmem:[%s566 - $0x4] sm:$0x30] %vm1629, %v1967
    %v1970 = vld [vmem:[#allocation2 + $0x10] sm:$0xc0]
    %v1971 = vld [vmem:[#allocation2 + $0x18] sm:$0xc0]
    %v1972 = vpack.c.bf16 %v1967, %v1967
    %v1974 = vrot.slane %v1972, 2
    %1975 = vrot.lane.b32.xlu0 %v1974, 64
    %v1976 = vpop.permute.xlu0 %1975
    %v1978 = vsel %vm401, %v1976, 0
    %1980 = vmatprep.subr.bf16.mxu0 %v1372
    %1981 = vmatpush1.bf16.msra.mxu0 %v1371
    %1982 = vmatprep.subr.bf16.mxu0 %v1374
    %1983 = vmatpush1.bf16.msra.mxu0 %v1373
    %1984 = vmatprep.subr.bf16.mxu0 %v1376
    %1985 = vmatpush1.bf16.msra.mxu0 %v1375
    %1986 = vmatprep.subr.bf16.mxu0 %v1378
    %1987 = vmatpush1.bf16.msra.mxu0 %v1377
    %1988 = vmatprep.subr.bf16.mxu0 0
    %1989 = vmatpush1.bf16.msra.mxu0 0
    %1990 = vmatprep.subr.bf16.mxu0 0
    %1991 = vmatpush1.bf16.msra.mxu0 0
    %1992 = vmatprep.subr.bf16.mxu0 0
    %1993 = vmatpush1.bf16.msra.mxu0 0
    %1994 = vmatprep.subr.bf16.mxu0 0
    %1995 = vmatpush1.bf16.msra.mxu0 0
    %1996 = vmatprep.subr.bf16.mxu0 0
    %1997 = vmatpush1.bf16.msra.mxu0 0
    %1998 = vmatprep.subr.bf16.mxu0 0
    %1999 = vmatpush1.bf16.msra.mxu0 0
    %2000 = vmatprep.subr.bf16.mxu0 0
    %2001 = vmatpush1.bf16.msra.mxu0 0
    %2002 = vmatprep.subr.bf16.mxu0 0
    %2003 = vmatpush1.bf16.msra.mxu0 0
    %2004 = vmatprep.subr.bf16.mxu0 0
    %2005 = vmatpush1.bf16.msra.mxu0 0
    %2006 = vmatprep.subr.bf16.mxu0 0
    %2007 = vmatpush1.bf16.msra.mxu0 0
    %2008 = vmatprep.subr.bf16.mxu0 0
    %2009 = vmatpush1.bf16.msra.mxu0 0
    %2010 = vmatprep.subr.bf16.mxu0 0
    %2011 = vmatpush1.bf16.msra.mxu0 0
    %2012 = vmatprep.mubr.bf16.mxu0 0
    %2013 = vmatmul.mubr.bf16.gmra.mrb[0].mxu0 %v1978
    %v2014 = vpop.f32.mrb[0].mxu0
    %v2015 = vadd.f32 0.0, %v2014
    %v2016 = vpop.f32.mrb[0].mxu0
    %v2017 = vadd.f32 0.0, %v2016
    %v2018 = vpop.f32.mrb[0].mxu0
    %v2019 = vpop.f32.mrb[0].mxu0
    %2020 = vdwg.mxu0
    %v2023 = vrot.slane %v2015, 2
    %v2024 = vrot.slane %v2017, 2
    %v2027 = vadd.f32 %v1970, %v2023
    %v2028 = vadd.f32 %v1971, %v2024
    %v2029 = vxor.u32 %v2027, 2147483648
    %v2030 = vmul.f32 %v2029, 1.442695
    %v2031 = vpow.pop %v2030
    %v2032 = vadd.f32 %v2031, 1.0
    %v2033 = vrcp.pop %v2032
    %v2034 = vmul.f32 1.0, %v2033
    %v2035 = vtanh.pop %v2028
    %v2036 = vxor.u32 %v2028, 2147483648
    %v2037 = vmul.f32 %v2036, 1.442695
    %v2038 = vpow.pop %v2037
    %v2039 = vadd.f32 %v2038, 1.0
    %v2040 = vrcp.pop %v2039
    %v2041 = vmul.f32 1.0, %v2040
    %v2043 = vrot.slane %v1965, 6
    %v2045 = vmul.f32 %v2034, %v2043
    %v2046 = vmul.f32 %v2034, %v2035
    %2048 = vrot.lane.b32.xlu0 %v2046, 64
    %v2049 = vpop.permute.xlu0 %2048
    %v2051 = vadd.f32 %v2045, %v2049
    %v2052 = vtanh.pop %v2051
    %v2053 = vmul.f32 %v2041, %v2052
    %2054 = vst.msk [vmem:[%s476 - $0x6] sm:$0xc0] %vm1715, %v2053
    %2055 = vst.msk [vmem:[#allocation4 - $0x6] sm:$0xc0] %vm1717, %v2053
    %v2056 = vld [vmem:[#allocation4] sm:$0x3]
    %v2057 = vld [vmem:[#allocation4 + $0x2] sm:$0x3]
    %v2058 = vld [vmem:[#allocation4 + $0x4] sm:$0x3]
    %v2059 = vld [vmem:[#allocation4 + $0x6] sm:$0x3]
    %v2060 = vld [vmem:[#allocation4 + $0x8] sm:$0x3]
    %v2061 = vld [vmem:[#allocation4 + $0xa] sm:$0x3]
    %v2062 = vld [vmem:[#allocation4 + $0xc] sm:$0x3]
    %v2063 = vld [vmem:[#allocation4 + $0xe] sm:$0x3]
    %v2072 = vcombine.low %v2056, %v2057
    %v2073 = vcombine.low %v2058, %v2059
    %v2075 = vunpack.c.l.s4 1983009808
    %v2076 = vunpack.c.0.s8 %v2075
    %v2077 = vlaneseq
    %v2078 = vshrl.u32 %v2077, 7
    %v2079 = vsub.s32 %v2076, %v2078
    %v2080 = vrot.slane %v2072, %v2079
    %v2082 = vunpack.c.l.s4 1983009808
    %v2083 = vunpack.c.0.s8 %v2082
    %v2084 = vlaneseq
    %v2085 = vshrl.u32 %v2084, 7
    %v2086 = vsub.s32 %v2083, %v2085
    %v2087 = vrot.slane %v2073, %v2086
    %v2088 = vcombine.low %v2080, %v2087
    %v2089 = vcombine.low %v2060, %v2061
    %v2090 = vcombine.low %v2062, %v2063
    %v2092 = vunpack.c.l.s4 1983009808
    %v2093 = vunpack.c.0.s8 %v2092
    %v2094 = vlaneseq
    %v2095 = vshrl.u32 %v2094, 7
    %v2096 = vsub.s32 %v2093, %v2095
    %v2097 = vrot.slane %v2089, %v2096
    %v2099 = vunpack.c.l.s4 1983009808
    %v2100 = vunpack.c.0.s8 %v2099
    %v2101 = vlaneseq
    %v2102 = vshrl.u32 %v2101, 7
    %v2103 = vsub.s32 %v2100, %v2102
    %v2104 = vrot.slane %v2090, %v2103
    %v2105 = vcombine.low %v2097, %v2104
    %v2108 = vpack.c.bf16 %v2105, %v2088
    %v2109 = vld [vmem:[%s8] sm:$0xf]
    %v2110 = vld [vmem:[%s8 + $0x4] sm:$0xf]
    %v2111 = vld [vmem:[%s8 + $0x8] sm:$0xf]
    %v2112 = vld [vmem:[%s8 + $0xc] sm:$0xf]
    %v2113 = vld [vmem:[%s8 + $0x10] sm:$0xf]
    %v2114 = vld [vmem:[%s8 + $0x14] sm:$0xf]
    %v2115 = vld [vmem:[%s8 + $0x18] sm:$0xf]
    %v2116 = vld [vmem:[%s8 + $0x1c] sm:$0xf]
    %v2117 = vld [vmem:[%s8 + $0x20] sm:$0xf]
    %v2118 = vld [vmem:[%s8 + $0x24] sm:$0xf]
    %v2119 = vld [vmem:[%s8 + $0x28] sm:$0xf]
    %v2120 = vld [vmem:[%s8 + $0x2c] sm:$0xf]
    %v2121 = vld [vmem:[%s8 + $0x30] sm:$0xf]
    %v2122 = vld [vmem:[%s8 + $0x34] sm:$0xf]
    %v2123 = vld [vmem:[%s8 + $0x38] sm:$0xf]
    %v2124 = vld [vmem:[%s8 + $0x3c] sm:$0xf]
    %v2125 = vld [vmem:[#allocation14] sm:$0x1]
    %v2127 = vlaneseq
    %v2128 = vshrl.u32 %v2127, 7
    %v2129 = vsub.s32 0, %v2128
    %v2130 = vrot.slane %v2125, %v2129
    %v2148 = vunpack.c.l.b16 %v2109
    %v2149 = vunpack.c.l.b16 %v2110
    %v2150 = vunpack.c.l.b16 %v2111
    %v2151 = vunpack.c.l.b16 %v2112
    %v2152 = vunpack.c.l.b16 %v2113
    %v2153 = vunpack.c.l.b16 %v2114
    %v2154 = vunpack.c.l.b16 %v2115
    %v2155 = vunpack.c.l.b16 %v2116
    %v2156 = vunpack.c.l.b16 %v2117
    %v2157 = vunpack.c.l.b16 %v2118
    %v2158 = vunpack.c.l.b16 %v2119
    %v2159 = vunpack.c.l.b16 %v2120
    %v2160 = vunpack.c.l.b16 %v2121
    %v2161 = vunpack.c.l.b16 %v2122
    %v2162 = vunpack.c.l.b16 %v2123
    %v2163 = vunpack.c.l.b16 %v2124
    %v2164 = vpack.c.b16 %v2149, %v2148
    %v2165 = vpack.c.b16 %v2151, %v2150
    %v2166 = vpack.c.b16 %v2153, %v2152
    %v2167 = vpack.c.b16 %v2155, %v2154
    %v2168 = vpack.c.b16 %v2157, %v2156
    %v2169 = vpack.c.b16 %v2159, %v2158
    %v2170 = vpack.c.b16 %v2161, %v2160
    %v2171 = vpack.c.b16 %v2163, %v2162
    %2180 = vmatprep.subr.bf16.mxu0 0
    %2181 = vmatpush1.bf16.msra.mxu0 %v2164
    %2182 = vmatprep.subr.bf16.mxu0 0
    %2183 = vmatpush1.bf16.msra.mxu0 %v2165
    %2184 = vmatprep.subr.bf16.mxu0 0
    %2185 = vmatpush1.bf16.msra.mxu0 %v2166
    %2186 = vmatprep.subr.bf16.mxu0 0
    %2187 = vmatpush1.bf16.msra.mxu0 %v2167
    %2188 = vmatprep.subr.bf16.mxu0 0
    %2189 = vmatpush1.bf16.msra.mxu0 %v2168
    %2190 = vmatprep.subr.bf16.mxu0 0
    %2191 = vmatpush1.bf16.msra.mxu0 %v2169
    %2192 = vmatprep.subr.bf16.mxu0 0
    %2193 = vmatpush1.bf16.msra.mxu0 %v2170
    %2194 = vmatprep.subr.bf16.mxu0 0
    %2195 = vmatpush1.bf16.msra.mxu0 %v2171
    %2196 = vmatprep.subr.bf16.mxu0 0
    %2197 = vmatpush1.bf16.msra.mxu0 0
    %2198 = vmatprep.subr.bf16.mxu0 0
    %2199 = vmatpush1.bf16.msra.mxu0 0
    %2200 = vmatprep.subr.bf16.mxu0 0
    %2201 = vmatpush1.bf16.msra.mxu0 0
    %2202 = vmatprep.subr.bf16.mxu0 0
    %2203 = vmatpush1.bf16.msra.mxu0 0
    %2204 = vmatprep.subr.bf16.mxu0 0
    %2205 = vmatpush1.bf16.msra.mxu0 0
    %2206 = vmatprep.subr.bf16.mxu0 0
    %2207 = vmatpush1.bf16.msra.mxu0 0
    %2208 = vmatprep.subr.bf16.mxu0 0
    %2209 = vmatpush1.bf16.msra.mxu0 0
    %2210 = vmatprep.subr.bf16.mxu0 0
    %2211 = vmatpush1.bf16.msra.mxu0 0
    %2212 = vmatprep.mubr.bf16.mxu0 0
    %2213 = vmatmul.mubr.bf16.gmra.mrb[0].mxu0 %v2108
    %v2214 = vpop.f32.mrb[0].mxu0
    %v2215 = vadd.f32 %v2130, %v2214
    %v2216 = vpop.f32.mrb[0].mxu0
    %v2217 = vpop.f32.mrb[0].mxu0
    %v2218 = vadd.f32 %v2130, %v2217
    %v2219 = vpop.f32.mrb[0].mxu0
    %2220 = vdwg.mxu0
    %v2221 = vtanh.pop %v2215
    %v2222 = vtanh.pop %v2218
    %v2223 = vpack.c.bf16 %v2222, %v2221
    %v2224 = vld [vmem:[%s10] sm:$0xf]
    %v2225 = vld [vmem:[%s10 + $0x4] sm:$0xf]
    %v2226 = vld [vmem:[%s10 + $0x8] sm:$0xf]
    %v2227 = vld [vmem:[%s10 + $0xc] sm:$0xf]
    %v2228 = vld [vmem:[#allocation5] sm:$0x1]
    %v2230 = vlaneseq
    %v2231 = vshrl.u32 %v2230, 7
    %v2232 = vsub.s32 0, %v2231
    %v2233 = vrot.slane %v2228, %v2232
    %v2239 = vunpack.c.l.b16 %v2224
    %v2240 = vunpack.c.l.b16 %v2225
    %v2241 = vunpack.c.l.b16 %v2226
    %v2242 = vunpack.c.l.b16 %v2227
    %v2243 = vpack.c.b16 %v2240, %v2239
    %v2244 = vpack.c.b16 %v2242, %v2241
    %vm2247 = vcmask 261120
    %v2249 = vsel %vm2247, %v2223, 0
    %2251 = vmatprep.subr.bf16.mxu0 0
    %2252 = vmatpush1.bf16.msra.mxu0 %v2243
    %2253 = vmatprep.subr.bf16.mxu0 0
    %2254 = vmatpush1.bf16.msra.mxu0 %v2244
    %2255 = vmatprep.subr.bf16.mxu0 0
    %2256 = vmatpush1.bf16.msra.mxu0 0
    %2257 = vmatprep.subr.bf16.mxu0 0
    %2258 = vmatpush1.bf16.msra.mxu0 0
    %2259 = vmatprep.subr.bf16.mxu0 0
    %2260 = vmatpush1.bf16.msra.mxu0 0
    %2261 = vmatprep.subr.bf16.mxu0 0
    %2262 = vmatpush1.bf16.msra.mxu0 0
    %2263 = vmatprep.subr.bf16.mxu0 0
    %2264 = vmatpush1.bf16.msra.mxu0 0
    %2265 = vmatprep.subr.bf16.mxu0 0
    %2266 = vmatpush1.bf16.msra.mxu0 0
    %2267 = vmatprep.subr.bf16.mxu0 0
    %2268 = vmatpush1.bf16.msra.mxu0 0
    %2269 = vmatprep.subr.bf16.mxu0 0
    %2270 = vmatpush1.bf16.msra.mxu0 0
    %2271 = vmatprep.subr.bf16.mxu0 0
    %2272 = vmatpush1.bf16.msra.mxu0 0
    %2273 = vmatprep.subr.bf16.mxu0 0
    %2274 = vmatpush1.bf16.msra.mxu0 0
    %2275 = vmatprep.subr.bf16.mxu0 0
    %2276 = vmatpush1.bf16.msra.mxu0 0
    %2277 = vmatprep.subr.bf16.mxu0 0
    %2278 = vmatpush1.bf16.msra.mxu0 0
    %2279 = vmatprep.subr.bf16.mxu0 0
    %2280 = vmatpush1.bf16.msra.mxu0 0
    %2281 = vmatprep.subr.bf16.mxu0 0
    %2282 = vmatpush1.bf16.msra.mxu0 0
    %2283 = vmatprep.mubr.bf16.mxu0 0
    %2284 = vmatmul.mubr.bf16.gmra.mrb[0].mxu0 %v2249
    %v2285 = vpop.f32.mrb[0].mxu0
    %v2286 = vadd.f32 %v2233, %v2285
    %v2287 = vpop.f32.mrb[0].mxu0
    %v2288 = vpop.f32.mrb[0].mxu0
    %v2289 = vadd.f32 %v2233, %v2288
    %v2290 = vpop.f32.mrb[0].mxu0
    %2291 = vdwg.mxu0
    %v2294 = vcombine.high %v2286, %v2286
    %v2296 = vunpack.c.l.s4 1983009808
    %v2297 = vunpack.c.0.s8 %v2296
    %v2298 = vlaneseq
    %v2299 = vshrl.u32 %v2298, 7
    %v2300 = vsub.s32 %v2297, %v2299
    %v2301 = vrot.slane %v2286, %v2300
    %v2303 = vunpack.c.l.s4 1983009808
    %v2304 = vunpack.c.0.s8 %v2303
    %v2305 = vlaneseq
    %v2306 = vshrl.u32 %v2305, 7
    %v2307 = vsub.s32 %v2304, %v2306
    %v2308 = vrot.slane %v2294, %v2307
    %v2309 = vcombine.high %v2301, %v2301
    %v2310 = vcombine.high %v2308, %v2308
    %v2311 = vcombine.high %v2289, %v2289
    %v2313 = vunpack.c.l.s4 1983009808
    %v2314 = vunpack.c.0.s8 %v2313
    %v2315 = vlaneseq
    %v2316 = vshrl.u32 %v2315, 7
    %v2317 = vsub.s32 %v2314, %v2316
    %v2318 = vrot.slane %v2289, %v2317
    %v2320 = vunpack.c.l.s4 1983009808
    %v2321 = vunpack.c.0.s8 %v2320
    %v2322 = vlaneseq
    %v2323 = vshrl.u32 %v2322, 7
    %v2324 = vsub.s32 %v2321, %v2323
    %v2325 = vrot.slane %v2311, %v2324
    %v2326 = vcombine.high %v2318, %v2318
    %v2327 = vcombine.high %v2325, %v2325
    %v2336 = vld [vmem:[%s1] sm:$0x3]
    %v2337 = vld [vmem:[%s1 + $0x2] sm:$0x3]
    %v2338 = vld [vmem:[%s1 + $0x4] sm:$0x3]
    %v2339 = vld [vmem:[%s1 + $0x6] sm:$0x3]
    %v2340 = vld [vmem:[%s1 + $0x8] sm:$0x3]
    %v2341 = vld [vmem:[%s1 + $0xa] sm:$0x3]
    %v2342 = vld [vmem:[%s1 + $0xc] sm:$0x3]
    %v2343 = vld [vmem:[%s1 + $0xe] sm:$0x3]
    %v2344 = vmul.f32 %v2336, -1e+30
    %v2345 = vmul.f32 %v2337, -1e+30
    %v2346 = vmul.f32 %v2338, -1e+30
    %v2347 = vmul.f32 %v2339, -1e+30
    %v2348 = vmul.f32 %v2340, -1e+30
    %v2349 = vmul.f32 %v2341, -1e+30
    %v2350 = vmul.f32 %v2342, -1e+30
    %v2351 = vmul.f32 %v2343, -1e+30
    %v2352 = vadd.f32 %v2301, %v2344
    %v2353 = vadd.f32 %v2309, %v2345
    %v2354 = vadd.f32 %v2308, %v2346
    %v2355 = vadd.f32 %v2310, %v2347
    %v2356 = vadd.f32 %v2318, %v2348
    %v2357 = vadd.f32 %v2326, %v2349
    %v2358 = vadd.f32 %v2325, %v2350
    %v2359 = vadd.f32 %v2327, %v2351
    %vm2360 = vcmask 1024
    %v2361 = vsel %vm2360, %v2352, -inf
    %v2362 = vsel %vm2360, %v2353, -inf
    %v2363 = vsel %vm2360, %v2354, -inf
    %v2364 = vsel %vm2360, %v2355, -inf
    %v2365 = vsel %vm2360, %v2356, -inf
    %v2366 = vmax.f32 %v2361, %v2365
    %v2367 = vsel %vm2360, %v2357, -inf
    %v2368 = vmax.f32 %v2362, %v2367
    %v2369 = vsel %vm2360, %v2358, -inf
    %v2370 = vmax.f32 %v2363, %v2369
    %v2371 = vsel %vm2360, %v2359, -inf
    %v2372 = vmax.f32 %v2364, %v2371
    %v2373 = vmax.f32 %v2366, %v2368
    %v2374 = vmax.f32 %v2370, %v2372
    %v2375 = vmax.f32 %v2373, %v2374
    %v2376 = vsub.f32 %v2352, %v2375
    %v2377 = vsub.f32 %v2353, %v2375
    %v2378 = vsub.f32 %v2354, %v2375
    %v2379 = vsub.f32 %v2355, %v2375
    %v2380 = vsub.f32 %v2356, %v2375
    %v2381 = vsub.f32 %v2357, %v2375
    %v2382 = vsub.f32 %v2358, %v2375
    %v2383 = vsub.f32 %v2359, %v2375
    %v2384 = vmul.f32 %v2376, 1.442695
    %v2385 = vpow.pop %v2384
    %v2386 = vmul.f32 %v2377, 1.442695
    %v2387 = vpow.pop %v2386
    %v2388 = vmul.f32 %v2378, 1.442695
    %v2389 = vpow.pop %v2388
    %v2390 = vmul.f32 %v2379, 1.442695
    %v2391 = vpow.pop %v2390
    %v2392 = vmul.f32 %v2380, 1.442695
    %v2393 = vpow.pop %v2392
    %v2394 = vmul.f32 %v2381, 1.442695
    %v2395 = vpow.pop %v2394
    %v2396 = vmul.f32 %v2382, 1.442695
    %v2397 = vpow.pop %v2396
    %v2398 = vmul.f32 %v2383, 1.442695
    %v2399 = vpow.pop %v2398
    %v2400 = vsel %vm2360, %v2385, 0.0
    %v2401 = vsel %vm2360, %v2387, 0.0
    %v2402 = vadd.f32 %v2400, %v2401
    %v2403 = vsel %vm2360, %v2389, 0.0
    %v2404 = vadd.f32 %v2402, %v2403
    %v2405 = vsel %vm2360, %v2391, 0.0
    %v2406 = vadd.f32 %v2404, %v2405
    %v2407 = vsel %vm2360, %v2393, 0.0
    %v2408 = vadd.f32 %v2406, %v2407
    %v2409 = vsel %vm2360, %v2395, 0.0
    %v2410 = vadd.f32 %v2408, %v2409
    %v2411 = vsel %vm2360, %v2397, 0.0
    %v2412 = vadd.f32 %v2410, %v2411
    %v2413 = vsel %vm2360, %v2399, 0.0
    %v2414 = vadd.f32 %v2412, %v2413
    %v2415 = vrcp.pop %v2414
    %v2416 = vmul.f32 %v2385, %v2415
    %v2417 = vmul.f32 %v2387, %v2415
    %v2418 = vmul.f32 %v2389, %v2415
    %v2419 = vmul.f32 %v2391, %v2415
    %v2420 = vmul.f32 %v2393, %v2415
    %v2421 = vmul.f32 %v2395, %v2415
    %v2422 = vmul.f32 %v2397, %v2415
    %v2423 = vmul.f32 %v2399, %v2415
    %2425 = vset.pattern.permute.xlu0 0
    %2426 = vperm.xlu0 %2425, %v2416
    %v2427 = vpop.permute.xlu0 %2426
    %v2430 = vunpack.c.l.s4 269488144
    %v2431 = vunpack.c.0.s8 %v2430
    %v2432 = vlaneseq
    %v2433 = vshrl.u32 %v2432, 7
    %v2434 = vsub.s32 %v2431, %v2433
    %v2435 = vrot.slane %v2427, %v2434
    %2437 = vset.pattern.permute.xlu0 0
    %2438 = vperm.xlu0 %2437, %v2417
    %v2439 = vpop.permute.xlu0 %2438
    %v2442 = vunpack.c.l.s4 269488144
    %v2443 = vunpack.c.0.s8 %v2442
    %v2444 = vlaneseq
    %v2445 = vshrl.u32 %v2444, 7
    %v2446 = vsub.s32 %v2443, %v2445
    %v2447 = vrot.slane %v2439, %v2446
    %2449 = vset.pattern.permute.xlu0 0
    %2450 = vperm.xlu0 %2449, %v2418
    %v2451 = vpop.permute.xlu0 %2450
    %v2454 = vunpack.c.l.s4 269488144
    %v2455 = vunpack.c.0.s8 %v2454
    %v2456 = vlaneseq
    %v2457 = vshrl.u32 %v2456, 7
    %v2458 = vsub.s32 %v2455, %v2457
    %v2459 = vrot.slane %v2451, %v2458
    %2461 = vset.pattern.permute.xlu0 0
    %2462 = vperm.xlu0 %2461, %v2419
    %v2463 = vpop.permute.xlu0 %2462
    %v2466 = vunpack.c.l.s4 269488144
    %v2467 = vunpack.c.0.s8 %v2466
    %v2468 = vlaneseq
    %v2469 = vshrl.u32 %v2468, 7
    %v2470 = vsub.s32 %v2467, %v2469
    %v2471 = vrot.slane %v2463, %v2470
    %2473 = vset.pattern.permute.xlu0 0
    %2474 = vperm.xlu0 %2473, %v2420
    %v2475 = vpop.permute.xlu0 %2474
    %v2478 = vunpack.c.l.s4 269488144
    %v2479 = vunpack.c.0.s8 %v2478
    %v2480 = vlaneseq
    %v2481 = vshrl.u32 %v2480, 7
    %v2482 = vsub.s32 %v2479, %v2481
    %v2483 = vrot.slane %v2475, %v2482
    %2485 = vset.pattern.permute.xlu0 0
    %2486 = vperm.xlu0 %2485, %v2421
    %v2487 = vpop.permute.xlu0 %2486
    %v2490 = vunpack.c.l.s4 269488144
    %v2491 = vunpack.c.0.s8 %v2490
    %v2492 = vlaneseq
    %v2493 = vshrl.u32 %v2492, 7
    %v2494 = vsub.s32 %v2491, %v2493
    %v2495 = vrot.slane %v2487, %v2494
    %2497 = vset.pattern.permute.xlu0 0
    %2498 = vperm.xlu0 %2497, %v2422
    %v2499 = vpop.permute.xlu0 %2498
    %v2502 = vunpack.c.l.s4 269488144
    %v2503 = vunpack.c.0.s8 %v2502
    %v2504 = vlaneseq
    %v2505 = vshrl.u32 %v2504, 7
    %v2506 = vsub.s32 %v2503, %v2505
    %v2507 = vrot.slane %v2499, %v2506
    %2509 = vset.pattern.permute.xlu0 0
    %2510 = vperm.xlu0 %2509, %v2423
    %v2511 = vpop.permute.xlu0 %2510
    %v2514 = vunpack.c.l.s4 269488144
    %v2515 = vunpack.c.0.s8 %v2514
    %v2516 = vlaneseq
    %v2517 = vshrl.u32 %v2516, 7
    %v2518 = vsub.s32 %v2515, %v2517
    %v2519 = vrot.slane %v2511, %v2518
    %v2520 = vmul.f32 %v2435, %v2056
    %v2521 = vmul.f32 %v2447, %v2057
    %v2522 = vmul.f32 %v2459, %v2058
    %v2523 = vmul.f32 %v2471, %v2059
    %v2524 = vmul.f32 %v2483, %v2060
    %v2525 = vmul.f32 %v2495, %v2061
    %v2526 = vmul.f32 %v2507, %v2062
    %v2527 = vmul.f32 %v2519, %v2063
    %vm2528 = vcmask 1041408
    %v2529 = vsel %vm2528, %v2520, 0.0
    %v2530 = vsel %vm2528, %v2521, 0.0
    %v2531 = vadd.f32 %v2529, %v2530
    %v2532 = vsel %vm2528, %v2522, 0.0
    %v2533 = vadd.f32 %v2531, %v2532
    %v2534 = vsel %vm2528, %v2523, 0.0
    %v2535 = vadd.f32 %v2533, %v2534
    %v2536 = vsel %vm2528, %v2524, 0.0
    %v2537 = vadd.f32 %v2535, %v2536
    %v2538 = vsel %vm2528, %v2525, 0.0
    %v2539 = vadd.f32 %v2537, %v2538
    %v2540 = vsel %vm2528, %v2526, 0.0
    %v2541 = vadd.f32 %v2539, %v2540
    %v2542 = vsel %vm2528, %v2527, 0.0
    %v2543 = vadd.f32 %v2541, %v2542
    %v2544 = vpack.c.bf16 %v2543, %v2543
    %v2545 = vld [vmem:[%s12] sm:$0xf]
    %v2546 = vld [vmem:[%s12 + $0x4] sm:$0xf]
    %v2547 = vld [vmem:[%s12 + $0x8] sm:$0xf]
    %v2548 = vld [vmem:[%s12 + $0xc] sm:$0xf]
    %v2549 = vld [vmem:[%s12 + $0x10] sm:$0xf]
    %v2550 = vld [vmem:[%s12 + $0x14] sm:$0xf]
    %v2551 = vld [vmem:[%s12 + $0x18] sm:$0xf]
    %v2552 = vld [vmem:[%s12 + $0x1c] sm:$0xf]
    %v2553 = vld [vmem:[%s12 + $0x20] sm:$0xf]
    %v2554 = vld [vmem:[%s12 + $0x24] sm:$0xf]
    %v2555 = vld [vmem:[%s12 + $0x28] sm:$0xf]
    %v2556 = vld [vmem:[%s12 + $0x2c] sm:$0xf]
    %v2557 = vld [vmem:[%s12 + $0x30] sm:$0xf]
    %v2558 = vld [vmem:[%s12 + $0x34] sm:$0xf]
    %v2559 = vld [vmem:[%s12 + $0x38] sm:$0xf]
    %v2560 = vld [vmem:[%s12 + $0x3c] sm:$0xf]
    %v2561 = vld [vmem:[#allocation15] sm:$0x1]
    %v2563 = vlaneseq
    %v2564 = vshrl.u32 %v2563, 7
    %v2565 = vsub.s32 0, %v2564
    %v2566 = vrot.slane %v2561, %v2565
    %v2584 = vunpack.c.l.b16 %v2545
    %v2585 = vunpack.c.l.b16 %v2546
    %v2586 = vunpack.c.l.b16 %v2547
    %v2587 = vunpack.c.l.b16 %v2548
    %v2588 = vunpack.c.l.b16 %v2549
    %v2589 = vunpack.c.l.b16 %v2550
    %v2590 = vunpack.c.l.b16 %v2551
    %v2591 = vunpack.c.l.b16 %v2552
    %v2592 = vunpack.c.l.b16 %v2553
    %v2593 = vunpack.c.l.b16 %v2554
    %v2594 = vunpack.c.l.b16 %v2555
    %v2595 = vunpack.c.l.b16 %v2556
    %v2596 = vunpack.c.l.b16 %v2557
    %v2597 = vunpack.c.l.b16 %v2558
    %v2598 = vunpack.c.l.b16 %v2559
    %v2599 = vunpack.c.l.b16 %v2560
    %v2600 = vpack.c.b16 %v2585, %v2584
    %v2601 = vpack.c.b16 %v2587, %v2586
    %v2602 = vpack.c.b16 %v2589, %v2588
    %v2603 = vpack.c.b16 %v2591, %v2590
    %v2604 = vpack.c.b16 %v2593, %v2592
    %v2605 = vpack.c.b16 %v2595, %v2594
    %v2606 = vpack.c.b16 %v2597, %v2596
    %v2607 = vpack.c.b16 %v2599, %v2598
    %2616 = vmatprep.subr.bf16.mxu0 0
    %2617 = vmatpush1.bf16.msra.mxu0 %v2600
    %2618 = vmatprep.subr.bf16.mxu0 0
    %2619 = vmatpush1.bf16.msra.mxu0 %v2601
    %2620 = vmatprep.subr.bf16.mxu0 0
    %2621 = vmatpush1.bf16.msra.mxu0 %v2602
    %2622 = vmatprep.subr.bf16.mxu0 0
    %2623 = vmatpush1.bf16.msra.mxu0 %v2603
    %2624 = vmatprep.subr.bf16.mxu0 0
    %2625 = vmatpush1.bf16.msra.mxu0 %v2604
    %2626 = vmatprep.subr.bf16.mxu0 0
    %2627 = vmatpush1.bf16.msra.mxu0 %v2605
    %2628 = vmatprep.subr.bf16.mxu0 0
    %2629 = vmatpush1.bf16.msra.mxu0 %v2606
    %2630 = vmatprep.subr.bf16.mxu0 0
    %2631 = vmatpush1.bf16.msra.mxu0 %v2607
    %2632 = vmatprep.subr.bf16.mxu0 0
    %2633 = vmatpush1.bf16.msra.mxu0 0
    %2634 = vmatprep.subr.bf16.mxu0 0
    %2635 = vmatpush1.bf16.msra.mxu0 0
    %2636 = vmatprep.subr.bf16.mxu0 0
    %2637 = vmatpush1.bf16.msra.mxu0 0
    %2638 = vmatprep.subr.bf16.mxu0 0
    %2639 = vmatpush1.bf16.msra.mxu0 0
    %2640 = vmatprep.subr.bf16.mxu0 0
    %2641 = vmatpush1.bf16.msra.mxu0 0
    %2642 = vmatprep.subr.bf16.mxu0 0
    %2643 = vmatpush1.bf16.msra.mxu0 0
    %2644 = vmatprep.subr.bf16.mxu0 0
    %2645 = vmatpush1.bf16.msra.mxu0 0
    %2646 = vmatprep.subr.bf16.mxu0 0
    %2647 = vmatpush1.bf16.msra.mxu0 0
    %2648 = vmatprep.mubr.bf16.mxu0 0
    %2649 = vmatmul.mubr.bf16.gmra.mrb[0].mxu0 %v2544
    %v2650 = vpop.f32.mrb[0].mxu0
    %v2651 = vadd.f32 %v2566, %v2650
    %v2652 = vpop.f32.mrb[0].mxu0
    %v2653 = vpop.f32.mrb[0].mxu0
    %v2654 = vpop.f32.mrb[0].mxu0
    %2655 = vdwg.mxu0
    %v2656 = vmax.f32 %v2651, 0.0
    %v2657 = vpack.c.bf16 %v2656, %v2656
    %v2658 = vld [vmem:[%s14] sm:$0xf]
    %v2659 = vld [vmem:[%s14 + $0x4] sm:$0xf]
    %v2660 = vld [vmem:[%s14 + $0x8] sm:$0xf]
    %v2661 = vld [vmem:[%s14 + $0xc] sm:$0xf]
    %v2662 = vld [vmem:[%s15] sm:$0x1]
    %v2664 = vlaneseq
    %v2665 = vshrl.u32 %v2664, 7
    %v2666 = vsub.s32 0, %v2665
    %v2667 = vrot.slane %v2662, %v2666
    %v2673 = vunpack.c.l.b16 %v2658
    %v2674 = vunpack.c.l.b16 %v2659
    %v2675 = vunpack.c.l.b16 %v2660
    %v2676 = vunpack.c.l.b16 %v2661
    %v2677 = vpack.c.b16 %v2674, %v2673
    %v2678 = vpack.c.b16 %v2676, %v2675
    %v2682 = vsel %vm2247, %v2657, 0
    %2684 = vmatprep.subr.bf16.mxu0 0
    %2685 = vmatpush1.bf16.msra.mxu0 %v2677
    %2686 = vmatprep.subr.bf16.mxu0 0
    %2687 = vmatpush1.bf16.msra.mxu0 %v2678
    %2688 = vmatprep.subr.bf16.mxu0 0
    %2689 = vmatpush1.bf16.msra.mxu0 0
    %2690 = vmatprep.subr.bf16.mxu0 0
    %2691 = vmatpush1.bf16.msra.mxu0 0
    %2692 = vmatprep.subr.bf16.mxu0 0
    %2693 = vmatpush1.bf16.msra.mxu0 0
    %2694 = vmatprep.subr.bf16.mxu0 0
    %2695 = vmatpush1.bf16.msra.mxu0 0
    %2696 = vmatprep.subr.bf16.mxu0 0
    %2697 = vmatpush1.bf16.msra.mxu0 0
    %2698 = vmatprep.subr.bf16.mxu0 0
    %2699 = vmatpush1.bf16.msra.mxu0 0
    %2700 = vmatprep.subr.bf16.mxu0 0
    %2701 = vmatpush1.bf16.msra.mxu0 0
    %2702 = vmatprep.subr.bf16.mxu0 0
    %2703 = vmatpush1.bf16.msra.mxu0 0
    %2704 = vmatprep.subr.bf16.mxu0 0
    %2705 = vmatpush1.bf16.msra.mxu0 0
    %2706 = vmatprep.subr.bf16.mxu0 0
    %2707 = vmatpush1.bf16.msra.mxu0 0
    %2708 = vmatprep.subr.bf16.mxu0 0
    %2709 = vmatpush1.bf16.msra.mxu0 0
    %2710 = vmatprep.subr.bf16.mxu0 0
    %2711 = vmatpush1.bf16.msra.mxu0 0
    %2712 = vmatprep.subr.bf16.mxu0 0
    %2713 = vmatpush1.bf16.msra.mxu0 0
    %2714 = vmatprep.subr.bf16.mxu0 0
    %2715 = vmatpush1.bf16.msra.mxu0 0
    %2716 = vmatprep.mubr.bf16.mxu0 0
    %2717 = vmatmul.mubr.bf16.gmra.mrb[0].mxu0 %v2682
    %v2718 = vpop.f32.mrb[0].mxu0
    %v2719 = vadd.f32 %v2667, %v2718
    %v2720 = vpop.f32.mrb[0].mxu0
    %v2721 = vpop.f32.mrb[0].mxu0
    %v2722 = vpop.f32.mrb[0].mxu0
    %2723 = vdwg.mxu0
    %v2724 = vmax.f32 %v2719, 0.0
    %v2725 = vpack.c.bf16 %v2724, %v2724
    %v2726 = vld [vmem:[%s16] sm:$0xf]
    %v2727 = vld [vmem:[%s16 + $0x4] sm:$0xf]
    %v2728 = vld [vmem:[%s17] sm:$0x1]
    %v2730 = vlaneseq
    %v2731 = vshrl.u32 %v2730, 7
    %v2732 = vsub.s32 0, %v2731
    %v2733 = vrot.slane %v2728, %v2732
    %v2737 = vunpack.c.l.b16 %v2726
    %v2738 = vunpack.c.l.b16 %v2727
    %v2739 = vpack.c.b16 %v2738, %v2737
    %vm2741 = vcmask 130048
    %v2743 = vsel %vm2741, %v2725, 0
    %2745 = vmatprep.subr.bf16.mxu0 0
    %2746 = vmatpush1.bf16.msra.mxu0 %v2739
    %2747 = vmatprep.subr.bf16.mxu0 0
    %2748 = vmatpush1.bf16.msra.mxu0 0
    %2749 = vmatprep.subr.bf16.mxu0 0
    %2750 = vmatpush1.bf16.msra.mxu0 0
    %2751 = vmatprep.subr.bf16.mxu0 0
    %2752 = vmatpush1.bf16.msra.mxu0 0
    %2753 = vmatprep.subr.bf16.mxu0 0
    %2754 = vmatpush1.bf16.msra.mxu0 0
    %2755 = vmatprep.subr.bf16.mxu0 0
    %2756 = vmatpush1.bf16.msra.mxu0 0
    %2757 = vmatprep.subr.bf16.mxu0 0
    %2758 = vmatpush1.bf16.msra.mxu0 0
    %2759 = vmatprep.subr.bf16.mxu0 0
    %2760 = vmatpush1.bf16.msra.mxu0 0
    %2761 = vmatprep.subr.bf16.mxu0 0
    %2762 = vmatpush1.bf16.msra.mxu0 0
    %2763 = vmatprep.subr.bf16.mxu0 0
    %2764 = vmatpush1.bf16.msra.mxu0 0
    %2765 = vmatprep.subr.bf16.mxu0 0
    %2766 = vmatpush1.bf16.msra.mxu0 0
    %2767 = vmatprep.subr.bf16.mxu0 0
    %2768 = vmatpush1.bf16.msra.mxu0 0
    %2769 = vmatprep.subr.bf16.mxu0 0
    %2770 = vmatpush1.bf16.msra.mxu0 0
    %2771 = vmatprep.subr.bf16.mxu0 0
    %2772 = vmatpush1.bf16.msra.mxu0 0
    %2773 = vmatprep.subr.bf16.mxu0 0
    %2774 = vmatpush1.bf16.msra.mxu0 0
    %2775 = vmatprep.subr.bf16.mxu0 0
    %2776 = vmatpush1.bf16.msra.mxu0 0
    %2777 = vmatprep.mubr.bf16.mxu0 0
    %2778 = vmatmul.mubr.bf16.gmra.mrb[0].mxu0 %v2743
    %v2779 = vpop.f32.mrb[0].mxu0
    %v2780 = vadd.f32 %v2733, %v2779
    %v2781 = vpop.f32.mrb[0].mxu0
    %v2782 = vpop.f32.mrb[0].mxu0
    %v2783 = vpop.f32.mrb[0].mxu0
    %2784 = vdwg.mxu0
    %v2785 = vmax.f32 %v2780, 0.0
    %v2786 = vpack.c.bf16 %v2785, %v2785
    %v2787 = vld [vmem:[%s18] sm:$0xf]
    %v2788 = vld [vmem:[%s19] sm:$0x1]
    %v2790 = vlaneseq
    %v2791 = vshrl.u32 %v2790, 7
    %v2792 = vsub.s32 0, %v2791
    %v2793 = vrot.slane %v2788, %v2792
    %vm2795 = vcmask 64512
    %v2797 = vsel %vm2795, %v2786, 0
    %vm2799 = vcmask 1043456
    %v2801 = vsel %vm2799, %v2787, 0
    %2803 = vmatprep.subr.bf16.mxu0 0
    %2804 = vmatpush1.bf16.msra.mxu0 %v2801
    %2805 = vmatprep.subr.bf16.mxu0 0
    %2806 = vmatpush1.bf16.msra.mxu0 0
    %2807 = vmatprep.subr.bf16.mxu0 0
    %2808 = vmatpush1.bf16.msra.mxu0 0
    %2809 = vmatprep.subr.bf16.mxu0 0
    %2810 = vmatpush1.bf16.msra.mxu0 0
    %2811 = vmatprep.subr.bf16.mxu0 0
    %2812 = vmatpush1.bf16.msra.mxu0 0
    %2813 = vmatprep.subr.bf16.mxu0 0
    %2814 = vmatpush1.bf16.msra.mxu0 0
    %2815 = vmatprep.subr.bf16.mxu0 0
    %2816 = vmatpush1.bf16.msra.mxu0 0
    %2817 = vmatprep.subr.bf16.mxu0 0
    %2818 = vmatpush1.bf16.msra.mxu0 0
    %2819 = vmatprep.subr.bf16.mxu0 0
    %2820 = vmatpush1.bf16.msra.mxu0 0
    %2821 = vmatprep.subr.bf16.mxu0 0
    %2822 = vmatpush1.bf16.msra.mxu0 0
    %2823 = vmatprep.subr.bf16.mxu0 0
    %2824 = vmatpush1.bf16.msra.mxu0 0
    %2825 = vmatprep.subr.bf16.mxu0 0
    %2826 = vmatpush1.bf16.msra.mxu0 0
    %2827 = vmatprep.subr.bf16.mxu0 0
    %2828 = vmatpush1.bf16.msra.mxu0 0
    %2829 = vmatprep.subr.bf16.mxu0 0
    %2830 = vmatpush1.bf16.msra.mxu0 0
    %2831 = vmatprep.subr.bf16.mxu0 0
    %2832 = vmatpush1.bf16.msra.mxu0 0
    %2833 = vmatprep.subr.bf16.mxu0 0
    %2834 = vmatpush1.bf16.msra.mxu0 0
    %2835 = vmatprep.mubr.bf16.mxu0 0
    %2836 = vmatmul.mubr.bf16.gmra.mrb[0].mxu0 %v2797
    %v2837 = vpop.f32.mrb[0].mxu0
    %v2838 = vadd.f32 %v2793, %v2837
    %v2839 = vpop.f32.mrb[0].mxu0
    %v2840 = vpop.f32.mrb[0].mxu0
    %v2841 = vpop.f32.mrb[0].mxu0
    %2842 = vdwg.mxu0
    %vm2843 = vcmask 33792
    %v2844 = vsel %vm2843, %v2838, -inf
    %2845 = vmax.xlane.f32.xlu0 %v2844
    %v2846 = vpop.xlane.xlu0 %2845
    %v2847 = vsub.f32 %v2838, %v2846
    %v2848 = vmul.f32 %v2847, 1.442695
    %v2849 = vpow.pop %v2848
    %v2850 = vsel %vm2843, %v2849, 0.0
    %2851 = vadd.xlane.f32.xlu0 %v2850
    %v2852 = vpop.xlane.xlu0 %2851
    %v2853 = vlog2.pop %v2852
    %v2854 = vmul.f32 %v2853, 0.6931472
    %v2855 = vsub.f32 %v2847, %v2854
    %2856 = vst.msk [vmem:[#allocation17] sm:$0x3] %vm2843, %v2855
    // Predicated region
    $region106: #{tpu_custom_call.1} parent=1 // pred_check
      _
    $region107: #{tpu_custom_call.1} parent=1 // pred_check_branch
      %2858 = sbr.rel (0) target = $region109
    $region108: #{tpu_custom_call.1} parent=1 // pred_region
      %s2860 = ssub.s32 32, 32
      %2861 = vsyncadd [#allocation8], %s2860
      %s2863 = sshll.u32 [#allocation17], 4
      %s2864 = int_to_ptr.vmem [resolvable:$true] %s2863
      %2866 = dma.vmem_to_hbm [thread:$0]  %s2864, 32, %s20, [#allocation8]
    $region109: #{tpu_custom_call.1} parent=1 // pred_fallthru
      _
    // Predicated region
    $region110: #{tpu_custom_call.1} parent=1 // pred_check
      _
    $region111: #{tpu_custom_call.1} parent=1 // pred_check_branch
      %2868 = sbr.rel (0) target = $region113
    $region112: #{tpu_custom_call.1} parent=1 // pred_region
      %2869 = dma.done [#allocation8], 32
    $region113: #{tpu_custom_call.1} parent=1 // pred_fallthru
      _
    %2870 = vsyncpa [#allocation7], 1
    %2871 = vsyncpa [#allocation10], 1
    %2872 = vsyncpa [#allocation13], 1
    %2873 = vsyncpa [#allocation16], 1
    %2874 = vsyncpa [#allocation8], 1

</llo_original>
